<compile_context>
chip_gen: v7x
topology: tpu7x:2x2x1
jax: 0.10.0
libtpu: 0.0.40
codegen_flags: <defaults>
</compile_context>

<pallas_src>
import functools
import math

import jax
import jax.numpy as jnp
from jax import lax
from jax.experimental import pallas as pl
from jax.experimental.pallas import tpu as pltpu

EMB = 32          # embedding_size (small test size; reference default was 64)
PF = 64           # transformer feed-forward width (stand-in)
VOCAB = 11        # target vocabulary size (stand-in decoder output dim)
MAX_LEN = 16      # max target length for positional embedding (stand-in)
TRG_PAD_IDX = 0
SRC_PAD_IDX = 0   # unused: forward() passes src_mask=None to encoder/decoder

C1_CH = 128       # conv_1 out channels (nn.Conv2d(3, 128, 3, padding=1))
C2_CH = 64        # conv_2 out channels (nn.Conv2d(128, 64, 3, padding=1))
NEG_INF = -1e10

_PAR1 = pltpu.CompilerParams(dimension_semantics=("parallel",))


# ----------------------------------------------------------------------------
# Parameter packing: two VMEM-resident slabs (bf16 matmul weights / f32 rest)
# ----------------------------------------------------------------------------

def _round_up(x, m):
    return (x + m - 1) // m * m


def _pack(tensors, dtype, align):
    """Pack a dict of 2-D arrays into one (rows, 128) slab.

    Returns (slab, layout) where layout[name] = (row_offset, rows, cols) with
    static Python ints, so the kernel can slice lazily at point of use.
    """
    layout, off = {}, 0
    for name, t in tensors.items():
        r, c = t.shape
        layout[name] = (off, r, c)
        off += _round_up(r, align)
    total = _round_up(off, align)
    slab = jnp.zeros((total, 128), dtype)
    for name, (o, r, c) in layout.items():
        slab = slab.at[o:o + r, 0:c].set(tensors[name].astype(dtype))
    return slab, layout


def _wslice(ref, layout, name, rows=None):
    """Lazy, static slice of a packed parameter (loaded at point of use)."""
    off, r, c = layout[name]
    r = r if rows is None else rows
    return ref[off:off + r, 0:c]


def _weight_tensors(params, Hq):
    """Matmul weights, pre-fused / pre-reordered, for the bf16 slab."""
    enc, dec = params["enc"], params["dec"]
    c2 = params["conv2_w"].shape[-1]
    # conv weights in im2col layout: row = (dy*3 + dx) * Cin + cin   (HWIO)
    w1 = params["conv1_w"].reshape(-1, params["conv1_w"].shape[-1])   # (27,128)
    w2 = params["conv2_w"].reshape(-1, params["conv2_w"].shape[-1])   # (1152,64)
    # linear_1 weight: PyTorch flatten order is c*Hq + h; reorder to h*C2 + c
    wl = params["linear1_w"].reshape(c2, Hq, -1).transpose(1, 0, 2)
    wl = wl.reshape(Hq * c2, -1)                                      # (256,E)
    cat = lambda *xs: jnp.concatenate(xs, axis=1)
    return {
        "conv1_w": w1, "conv2_w": w2, "linear1_w": wl,
        "enc_wqkv": cat(enc["wq"], enc["wk"], enc["wv"]),
        "enc_wo": enc["wo"],
        "enc_ff1_w": enc["ff1_w"], "enc_ff2_w": enc["ff2_w"],
        "dec_tok_emb": dec["tok_emb"],
        "dec_sa_wqkv": cat(dec["sa_wq"], dec["sa_wk"], dec["sa_wv"]),
        "dec_sa_wo": dec["sa_wo"],
        "dec_ca_wq": dec["ca_wq"],
        "dec_ca_wkv": cat(dec["ca_wk"], dec["ca_wv"]),
        "dec_ca_wo": dec["ca_wo"],
        "dec_ff1_w": dec["ff1_w"], "dec_ff2_w": dec["ff2_w"],
        "dec_fc_w": dec["fc_w"],
    }


def _param_tensors(params):
    """Biases / LayerNorm / positional embedding for the f32 slab."""
    enc, dec = params["enc"], params["dec"]
    cat = lambda *xs: jnp.concatenate(xs, axis=1)
    return {
        "conv1_b": params["conv1_b"], "conv2_b": params["conv2_b"],
        "linear1_b": params["linear1_b"],
        "enc_bqkv": cat(enc["bq"], enc["bk"], enc["bv"]),
        "enc_bo": enc["bo"],
        "enc_ln1_g": enc["ln1_g"], "enc_ln1_b": enc["ln1_b"],
        "enc_ff1_b": enc["ff1_b"], "enc_ff2_b": enc["ff2_b"],
        "enc_ln2_g": enc["ln2_g"], "enc_ln2_b": enc["ln2_b"],
        "dec_pos_emb": dec["pos_emb"],
        "dec_sa_bqkv": cat(dec["sa_bq"], dec["sa_bk"], dec["sa_bv"]),
        "dec_sa_bo": dec["sa_bo"],
        "dec_ln_sa_g": dec["ln_sa_g"], "dec_ln_sa_b": dec["ln_sa_b"],
        "dec_ca_bq": dec["ca_bq"], "dec_ca_bkv": cat(dec["ca_bk"], dec["ca_bv"]),
        "dec_ca_bo": dec["ca_bo"],
        "dec_ln_ca_g": dec["ln_ca_g"], "dec_ln_ca_b": dec["ln_ca_b"],
        "dec_ff1_b": dec["ff1_b"], "dec_ff2_b": dec["ff2_b"],
        "dec_ln_ff_g": dec["ln_ff_g"], "dec_ln_ff_b": dec["ln_ff_b"],
        "dec_fc_b": dec["fc_b"],
    }


# ----------------------------------------------------------------------------
# In-kernel building blocks (values in/out; all matmuls bf16 -> f32 acc)
# ----------------------------------------------------------------------------

def _mm(a, b):
    return jnp.dot(a.astype(jnp.bfloat16), b.astype(jnp.bfloat16),
                   preferred_element_type=jnp.float32)


def _mm_nt(a, b):
    # a @ b.T without materializing a transpose
    return lax.dot_general(a.astype(jnp.bfloat16), b.astype(jnp.bfloat16),
                           (((1,), (1,)), ((), ())),
                           preferred_element_type=jnp.float32)


def _layer_norm(x, g, b, eps=1e-5):
    mu = jnp.mean(x, axis=-1, keepdims=True)
    var = jnp.mean(jnp.square(x - mu), axis=-1, keepdims=True)
    return (x - mu) * lax.rsqrt(var + eps) * g + b


def _softmax(s):
    # exact divide: returned cross-attention probs match a true softmax
    s = s - jnp.max(s, axis=-1, keepdims=True)
    e = jnp.exp(s)
    return e / jnp.sum(e, axis=-1, keepdims=True)


def _maxpool2(y, h, w, c):
    """2x2 stride-2 max pool on an (h, w, c) value."""
    y = y.reshape(h, w // 2, 2, c)
    y = jnp.maximum(y[:, :, 0, :], y[:, :, 1, :])
    y = y.reshape(h // 2, 2, w // 2, c)
    return jnp.maximum(y[:, 0, :, :], y[:, 1, :, :])


def _vision_embed(xcol, wb_ref, pf_ref, WL, PL, H, W):
    """conv1+pool + conv2+pool + PyTorch flatten + linear_1 for one image.

    xcol: (H*W, 9*Cin) bf16 -- wrapper-side im2col of the 'same'-padded image.
    Returns src_emb (Ls = W//4, EMB) f32.
    """
    Hp, Wp = H // 2, W // 2
    Hq, Wq = H // 4, W // 4

    # conv1: ONE im2col MXU dot + bias + ReLU, then fused 2x2 maxpool
    y = _mm(xcol, _wslice(wb_ref, WL, "conv1_w"))                 # (H*W, 128)
    y = jnp.maximum(y + _wslice(pf_ref, PL, "conv1_b"), 0.0)
    p1 = _maxpool2(y.reshape(H, W, C1_CH), H, W, C1_CH)           # (Hp, Wp, 128)
    p1 = p1.astype(jnp.bfloat16)

    # 'same' padding done in VMEM (no HBM round trip), then conv2 as ONE
    # im2col dot with K = 9*128 = 1152.
    zr = jnp.zeros((1, Wp, C1_CH), jnp.bfloat16)
    zc = jnp.zeros((Hp + 2, 1, C1_CH), jnp.bfloat16)
    pp = jnp.concatenate([zr, p1, zr], axis=0)
    pp = jnp.concatenate([zc, pp, zc], axis=1)                    # (Hp+2, Wp+2, 128)
    # 3 W-shifted copies along lanes (128-aligned concat), then 3 H-shifted
    # row-blocks along K -> column index = (dy*3 + dx)*128 + c.
    ppx = jnp.concatenate([pp[:, dx:dx + Wp, :] for dx in range(3)], axis=2)
    a2 = jnp.concatenate(
        [ppx[dy:dy + Hp].reshape(Hp * Wp, 3 * C1_CH) for dy in range(3)], axis=1)
    y2 = _mm(a2, _wslice(wb_ref, WL, "conv2_w"))                  # (Hp*Wp, 64)
    y2 = jnp.maximum(y2 + _wslice(pf_ref, PL, "conv2_b"), 0.0)
    p2 = _maxpool2(y2.reshape(Hp, Wp, C2_CH), Hp, Wp, C2_CH)      # (Hq, Wq, 64)

    # PyTorch permute(0,3,1,2).view(bs, Wq, C2*Hq) + linear_1 folded into one
    # dot against the pre-reordered (Hq*C2, E) weight.
    flat = jnp.concatenate([p2[h] for h in range(Hq)], axis=1)    # (Wq, Hq*C2)
    emb = _mm(flat, _wslice(wb_ref, WL, "linear1_w"))
    return emb + _wslice(pf_ref, PL, "linear1_b")                 # (Wq, EMB)


def _encoder(x, wb_ref, pf_ref, WL, PL):
    """Single-layer, single-head encoder stand-in (src_mask=None -> unmasked)."""
    E = EMB
    scale = 1.0 / math.sqrt(E)
    # fused QKV projection: one (Ls, E) x (E, 3E) dot instead of three N=32 dots
    qkv = _mm(x, _wslice(wb_ref, WL, "enc_wqkv")) + _wslice(pf_ref, PL, "enc_bqkv")
    q, k, v = qkv[:, 0:E], qkv[:, E:2 * E], qkv[:, 2 * E:3 * E]
    p = _softmax(_mm_nt(q, k) * scale)
    o = _mm(_mm(p, v), _wslice(wb_ref, WL, "enc_wo")) + _wslice(pf_ref, PL, "enc_bo")
    x = _layer_norm(x + o, _wslice(pf_ref, PL, "enc_ln1_g"),
                    _wslice(pf_ref, PL, "enc_ln1_b"))
    h = jnp.maximum(_mm(x, _wslice(wb_ref, WL, "enc_ff1_w"))
                    + _wslice(pf_ref, PL, "enc_ff1_b"), 0.0)
    h = _mm(h, _wslice(wb_ref, WL, "enc_ff2_w")) + _wslice(pf_ref, PL, "enc_ff2_b")
    return _layer_norm(x + h, _wslice(pf_ref, PL, "enc_ln2_g"),
                       _wslice(pf_ref, PL, "enc_ln2_b"))


def _decoder(trg_sref, b, enc, wb_ref, pf_ref, WL, PL, Lt, ext_mask=None):
    """Single-layer, single-head decoder stand-in for one image."""
    E, V = EMB, VOCAB
    scale = 1.0 / math.sqrt(E)

    # token one-hot + causal/pad trg_mask built in-kernel from SMEM-prefetched
    # int32 ids (no wrapper-built float tensors, no embedding gather).
    viota = lax.broadcasted_iota(jnp.int32, (1, V), 1)
    oh_rows, id_cols = [], []
    for t in range(Lt):
        tid = trg_sref[b, t]
        oh_rows.append((viota == tid).astype(jnp.float32))
        id_cols.append(jnp.full((1, 1), tid, jnp.int32))
    onehot = jnp.concatenate(oh_rows, axis=0)                      # (Lt, V)
    if ext_mask is None:
        ids_row = jnp.concatenate(id_cols, axis=1)                 # (1, Lt)
        rr = lax.broadcasted_iota(jnp.int32, (Lt, Lt), 0)
        cc = lax.broadcasted_iota(jnp.int32, (Lt, Lt), 1)
        trg_mask = jnp.logical_and(cc <= rr, ids_row != TRG_PAD_IDX)
    else:
        trg_mask = ext_mask                                        # (Lt, Lt) bool

    tok = _mm(onehot, _wslice(wb_ref, WL, "dec_tok_emb")) * math.sqrt(E)
    x = tok + _wslice(pf_ref, PL, "dec_pos_emb", rows=Lt)          # (Lt, E)

    # masked self-attention (fused QKV projection)
    qkv = _mm(x, _wslice(wb_ref, WL, "dec_sa_wqkv")) + _wslice(pf_ref, PL, "dec_sa_bqkv")
    q, k, v = qkv[:, 0:E], qkv[:, E:2 * E], qkv[:, 2 * E:3 * E]
    s = jnp.where(trg_mask, _mm_nt(q, k) * scale, NEG_INF)
    o = _mm(_softmax(s), v)
    o = _mm(o, _wslice(wb_ref, WL, "dec_sa_wo")) + _wslice(pf_ref, PL, "dec_sa_bo")
    x = _layer_norm(x + o, _wslice(pf_ref, PL, "dec_ln_sa_g"),
                    _wslice(pf_ref, PL, "dec_ln_sa_b"))

    # cross-attention over the encoder output (src_mask=None -> unmasked),
    # K/V share one fused projection
    q = _mm(x, _wslice(wb_ref, WL, "dec_ca_wq")) + _wslice(pf_ref, PL, "dec_ca_bq")
    kv = _mm(enc, _wslice(wb_ref, WL, "dec_ca_wkv")) + _wslice(pf_ref, PL, "dec_ca_bkv")
    k, v = kv[:, 0:E], kv[:, E:2 * E]
    attn = _softmax(_mm_nt(q, k) * scale)                          # (Lt, Ls) returned
    o = _mm(attn, v)
    o = _mm(o, _wslice(wb_ref, WL, "dec_ca_wo")) + _wslice(pf_ref, PL, "dec_ca_bo")
    x = _layer_norm(x + o, _wslice(pf_ref, PL, "dec_ln_ca_g"),
                    _wslice(pf_ref, PL, "dec_ln_ca_b"))

    # position-wise feed-forward
    h = jnp.maximum(_mm(x, _wslice(wb_ref, WL, "dec_ff1_w"))
                    + _wslice(pf_ref, PL, "dec_ff1_b"), 0.0)
    h = _mm(h, _wslice(wb_ref, WL, "dec_ff2_w")) + _wslice(pf_ref, PL, "dec_ff2_b")
    x = _layer_norm(x + h, _wslice(pf_ref, PL, "dec_ln_ff_g"),
                    _wslice(pf_ref, PL, "dec_ln_ff_b"))

    logits = _mm(x, _wslice(wb_ref, WL, "dec_fc_w")) + _wslice(pf_ref, PL, "dec_fc_b")
    return logits, attn


# ----------------------------------------------------------------------------
# Fused kernels (per image, grid=(B,) "parallel")
# ----------------------------------------------------------------------------

def _train_kernel(WL, PL, H, W, Lt, use_ext_mask, *refs):
    trg_sref, xcol_ref, wb_ref, pf_ref = refs[:4]
    idx = 4
    mask_ref = None
    if use_ext_mask:
        mask_ref = refs[idx]
        idx += 1
    out_ref, attn_ref = refs[idx], refs[idx + 1]

    b = pl.program_id(0)
    emb = _vision_embed(xcol_ref[...], wb_ref, pf_ref, WL, PL, H, W)
    enc = _encoder(emb, wb_ref, pf_ref, WL, PL)
    ext_mask = (mask_ref[...] > 0.0) if use_ext_mask else None
    logits, attn = _decoder(trg_sref, b, enc, wb_ref, pf_ref, WL, PL, Lt, ext_mask)
    out_ref[...] = logits
    attn_ref[...] = attn


def _infer_kernel(WL, PL, H, W, xcol_ref, wb_ref, pf_ref, enc_ref):
    emb = _vision_embed(xcol_ref[...], wb_ref, pf_ref, WL, PL, H, W)
    enc_ref[...] = _encoder(emb, wb_ref, pf_ref, WL, PL)


# ----------------------------------------------------------------------------
# model forward
# ----------------------------------------------------------------------------

def seq2seq_forward(params, src, trg=None, trg_mask=None, is_inference=False):
    """src: (bs, 3, H, W) NCHW float32;  trg: (bs, Lt) int32 token ids."""
    B, Cin, H, W = src.shape
    Hq, Wq = H // 4, W // 4
    Ls = Wq
    K1 = 9 * Cin

    # Wrapper-side im2col + bf16 cast for conv1 only: the raw input has just
    # Cin=3 lanes (40x lane padding in-kernel); here it becomes one lane-dense
    # (H*W, 27) bf16 operand so the kernel's conv1 is a single MXU dot.
    x = jnp.transpose(src, (0, 2, 3, 1))                           # NCHW -> NHWC
    xp = jnp.pad(x, ((0, 0), (1, 1), (1, 1), (0, 0)))
    cols = [xp[:, dy:dy + H, dx:dx + W, :] for dy in range(3) for dx in range(3)]
    xcol = jnp.concatenate(cols, axis=-1).reshape(B, H * W, K1)
    xcol = xcol.astype(jnp.bfloat16)

    # Pack all parameters into two slabs (bf16 matmul weights, f32 the rest).
    # In a real model this packing would be done once outside the step fn.
    wslab, WL = _pack(_weight_tensors(params, Hq), jnp.bfloat16, 16)
    pslab, PL = _pack(_param_tensors(params), jnp.float32, 8)

    if is_inference:
        enc = pl.pallas_call(
            functools.partial(_infer_kernel, WL, PL, H, W),
            grid_spec=pltpu.PrefetchScalarGridSpec(
                num_scalar_prefetch=0,
                grid=(B,),
                in_specs=[
                    pl.BlockSpec((None, H * W, K1), lambda b: (b, 0, 0)),
                    pl.BlockSpec(wslab.shape, lambda b: (0, 0)),
                    pl.BlockSpec(pslab.shape, lambda b: (0, 0)),
                ],
                out_specs=pl.BlockSpec((None, Ls, EMB), lambda b: (b, 0, 0)),
            ),
            out_shape=jax.ShapeDtypeStruct((B, Ls, EMB), jnp.float32),
            compiler_params=_PAR1,
        )(xcol, wslab, pslab)
        return enc, None

    trg_i = jnp.asarray(trg, jnp.int32)
    Lt = trg_i.shape[1]

    use_ext_mask = trg_mask is not None
    extra_inputs, extra_specs = [], []
    if use_ext_mask:
        m = jnp.asarray(trg_mask)
        if m.ndim == 4:                                            # (B,1,Lt,Lt)
            m = m[:, 0, :, :]
        extra_inputs = [m.astype(jnp.float32)]
        extra_specs = [pl.BlockSpec((None, Lt, Lt), lambda b, t: (b, 0, 0))]
    # TODO(synk): for very large images, tile the conv stage over output-row
    # blocks (v7x VMEM is 64 MiB); at these sizes the whole image fits easily.

    out, attn = pl.pallas_call(
        functools.partial(_train_kernel, WL, PL, H, W, Lt, use_ext_mask),
        grid_spec=pltpu.PrefetchScalarGridSpec(
            num_scalar_prefetch=1,                                 # trg ids -> SMEM
            grid=(B,),
            in_specs=[
                pl.BlockSpec((None, H * W, K1), lambda b, t: (b, 0, 0)),
                pl.BlockSpec(wslab.shape, lambda b, t: (0, 0)),
                pl.BlockSpec(pslab.shape, lambda b, t: (0, 0)),
            ] + extra_specs,
            out_specs=[
                pl.BlockSpec((None, Lt, VOCAB), lambda b, t: (b, 0, 0)),
                pl.BlockSpec((None, Lt, Ls), lambda b, t: (b, 0, 0)),
            ],
        ),
        out_shape=(jax.ShapeDtypeStruct((B, Lt, VOCAB), jnp.float32),
                   jax.ShapeDtypeStruct((B, Lt, Ls), jnp.float32)),
        compiler_params=_PAR1,
    )(trg_i, xcol, wslab, pslab, *extra_inputs)
    return out, attn[:, None, :, :]        # (B, n_heads=1, Lt, Ls)


# ------------------------------ parameter init ------------------------------

def init_params(key):
    keys = iter(jax.random.split(key, 64))
    nk = lambda: next(keys)

    def dense(shape, scale=None):
        if scale is None:
            scale = 1.0 / math.sqrt(shape[0])
        return scale * jax.random.normal(nk(), shape, jnp.float32)

    ones = lambda n: jnp.ones((1, n), jnp.float32)
    zeros = lambda n: jnp.zeros((1, n), jnp.float32)

    params = {
        # conv weights stored HWIO (PyTorch stores OIHW; init is synthetic, a
        # real checkpoint would need a (2,3,1,0) transpose)
        "conv1_w": dense((3, 3, 3, C1_CH), 0.1),
        "conv1_b": zeros(C1_CH),
        "conv2_w": dense((3, 3, C1_CH, C2_CH), 0.03),
        "conv2_b": zeros(C2_CH),
        "linear1_w": dense((256, EMB)),   # 256 = 64 * (H/4) with H = 16
        "linear1_b": zeros(EMB),
        # TODO(synk): self.layer_norm1 = nn.LayerNorm(64) is never used in the
        # reference forward(), so its parameters are intentionally omitted.
    }

    enc = {
        "wq": dense((EMB, EMB)), "bq": zeros(EMB),
        "wk": dense((EMB, EMB)), "bk": zeros(EMB),
        "wv": dense((EMB, EMB)), "bv": zeros(EMB),
        "wo": dense((EMB, EMB)), "bo": zeros(EMB),
        "ln1_g": ones(EMB), "ln1_b": zeros(EMB),
        "ff1_w": dense((EMB, PF)), "ff1_b": zeros(PF),
        "ff2_w": dense((PF, EMB)), "ff2_b": zeros(EMB),
        "ln2_g": ones(EMB), "ln2_b": zeros(EMB),
    }

    dec = {
        "tok_emb": dense((VOCAB, EMB), 0.1),
        "pos_emb": dense((MAX_LEN, EMB), 0.1),
        "sa_wq": dense((EMB, EMB)), "sa_bq": zeros(EMB),
        "sa_wk": dense((EMB, EMB)), "sa_bk": zeros(EMB),
        "sa_wv": dense((EMB, EMB)), "sa_bv": zeros(EMB),
        "sa_wo": dense((EMB, EMB)), "sa_bo": zeros(EMB),
        "ln_sa_g": ones(EMB), "ln_sa_b": zeros(EMB),
        "ca_wq": dense((EMB, EMB)), "ca_bq": zeros(EMB),
        "ca_wk": dense((EMB, EMB)), "ca_bk": zeros(EMB),
        "ca_wv": dense((EMB, EMB)), "ca_bv": zeros(EMB),
        "ca_wo": dense((EMB, EMB)), "ca_bo": zeros(EMB),
        "ln_ca_g": ones(EMB), "ln_ca_b": zeros(EMB),
        "ff1_w": dense((EMB, PF)), "ff1_b": zeros(PF),
        "ff2_w": dense((PF, EMB)), "ff2_b": zeros(EMB),
        "ln_ff_g": ones(EMB), "ln_ff_b": zeros(EMB),
        "fc_w": dense((EMB, VOCAB)), "fc_b": zeros(VOCAB),
    }

    params["enc"] = enc
    params["dec"] = dec
    return params


# ----------------------------------- main -----------------------------------

if __name__ == "__main__":
    key = jax.random.PRNGKey(0)
    pkey, skey = jax.random.split(key)

    params = init_params(pkey)
    src = jax.random.normal(skey, (2, 3, 16, 16), jnp.float32)   # NCHW images
    trg = jnp.array([[1, 4, 7, 2, 3],
                     [1, 5, 9, 6, 0]], dtype=jnp.int32)          # pad idx = 0

    fwd = jax.jit(seq2seq_forward, static_argnames=("is_inference",))

    output, attention = fwd(params, src, trg, is_inference=False)
    jax.block_until_ready((output, attention))

    enc_out, _ = fwd(params, src, trg, is_inference=True)
    jax.block_until_ready(enc_out)

    assert output.shape == (2, 5, VOCAB), output.shape
    assert attention.shape == (2, 1, 5, 4), attention.shape
    assert enc_out.shape == (2, 4, EMB), enc_out.shape
    assert bool(jnp.all(jnp.isfinite(output)))
    assert bool(jnp.all(jnp.isfinite(attention)))
    assert bool(jnp.all(jnp.isfinite(enc_out)))
    print("KERNEL_OK")
</pallas_src>

<mosaic_0001>
module attributes {stable_mosaic.version = 11 : i64} {
  func.func @_train_kernel(%arg0: i32, %arg1: memref<2x5xi32, #tpu.memory_space<smem>>, %arg2: memref<1x256x27xbf16, #tpu.memory_space<vmem>>, %arg3: memref<1904x128xbf16, #tpu.memory_space<vmem>>, %arg4: memref<216x128xf32, #tpu.memory_space<vmem>>, %arg5: memref<1x5x11xf32, #tpu.memory_space<vmem>>, %arg6: memref<1x5x4xf32, #tpu.memory_space<vmem>>) attributes {dimension_semantics = [#tpu.dimension_semantics<parallel>], iteration_bounds = array<i64: 2>, scalar_prefetch = 1 : i64, scratch_operands = 0 : i64, tpu.core_type = #tpu.core_type<tc>, window_params = [{transform_indices = @transform_0, window_bounds = array<i64: 1, 256, 27>}, {pipeline_mode = #tpu.pipeline_mode<synchronous>, transform_indices = @transform_1, window_bounds = array<i64: 1904, 128>}, {pipeline_mode = #tpu.pipeline_mode<synchronous>, transform_indices = @transform_2, window_bounds = array<i64: 216, 128>}, {transform_indices = @transform_3, window_bounds = array<i64: 1, 5, 11>}, {transform_indices = @transform_4, window_bounds = array<i64: 1, 5, 4>}]} {
    %c0 = arith.constant 0 : index
    %c0_0 = arith.constant 0 : index
    %c0_1 = arith.constant 0 : index
    %0 = vector.load %arg2[%c0, %c0_0, %c0_1] : memref<1x256x27xbf16, #tpu.memory_space<vmem>>, vector<1x256x27xbf16>
    %1 = vector.shape_cast %0 : vector<1x256x27xbf16> to vector<256x27xbf16>
    %c0_2 = arith.constant 0 : index
    %c0_3 = arith.constant 0 : index
    %2 = vector.load %arg3[%c0_2, %c0_3] : memref<1904x128xbf16, #tpu.memory_space<vmem>>, vector<27x128xbf16>
    %cst = arith.constant dense<0.000000e+00> : vector<256x128xf32>
    %3 = tpu.matmul %1, %2, %cst {dimension_numbers = #tpu.dot_dimension_numbers<[1], [0], [0], [1], [0, 0, 1, 1], [], []>} : vector<256x27xbf16>, vector<27x128xbf16>, vector<256x128xf32> -> vector<256x128xf32>
    %c0_4 = arith.constant 0 : index
    %c0_5 = arith.constant 0 : index
    %4 = vector.load %arg4[%c0_4, %c0_5] : memref<216x128xf32, #tpu.memory_space<vmem>>, vector<1x128xf32>
    %5 = vector.broadcast %4 : vector<1x128xf32> to vector<256x128xf32>
    %6 = arith.addf %3, %5 : vector<256x128xf32>
    %cst_6 = arith.constant 0.000000e+00 : f32
    %7 = vector.broadcast %cst_6 : f32 to vector<256x128xf32>
    %8 = arith.maximumf %6, %7 : vector<256x128xf32>
    %9 = vector.shape_cast %8 : vector<256x128xf32> to vector<16x16x128xf32>
    %10 = vector.shape_cast %9 : vector<16x16x128xf32> to vector<16x8x2x128xf32>
    %11 = vector.extract_strided_slice %10 {offsets = [0, 0, 0, 0], sizes = [16, 8, 1, 128], strides = [1, 1, 1, 1]} : vector<16x8x2x128xf32> to vector<16x8x1x128xf32>
    %12 = vector.shape_cast %11 : vector<16x8x1x128xf32> to vector<16x8x128xf32>
    %13 = vector.extract_strided_slice %10 {offsets = [0, 0, 1, 0], sizes = [16, 8, 1, 128], strides = [1, 1, 1, 1]} : vector<16x8x2x128xf32> to vector<16x8x1x128xf32>
    %14 = vector.shape_cast %13 : vector<16x8x1x128xf32> to vector<16x8x128xf32>
    %15 = arith.maximumf %12, %14 : vector<16x8x128xf32>
    %16 = vector.shape_cast %15 : vector<16x8x128xf32> to vector<8x2x8x128xf32>
    %17 = vector.extract_strided_slice %16 {offsets = [0, 0, 0, 0], sizes = [8, 1, 8, 128], strides = [1, 1, 1, 1]} : vector<8x2x8x128xf32> to vector<8x1x8x128xf32>
    %18 = vector.shape_cast %17 : vector<8x1x8x128xf32> to vector<8x8x128xf32>
    %19 = vector.extract_strided_slice %16 {offsets = [0, 1, 0, 0], sizes = [8, 1, 8, 128], strides = [1, 1, 1, 1]} : vector<8x2x8x128xf32> to vector<8x1x8x128xf32>
    %20 = vector.shape_cast %19 : vector<8x1x8x128xf32> to vector<8x8x128xf32>
    %21 = arith.maximumf %18, %20 : vector<8x8x128xf32>
    %22 = arith.truncf %21 : vector<8x8x128xf32> to vector<8x8x128xbf16>
    %cst_7 = arith.constant 0.000000e+00 : bf16
    %23 = vector.broadcast %cst_7 : bf16 to vector<1x8x128xbf16>
    %cst_8 = arith.constant 0.000000e+00 : bf16
    %24 = vector.broadcast %cst_8 : bf16 to vector<10x1x128xbf16>
    %25 = tpu.concatenate %23, %22, %23 in 0 : vector<1x8x128xbf16>, vector<8x8x128xbf16>, vector<1x8x128xbf16> -> vector<10x8x128xbf16>
    %26 = tpu.concatenate %24, %25, %24 in 1 : vector<10x1x128xbf16>, vector<10x8x128xbf16>, vector<10x1x128xbf16> -> vector<10x10x128xbf16>
    %27 = vector.extract_strided_slice %26 {offsets = [0, 0, 0], sizes = [10, 8, 128], strides = [1, 1, 1]} : vector<10x10x128xbf16> to vector<10x8x128xbf16>
    %28 = vector.extract_strided_slice %26 {offsets = [0, 1, 0], sizes = [10, 8, 128], strides = [1, 1, 1]} : vector<10x10x128xbf16> to vector<10x8x128xbf16>
    %29 = vector.extract_strided_slice %26 {offsets = [0, 2, 0], sizes = [10, 8, 128], strides = [1, 1, 1]} : vector<10x10x128xbf16> to vector<10x8x128xbf16>
    %30 = tpu.concatenate %27, %28, %29 in 2 : vector<10x8x128xbf16>, vector<10x8x128xbf16>, vector<10x8x128xbf16> -> vector<10x8x384xbf16>
    %31 = vector.extract_strided_slice %30 {offsets = [0, 0, 0], sizes = [8, 8, 384], strides = [1, 1, 1]} : vector<10x8x384xbf16> to vector<8x8x384xbf16>
    %32 = vector.shape_cast %31 : vector<8x8x384xbf16> to vector<64x384xbf16>
    %33 = vector.extract_strided_slice %30 {offsets = [1, 0, 0], sizes = [8, 8, 384], strides = [1, 1, 1]} : vector<10x8x384xbf16> to vector<8x8x384xbf16>
    %34 = vector.shape_cast %33 : vector<8x8x384xbf16> to vector<64x384xbf16>
    %35 = vector.extract_strided_slice %30 {offsets = [2, 0, 0], sizes = [8, 8, 384], strides = [1, 1, 1]} : vector<10x8x384xbf16> to vector<8x8x384xbf16>
    %36 = vector.shape_cast %35 : vector<8x8x384xbf16> to vector<64x384xbf16>
    %37 = tpu.concatenate %32, %34, %36 in 1 : vector<64x384xbf16>, vector<64x384xbf16>, vector<64x384xbf16> -> vector<64x1152xbf16>
    %c32 = arith.constant 32 : index
    %c0_9 = arith.constant 0 : index
    %38 = vector.load %arg3[%c32, %c0_9] : memref<1904x128xbf16, #tpu.memory_space<vmem>>, vector<1152x64xbf16>
    %cst_10 = arith.constant dense<0.000000e+00> : vector<64x64xf32>
    %39 = tpu.matmul %37, %38, %cst_10 {dimension_numbers = #tpu.dot_dimension_numbers<[1], [0], [0], [1], [0, 0, 1, 1], [], []>} : vector<64x1152xbf16>, vector<1152x64xbf16>, vector<64x64xf32> -> vector<64x64xf32>
    %c8 = arith.constant 8 : index
    %c0_11 = arith.constant 0 : index
    %40 = vector.load %arg4[%c8, %c0_11] : memref<216x128xf32, #tpu.memory_space<vmem>>, vector<1x64xf32>
    %41 = vector.broadcast %40 : vector<1x64xf32> to vector<64x64xf32>
    %42 = arith.addf %39, %41 : vector<64x64xf32>
    %cst_12 = arith.constant 0.000000e+00 : f32
    %43 = vector.broadcast %cst_12 : f32 to vector<64x64xf32>
    %44 = arith.maximumf %42, %43 : vector<64x64xf32>
    %45 = vector.shape_cast %44 : vector<64x64xf32> to vector<8x8x64xf32>
    %46 = vector.shape_cast %45 : vector<8x8x64xf32> to vector<8x4x2x64xf32>
    %47 = vector.extract_strided_slice %46 {offsets = [0, 0, 0, 0], sizes = [8, 4, 1, 64], strides = [1, 1, 1, 1]} : vector<8x4x2x64xf32> to vector<8x4x1x64xf32>
    %48 = vector.shape_cast %47 : vector<8x4x1x64xf32> to vector<8x4x64xf32>
    %49 = vector.extract_strided_slice %46 {offsets = [0, 0, 1, 0], sizes = [8, 4, 1, 64], strides = [1, 1, 1, 1]} : vector<8x4x2x64xf32> to vector<8x4x1x64xf32>
    %50 = vector.shape_cast %49 : vector<8x4x1x64xf32> to vector<8x4x64xf32>
    %51 = arith.maximumf %48, %50 : vector<8x4x64xf32>
    %52 = vector.shape_cast %51 : vector<8x4x64xf32> to vector<4x2x4x64xf32>
    %53 = vector.extract_strided_slice %52 {offsets = [0, 0, 0, 0], sizes = [4, 1, 4, 64], strides = [1, 1, 1, 1]} : vector<4x2x4x64xf32> to vector<4x1x4x64xf32>
    %54 = vector.shape_cast %53 : vector<4x1x4x64xf32> to vector<4x4x64xf32>
    %55 = vector.extract_strided_slice %52 {offsets = [0, 1, 0, 0], sizes = [4, 1, 4, 64], strides = [1, 1, 1, 1]} : vector<4x2x4x64xf32> to vector<4x1x4x64xf32>
    %56 = vector.shape_cast %55 : vector<4x1x4x64xf32> to vector<4x4x64xf32>
    %57 = arith.maximumf %54, %56 : vector<4x4x64xf32>
    %58 = vector.extract_strided_slice %57 {offsets = [0, 0, 0], sizes = [1, 4, 64], strides = [1, 1, 1]} : vector<4x4x64xf32> to vector<1x4x64xf32>
    %59 = vector.shape_cast %58 : vector<1x4x64xf32> to vector<4x64xf32>
    %60 = vector.extract_strided_slice %57 {offsets = [1, 0, 0], sizes = [1, 4, 64], strides = [1, 1, 1]} : vector<4x4x64xf32> to vector<1x4x64xf32>
    %61 = vector.shape_cast %60 : vector<1x4x64xf32> to vector<4x64xf32>
    %62 = vector.extract_strided_slice %57 {offsets = [2, 0, 0], sizes = [1, 4, 64], strides = [1, 1, 1]} : vector<4x4x64xf32> to vector<1x4x64xf32>
    %63 = vector.shape_cast %62 : vector<1x4x64xf32> to vector<4x64xf32>
    %64 = vector.extract_strided_slice %57 {offsets = [3, 0, 0], sizes = [1, 4, 64], strides = [1, 1, 1]} : vector<4x4x64xf32> to vector<1x4x64xf32>
    %65 = vector.shape_cast %64 : vector<1x4x64xf32> to vector<4x64xf32>
    %66 = tpu.concatenate %59, %61, %63, %65 in 1 : vector<4x64xf32>, vector<4x64xf32>, vector<4x64xf32>, vector<4x64xf32> -> vector<4x256xf32>
    %c1184 = arith.constant 1184 : index
    %c0_13 = arith.constant 0 : index
    %67 = vector.load %arg3[%c1184, %c0_13] : memref<1904x128xbf16, #tpu.memory_space<vmem>>, vector<256x32xbf16>
    %68 = arith.truncf %66 : vector<4x256xf32> to vector<4x256xbf16>
    %cst_14 = arith.constant dense<0.000000e+00> : vector<4x32xf32>
    %69 = tpu.matmul %68, %67, %cst_14 {dimension_numbers = #tpu.dot_dimension_numbers<[1], [0], [0], [1], [0, 0, 1, 1], [], []>} : vector<4x256xbf16>, vector<256x32xbf16>, vector<4x32xf32> -> vector<4x32xf32>
    %c16 = arith.constant 16 : index
    %c0_15 = arith.constant 0 : index
    %70 = vector.load %arg4[%c16, %c0_15] : memref<216x128xf32, #tpu.memory_space<vmem>>, vector<1x32xf32>
    %71 = vector.broadcast %70 : vector<1x32xf32> to vector<4x32xf32>
    %72 = arith.addf %69, %71 : vector<4x32xf32>
    %c1440 = arith.constant 1440 : index
    %c0_16 = arith.constant 0 : index
    %73 = vector.load %arg3[%c1440, %c0_16] : memref<1904x128xbf16, #tpu.memory_space<vmem>>, vector<32x96xbf16>
    %74 = arith.truncf %72 : vector<4x32xf32> to vector<4x32xbf16>
    %cst_17 = arith.constant dense<0.000000e+00> : vector<4x96xf32>
    %75 = tpu.matmul %74, %73, %cst_17 {dimension_numbers = #tpu.dot_dimension_numbers<[1], [0], [0], [1], [0, 0, 1, 1], [], []>} : vector<4x32xbf16>, vector<32x96xbf16>, vector<4x96xf32> -> vector<4x96xf32>
    %c24 = arith.constant 24 : index
    %c0_18 = arith.constant 0 : index
    %76 = vector.load %arg4[%c24, %c0_18] : memref<216x128xf32, #tpu.memory_space<vmem>>, vector<1x96xf32>
    %77 = vector.broadcast %76 : vector<1x96xf32> to vector<4x96xf32>
    %78 = arith.addf %75, %77 : vector<4x96xf32>
    %79 = vector.extract_strided_slice %78 {offsets = [0, 0], sizes = [4, 32], strides = [1, 1]} : vector<4x96xf32> to vector<4x32xf32>
    %80 = vector.extract_strided_slice %78 {offsets = [0, 32], sizes = [4, 32], strides = [1, 1]} : vector<4x96xf32> to vector<4x32xf32>
    %81 = vector.extract_strided_slice %78 {offsets = [0, 64], sizes = [4, 32], strides = [1, 1]} : vector<4x96xf32> to vector<4x32xf32>
    %82 = arith.truncf %79 : vector<4x32xf32> to vector<4x32xbf16>
    %83 = arith.truncf %80 : vector<4x32xf32> to vector<4x32xbf16>
    %cst_19 = arith.constant dense<0.000000e+00> : vector<4x4xf32>
    %84 = tpu.matmul %82, %83, %cst_19 {dimension_numbers = #tpu.dot_dimension_numbers<[1], [1], [0], [0], [0, 0, 1, 0], [], []>} : vector<4x32xbf16>, vector<4x32xbf16>, vector<4x4xf32> -> vector<4x4xf32>
    %cst_20 = arith.constant 0.176776692 : f32
    %85 = vector.broadcast %cst_20 : f32 to vector<4x4xf32>
    %86 = arith.mulf %84, %85 : vector<4x4xf32>
    %cst_21 = arith.constant dense<0xFF800000> : vector<4xf32>
    %87 = vector.multi_reduction <maximumf>, %86, %cst_21 [1] : vector<4x4xf32> to vector<4xf32>
    %88 = vector.shape_cast %87 : vector<4xf32> to vector<4x1xf32>
    %89 = vector.broadcast %88 : vector<4x1xf32> to vector<4x4xf32>
    %90 = arith.subf %86, %89 : vector<4x4xf32>
    %91 = math.exp %90 : vector<4x4xf32>
    %cst_22 = arith.constant dense<0.000000e+00> : vector<4xf32>
    %92 = vector.multi_reduction <add>, %91, %cst_22 [1] : vector<4x4xf32> to vector<4xf32>
    %93 = vector.shape_cast %92 : vector<4xf32> to vector<4x1xf32>
    %94 = vector.broadcast %93 : vector<4x1xf32> to vector<4x4xf32>
    %95 = arith.divf %91, %94 : vector<4x4xf32>
    %96 = arith.truncf %95 : vector<4x4xf32> to vector<4x4xbf16>
    %97 = arith.truncf %81 : vector<4x32xf32> to vector<4x32xbf16>
    %cst_23 = arith.constant dense<0.000000e+00> : vector<4x32xf32>
    %98 = tpu.matmul %96, %97, %cst_23 {dimension_numbers = #tpu.dot_dimension_numbers<[1], [0], [0], [1], [0, 0, 1, 1], [], []>} : vector<4x4xbf16>, vector<4x32xbf16>, vector<4x32xf32> -> vector<4x32xf32>
    %c1472 = arith.constant 1472 : index
    %c0_24 = arith.constant 0 : index
    %99 = vector.load %arg3[%c1472, %c0_24] : memref<1904x128xbf16, #tpu.memory_space<vmem>>, vector<32x32xbf16>
    %100 = arith.truncf %98 : vector<4x32xf32> to vector<4x32xbf16>
    %cst_25 = arith.constant dense<0.000000e+00> : vector<4x32xf32>
    %101 = tpu.matmul %100, %99, %cst_25 {dimension_numbers = #tpu.dot_dimension_numbers<[1], [0], [0], [1], [0, 0, 1, 1], [], []>} : vector<4x32xbf16>, vector<32x32xbf16>, vector<4x32xf32> -> vector<4x32xf32>
    %c32_26 = arith.constant 32 : index
    %c0_27 = arith.constant 0 : index
    %102 = vector.load %arg4[%c32_26, %c0_27] : memref<216x128xf32, #tpu.memory_space<vmem>>, vector<1x32xf32>
    %103 = vector.broadcast %102 : vector<1x32xf32> to vector<4x32xf32>
    %104 = arith.addf %101, %103 : vector<4x32xf32>
    %105 = arith.addf %72, %104 : vector<4x32xf32>
    %c40 = arith.constant 40 : index
    %c0_28 = arith.constant 0 : index
    %106 = vector.load %arg4[%c40, %c0_28] : memref<216x128xf32, #tpu.memory_space<vmem>>, vector<1x32xf32>
    %c48 = arith.constant 48 : index
    %c0_29 = arith.constant 0 : index
    %107 = vector.load %arg4[%c48, %c0_29] : memref<216x128xf32, #tpu.memory_space<vmem>>, vector<1x32xf32>
    %cst_30 = arith.constant dense<0.000000e+00> : vector<4xf32>
    %108 = vector.multi_reduction <add>, %105, %cst_30 [1] : vector<4x32xf32> to vector<4xf32>
    %109 = vector.shape_cast %108 : vector<4xf32> to vector<4x1xf32>
    %cst_31 = arith.constant 3.200000e+01 : f32
    %110 = vector.broadcast %cst_31 : f32 to vector<4x1xf32>
    %111 = arith.divf %109, %110 : vector<4x1xf32>
    %112 = vector.broadcast %111 : vector<4x1xf32> to vector<4x32xf32>
    %113 = arith.subf %105, %112 : vector<4x32xf32>
    %114 = arith.mulf %113, %113 : vector<4x32xf32>
    %cst_32 = arith.constant dense<0.000000e+00> : vector<4xf32>
    %115 = vector.multi_reduction <add>, %114, %cst_32 [1] : vector<4x32xf32> to vector<4xf32>
    %116 = vector.shape_cast %115 : vector<4xf32> to vector<4x1xf32>
    %cst_33 = arith.constant 3.200000e+01 : f32
    %117 = vector.broadcast %cst_33 : f32 to vector<4x1xf32>
    %118 = arith.divf %116, %117 : vector<4x1xf32>
    %119 = vector.broadcast %111 : vector<4x1xf32> to vector<4x32xf32>
    %120 = arith.subf %105, %119 : vector<4x32xf32>
    %cst_34 = arith.constant 9.99999974E-6 : f32
    %121 = vector.broadcast %cst_34 : f32 to vector<4x1xf32>
    %122 = arith.addf %118, %121 : vector<4x1xf32>
    %123 = math.rsqrt %122 : vector<4x1xf32>
    %124 = vector.broadcast %123 : vector<4x1xf32> to vector<4x32xf32>
    %125 = arith.mulf %120, %124 : vector<4x32xf32>
    %126 = vector.broadcast %106 : vector<1x32xf32> to vector<4x32xf32>
    %127 = arith.mulf %125, %126 : vector<4x32xf32>
    %128 = vector.broadcast %107 : vector<1x32xf32> to vector<4x32xf32>
    %129 = arith.addf %127, %128 : vector<4x32xf32>
    %c1504 = arith.constant 1504 : index
    %c0_35 = arith.constant 0 : index
    %130 = vector.load %arg3[%c1504, %c0_35] : memref<1904x128xbf16, #tpu.memory_space<vmem>>, vector<32x64xbf16>
    %131 = arith.truncf %129 : vector<4x32xf32> to vector<4x32xbf16>
    %cst_36 = arith.constant dense<0.000000e+00> : vector<4x64xf32>
    %132 = tpu.matmul %131, %130, %cst_36 {dimension_numbers = #tpu.dot_dimension_numbers<[1], [0], [0], [1], [0, 0, 1, 1], [], []>} : vector<4x32xbf16>, vector<32x64xbf16>, vector<4x64xf32> -> vector<4x64xf32>
    %c56 = arith.constant 56 : index
    %c0_37 = arith.constant 0 : index
    %133 = vector.load %arg4[%c56, %c0_37] : memref<216x128xf32, #tpu.memory_space<vmem>>, vector<1x64xf32>
    %134 = vector.broadcast %133 : vector<1x64xf32> to vector<4x64xf32>
    %135 = arith.addf %132, %134 : vector<4x64xf32>
    %cst_38 = arith.constant 0.000000e+00 : f32
    %136 = vector.broadcast %cst_38 : f32 to vector<4x64xf32>
    %137 = arith.maximumf %135, %136 : vector<4x64xf32>
    %c1536 = arith.constant 1536 : index
    %c0_39 = arith.constant 0 : index
    %138 = vector.load %arg3[%c1536, %c0_39] : memref<1904x128xbf16, #tpu.memory_space<vmem>>, vector<64x32xbf16>
    %139 = arith.truncf %137 : vector<4x64xf32> to vector<4x64xbf16>
    %cst_40 = arith.constant dense<0.000000e+00> : vector<4x32xf32>
    %140 = tpu.matmul %139, %138, %cst_40 {dimension_numbers = #tpu.dot_dimension_numbers<[1], [0], [0], [1], [0, 0, 1, 1], [], []>} : vector<4x64xbf16>, vector<64x32xbf16>, vector<4x32xf32> -> vector<4x32xf32>
    %c64 = arith.constant 64 : index
    %c0_41 = arith.constant 0 : index
    %141 = vector.load %arg4[%c64, %c0_41] : memref<216x128xf32, #tpu.memory_space<vmem>>, vector<1x32xf32>
    %142 = vector.broadcast %141 : vector<1x32xf32> to vector<4x32xf32>
    %143 = arith.addf %140, %142 : vector<4x32xf32>
    %144 = arith.addf %129, %143 : vector<4x32xf32>
    %c72 = arith.constant 72 : index
    %c0_42 = arith.constant 0 : index
    %145 = vector.load %arg4[%c72, %c0_42] : memref<216x128xf32, #tpu.memory_space<vmem>>, vector<1x32xf32>
    %c80 = arith.constant 80 : index
    %c0_43 = arith.constant 0 : index
    %146 = vector.load %arg4[%c80, %c0_43] : memref<216x128xf32, #tpu.memory_space<vmem>>, vector<1x32xf32>
    %cst_44 = arith.constant dense<0.000000e+00> : vector<4xf32>
    %147 = vector.multi_reduction <add>, %144, %cst_44 [1] : vector<4x32xf32> to vector<4xf32>
    %148 = vector.shape_cast %147 : vector<4xf32> to vector<4x1xf32>
    %cst_45 = arith.constant 3.200000e+01 : f32
    %149 = vector.broadcast %cst_45 : f32 to vector<4x1xf32>
    %150 = arith.divf %148, %149 : vector<4x1xf32>
    %151 = vector.broadcast %150 : vector<4x1xf32> to vector<4x32xf32>
    %152 = arith.subf %144, %151 : vector<4x32xf32>
    %153 = arith.mulf %152, %152 : vector<4x32xf32>
    %cst_46 = arith.constant dense<0.000000e+00> : vector<4xf32>
    %154 = vector.multi_reduction <add>, %153, %cst_46 [1] : vector<4x32xf32> to vector<4xf32>
    %155 = vector.shape_cast %154 : vector<4xf32> to vector<4x1xf32>
    %cst_47 = arith.constant 3.200000e+01 : f32
    %156 = vector.broadcast %cst_47 : f32 to vector<4x1xf32>
    %157 = arith.divf %155, %156 : vector<4x1xf32>
    %158 = vector.broadcast %150 : vector<4x1xf32> to vector<4x32xf32>
    %159 = arith.subf %144, %158 : vector<4x32xf32>
    %cst_48 = arith.constant 9.99999974E-6 : f32
    %160 = vector.broadcast %cst_48 : f32 to vector<4x1xf32>
    %161 = arith.addf %157, %160 : vector<4x1xf32>
    %162 = math.rsqrt %161 : vector<4x1xf32>
    %163 = vector.broadcast %162 : vector<4x1xf32> to vector<4x32xf32>
    %164 = arith.mulf %159, %163 : vector<4x32xf32>
    %165 = vector.broadcast %145 : vector<1x32xf32> to vector<4x32xf32>
    %166 = arith.mulf %164, %165 : vector<4x32xf32>
    %167 = vector.broadcast %146 : vector<1x32xf32> to vector<4x32xf32>
    %168 = arith.addf %166, %167 : vector<4x32xf32>
    %169 = tpu.iota {dimensions = array<i32: 1>} : vector<1x11xi32>
    %170 = arith.index_cast %arg0 : i32 to index
    %c0_49 = arith.constant 0 : index
    %171 = memref.load %arg1[%170, %c0_49] : memref<2x5xi32, #tpu.memory_space<smem>>
    %172 = vector.broadcast %171 : i32 to vector<1x11xi32>
    %173 = arith.cmpi eq, %169, %172 : vector<1x11xi32>
    %174 = arith.extui %173 : vector<1x11xi1> to vector<1x11xi32>
    %175 = arith.sitofp %174 : vector<1x11xi32> to vector<1x11xf32>
    %176 = vector.broadcast %171 : i32 to vector<1x1xi32>
    %177 = arith.index_cast %arg0 : i32 to index
    %c1 = arith.constant 1 : index
    %178 = memref.load %arg1[%177, %c1] : memref<2x5xi32, #tpu.memory_space<smem>>
    %179 = vector.broadcast %178 : i32 to vector<1x11xi32>
    %180 = arith.cmpi eq, %169, %179 : vector<1x11xi32>
    %181 = arith.extui %180 : vector<1x11xi1> to vector<1x11xi32>
    %182 = arith.sitofp %181 : vector<1x11xi32> to vector<1x11xf32>
    %183 = vector.broadcast %178 : i32 to vector<1x1xi32>
    %184 = arith.index_cast %arg0 : i32 to index
    %c2 = arith.constant 2 : index
    %185 = memref.load %arg1[%184, %c2] : memref<2x5xi32, #tpu.memory_space<smem>>
    %186 = vector.broadcast %185 : i32 to vector<1x11xi32>
    %187 = arith.cmpi eq, %169, %186 : vector<1x11xi32>
    %188 = arith.extui %187 : vector<1x11xi1> to vector<1x11xi32>
    %189 = arith.sitofp %188 : vector<1x11xi32> to vector<1x11xf32>
    %190 = vector.broadcast %185 : i32 to vector<1x1xi32>
    %191 = arith.index_cast %arg0 : i32 to index
    %c3 = arith.constant 3 : index
    %192 = memref.load %arg1[%191, %c3] : memref<2x5xi32, #tpu.memory_space<smem>>
    %193 = vector.broadcast %192 : i32 to vector<1x11xi32>
    %194 = arith.cmpi eq, %169, %193 : vector<1x11xi32>
    %195 = arith.extui %194 : vector<1x11xi1> to vector<1x11xi32>
    %196 = arith.sitofp %195 : vector<1x11xi32> to vector<1x11xf32>
    %197 = vector.broadcast %192 : i32 to vector<1x1xi32>
    %198 = arith.index_cast %arg0 : i32 to index
    %c4 = arith.constant 4 : index
    %199 = memref.load %arg1[%198, %c4] : memref<2x5xi32, #tpu.memory_space<smem>>
    %200 = vector.broadcast %199 : i32 to vector<1x11xi32>
    %201 = arith.cmpi eq, %169, %200 : vector<1x11xi32>
    %202 = arith.extui %201 : vector<1x11xi1> to vector<1x11xi32>
    %203 = arith.sitofp %202 : vector<1x11xi32> to vector<1x11xf32>
    %204 = vector.broadcast %199 : i32 to vector<1x1xi32>
    %205 = tpu.concatenate %175, %182, %189, %196, %203 in 0 : vector<1x11xf32>, vector<1x11xf32>, vector<1x11xf32>, vector<1x11xf32>, vector<1x11xf32> -> vector<5x11xf32>
    %206 = tpu.concatenate %176, %183, %190, %197, %204 in 1 : vector<1x1xi32>, vector<1x1xi32>, vector<1x1xi32>, vector<1x1xi32>, vector<1x1xi32> -> vector<1x5xi32>
    %207 = tpu.iota {dimensions = array<i32: 0>} : vector<5x5xi32>
    %208 = tpu.iota {dimensions = array<i32: 1>} : vector<5x5xi32>
    %209 = arith.cmpi sle, %208, %207 : vector<5x5xi32>
    %c0_i32 = arith.constant 0 : i32
    %210 = vector.broadcast %c0_i32 : i32 to vector<1x5xi32>
    %211 = arith.cmpi ne, %206, %210 : vector<1x5xi32>
    %212 = vector.broadcast %211 : vector<1x5xi1> to vector<5x5xi1>
    %213 = arith.andi %209, %212 : vector<5x5xi1>
    %c1600 = arith.constant 1600 : index
    %c0_50 = arith.constant 0 : index
    %214 = vector.load %arg3[%c1600, %c0_50] : memref<1904x128xbf16, #tpu.memory_space<vmem>>, vector<11x32xbf16>
    %215 = arith.truncf %205 : vector<5x11xf32> to vector<5x11xbf16>
    %cst_51 = arith.constant dense<0.000000e+00> : vector<5x32xf32>
    %216 = tpu.matmul %215, %214, %cst_51 {dimension_numbers = #tpu.dot_dimension_numbers<[1], [0], [0], [1], [0, 0, 1, 1], [], []>} : vector<5x11xbf16>, vector<11x32xbf16>, vector<5x32xf32> -> vector<5x32xf32>
    %cst_52 = arith.constant 5.65685415 : f32
    %217 = vector.broadcast %cst_52 : f32 to vector<5x32xf32>
    %218 = arith.mulf %216, %217 : vector<5x32xf32>
    %c88 = arith.constant 88 : index
    %c0_53 = arith.constant 0 : index
    %219 = vector.load %arg4[%c88, %c0_53] : memref<216x128xf32, #tpu.memory_space<vmem>>, vector<5x32xf32>
    %220 = arith.addf %218, %219 : vector<5x32xf32>
    %c1616 = arith.constant 1616 : index
    %c0_54 = arith.constant 0 : index
    %221 = vector.load %arg3[%c1616, %c0_54] : memref<1904x128xbf16, #tpu.memory_space<vmem>>, vector<32x96xbf16>
    %222 = arith.truncf %220 : vector<5x32xf32> to vector<5x32xbf16>
    %cst_55 = arith.constant dense<0.000000e+00> : vector<5x96xf32>
    %223 = tpu.matmul %222, %221, %cst_55 {dimension_numbers = #tpu.dot_dimension_numbers<[1], [0], [0], [1], [0, 0, 1, 1], [], []>} : vector<5x32xbf16>, vector<32x96xbf16>, vector<5x96xf32> -> vector<5x96xf32>
    %c104 = arith.constant 104 : index
    %c0_56 = arith.constant 0 : index
    %224 = vector.load %arg4[%c104, %c0_56] : memref<216x128xf32, #tpu.memory_space<vmem>>, vector<1x96xf32>
    %225 = vector.broadcast %224 : vector<1x96xf32> to vector<5x96xf32>
    %226 = arith.addf %223, %225 : vector<5x96xf32>
    %227 = vector.extract_strided_slice %226 {offsets = [0, 0], sizes = [5, 32], strides = [1, 1]} : vector<5x96xf32> to vector<5x32xf32>
    %228 = vector.extract_strided_slice %226 {offsets = [0, 32], sizes = [5, 32], strides = [1, 1]} : vector<5x96xf32> to vector<5x32xf32>
    %229 = vector.extract_strided_slice %226 {offsets = [0, 64], sizes = [5, 32], strides = [1, 1]} : vector<5x96xf32> to vector<5x32xf32>
    %230 = arith.truncf %227 : vector<5x32xf32> to vector<5x32xbf16>
    %231 = arith.truncf %228 : vector<5x32xf32> to vector<5x32xbf16>
    %cst_57 = arith.constant dense<0.000000e+00> : vector<5x5xf32>
    %232 = tpu.matmul %230, %231, %cst_57 {dimension_numbers = #tpu.dot_dimension_numbers<[1], [1], [0], [0], [0, 0, 1, 0], [], []>} : vector<5x32xbf16>, vector<5x32xbf16>, vector<5x5xf32> -> vector<5x5xf32>
    %cst_58 = arith.constant 0.176776692 : f32
    %233 = vector.broadcast %cst_58 : f32 to vector<5x5xf32>
    %234 = arith.mulf %232, %233 : vector<5x5xf32>
    %cst_59 = arith.constant -1.000000e+10 : f32
    %235 = vector.broadcast %cst_59 : f32 to vector<5x5xf32>
    %236 = arith.select %213, %234, %235 : vector<5x5xi1>, vector<5x5xf32>
    %cst_60 = arith.constant dense<0xFF800000> : vector<5xf32>
    %237 = vector.multi_reduction <maximumf>, %236, %cst_60 [1] : vector<5x5xf32> to vector<5xf32>
    %238 = vector.shape_cast %237 : vector<5xf32> to vector<5x1xf32>
    %239 = vector.broadcast %238 : vector<5x1xf32> to vector<5x5xf32>
    %240 = arith.subf %236, %239 : vector<5x5xf32>
    %241 = math.exp %240 : vector<5x5xf32>
    %cst_61 = arith.constant dense<0.000000e+00> : vector<5xf32>
    %242 = vector.multi_reduction <add>, %241, %cst_61 [1] : vector<5x5xf32> to vector<5xf32>
    %243 = vector.shape_cast %242 : vector<5xf32> to vector<5x1xf32>
    %244 = vector.broadcast %243 : vector<5x1xf32> to vector<5x5xf32>
    %245 = arith.divf %241, %244 : vector<5x5xf32>
    %246 = arith.truncf %245 : vector<5x5xf32> to vector<5x5xbf16>
    %247 = arith.truncf %229 : vector<5x32xf32> to vector<5x32xbf16>
    %cst_62 = arith.constant dense<0.000000e+00> : vector<5x32xf32>
    %248 = tpu.matmul %246, %247, %cst_62 {dimension_numbers = #tpu.dot_dimension_numbers<[1], [0], [0], [1], [0, 0, 1, 1], [], []>} : vector<5x5xbf16>, vector<5x32xbf16>, vector<5x32xf32> -> vector<5x32xf32>
    %c1648 = arith.constant 1648 : index
    %c0_63 = arith.constant 0 : index
    %249 = vector.load %arg3[%c1648, %c0_63] : memref<1904x128xbf16, #tpu.memory_space<vmem>>, vector<32x32xbf16>
    %250 = arith.truncf %248 : vector<5x32xf32> to vector<5x32xbf16>
    %cst_64 = arith.constant dense<0.000000e+00> : vector<5x32xf32>
    %251 = tpu.matmul %250, %249, %cst_64 {dimension_numbers = #tpu.dot_dimension_numbers<[1], [0], [0], [1], [0, 0, 1, 1], [], []>} : vector<5x32xbf16>, vector<32x32xbf16>, vector<5x32xf32> -> vector<5x32xf32>
    %c112 = arith.constant 112 : index
    %c0_65 = arith.constant 0 : index
    %252 = vector.load %arg4[%c112, %c0_65] : memref<216x128xf32, #tpu.memory_space<vmem>>, vector<1x32xf32>
    %253 = vector.broadcast %252 : vector<1x32xf32> to vector<5x32xf32>
    %254 = arith.addf %251, %253 : vector<5x32xf32>
    %255 = arith.addf %220, %254 : vector<5x32xf32>
    %c120 = arith.constant 120 : index
    %c0_66 = arith.constant 0 : index
    %256 = vector.load %arg4[%c120, %c0_66] : memref<216x128xf32, #tpu.memory_space<vmem>>, vector<1x32xf32>
    %c128 = arith.constant 128 : index
    %c0_67 = arith.constant 0 : index
    %257 = vector.load %arg4[%c128, %c0_67] : memref<216x128xf32, #tpu.memory_space<vmem>>, vector<1x32xf32>
    %cst_68 = arith.constant dense<0.000000e+00> : vector<5xf32>
    %258 = vector.multi_reduction <add>, %255, %cst_68 [1] : vector<5x32xf32> to vector<5xf32>
    %259 = vector.shape_cast %258 : vector<5xf32> to vector<5x1xf32>
    %cst_69 = arith.constant 3.200000e+01 : f32
    %260 = vector.broadcast %cst_69 : f32 to vector<5x1xf32>
    %261 = arith.divf %259, %260 : vector<5x1xf32>
    %262 = vector.broadcast %261 : vector<5x1xf32> to vector<5x32xf32>
    %263 = arith.subf %255, %262 : vector<5x32xf32>
    %264 = arith.mulf %263, %263 : vector<5x32xf32>
    %cst_70 = arith.constant dense<0.000000e+00> : vector<5xf32>
    %265 = vector.multi_reduction <add>, %264, %cst_70 [1] : vector<5x32xf32> to vector<5xf32>
    %266 = vector.shape_cast %265 : vector<5xf32> to vector<5x1xf32>
    %cst_71 = arith.constant 3.200000e+01 : f32
    %267 = vector.broadcast %cst_71 : f32 to vector<5x1xf32>
    %268 = arith.divf %266, %267 : vector<5x1xf32>
    %269 = vector.broadcast %261 : vector<5x1xf32> to vector<5x32xf32>
    %270 = arith.subf %255, %269 : vector<5x32xf32>
    %cst_72 = arith.constant 9.99999974E-6 : f32
    %271 = vector.broadcast %cst_72 : f32 to vector<5x1xf32>
    %272 = arith.addf %268, %271 : vector<5x1xf32>
    %273 = math.rsqrt %272 : vector<5x1xf32>
    %274 = vector.broadcast %273 : vector<5x1xf32> to vector<5x32xf32>
    %275 = arith.mulf %270, %274 : vector<5x32xf32>
    %276 = vector.broadcast %256 : vector<1x32xf32> to vector<5x32xf32>
    %277 = arith.mulf %275, %276 : vector<5x32xf32>
    %278 = vector.broadcast %257 : vector<1x32xf32> to vector<5x32xf32>
    %279 = arith.addf %277, %278 : vector<5x32xf32>
    %c1680 = arith.constant 1680 : index
    %c0_73 = arith.constant 0 : index
    %280 = vector.load %arg3[%c1680, %c0_73] : memref<1904x128xbf16, #tpu.memory_space<vmem>>, vector<32x32xbf16>
    %281 = arith.truncf %279 : vector<5x32xf32> to vector<5x32xbf16>
    %cst_74 = arith.constant dense<0.000000e+00> : vector<5x32xf32>
    %282 = tpu.matmul %281, %280, %cst_74 {dimension_numbers = #tpu.dot_dimension_numbers<[1], [0], [0], [1], [0, 0, 1, 1], [], []>} : vector<5x32xbf16>, vector<32x32xbf16>, vector<5x32xf32> -> vector<5x32xf32>
    %c136 = arith.constant 136 : index
    %c0_75 = arith.constant 0 : index
    %283 = vector.load %arg4[%c136, %c0_75] : memref<216x128xf32, #tpu.memory_space<vmem>>, vector<1x32xf32>
    %284 = vector.broadcast %283 : vector<1x32xf32> to vector<5x32xf32>
    %285 = arith.addf %282, %284 : vector<5x32xf32>
    %c1712 = arith.constant 1712 : index
    %c0_76 = arith.constant 0 : index
    %286 = vector.load %arg3[%c1712, %c0_76] : memref<1904x128xbf16, #tpu.memory_space<vmem>>, vector<32x64xbf16>
    %287 = arith.truncf %168 : vector<4x32xf32> to vector<4x32xbf16>
    %cst_77 = arith.constant dense<0.000000e+00> : vector<4x64xf32>
    %288 = tpu.matmul %287, %286, %cst_77 {dimension_numbers = #tpu.dot_dimension_numbers<[1], [0], [0], [1], [0, 0, 1, 1], [], []>} : vector<4x32xbf16>, vector<32x64xbf16>, vector<4x64xf32> -> vector<4x64xf32>
    %c144 = arith.constant 144 : index
    %c0_78 = arith.constant 0 : index
    %289 = vector.load %arg4[%c144, %c0_78] : memref<216x128xf32, #tpu.memory_space<vmem>>, vector<1x64xf32>
    %290 = vector.broadcast %289 : vector<1x64xf32> to vector<4x64xf32>
    %291 = arith.addf %288, %290 : vector<4x64xf32>
    %292 = vector.extract_strided_slice %291 {offsets = [0, 0], sizes = [4, 32], strides = [1, 1]} : vector<4x64xf32> to vector<4x32xf32>
    %293 = vector.extract_strided_slice %291 {offsets = [0, 32], sizes = [4, 32], strides = [1, 1]} : vector<4x64xf32> to vector<4x32xf32>
    %294 = arith.truncf %285 : vector<5x32xf32> to vector<5x32xbf16>
    %295 = arith.truncf %292 : vector<4x32xf32> to vector<4x32xbf16>
    %cst_79 = arith.constant dense<0.000000e+00> : vector<5x4xf32>
    %296 = tpu.matmul %294, %295, %cst_79 {dimension_numbers = #tpu.dot_dimension_numbers<[1], [1], [0], [0], [0, 0, 1, 0], [], []>} : vector<5x32xbf16>, vector<4x32xbf16>, vector<5x4xf32> -> vector<5x4xf32>
    %cst_80 = arith.constant 0.176776692 : f32
    %297 = vector.broadcast %cst_80 : f32 to vector<5x4xf32>
    %298 = arith.mulf %296, %297 : vector<5x4xf32>
    %cst_81 = arith.constant dense<0xFF800000> : vector<5xf32>
    %299 = vector.multi_reduction <maximumf>, %298, %cst_81 [1] : vector<5x4xf32> to vector<5xf32>
    %300 = vector.shape_cast %299 : vector<5xf32> to vector<5x1xf32>
    %301 = vector.broadcast %300 : vector<5x1xf32> to vector<5x4xf32>
    %302 = arith.subf %298, %301 : vector<5x4xf32>
    %303 = math.exp %302 : vector<5x4xf32>
    %cst_82 = arith.constant dense<0.000000e+00> : vector<5xf32>
    %304 = vector.multi_reduction <add>, %303, %cst_82 [1] : vector<5x4xf32> to vector<5xf32>
    %305 = vector.shape_cast %304 : vector<5xf32> to vector<5x1xf32>
    %306 = vector.broadcast %305 : vector<5x1xf32> to vector<5x4xf32>
    %307 = arith.divf %303, %306 : vector<5x4xf32>
    %308 = arith.truncf %307 : vector<5x4xf32> to vector<5x4xbf16>
    %309 = arith.truncf %293 : vector<4x32xf32> to vector<4x32xbf16>
    %cst_83 = arith.constant dense<0.000000e+00> : vector<5x32xf32>
    %310 = tpu.matmul %308, %309, %cst_83 {dimension_numbers = #tpu.dot_dimension_numbers<[1], [0], [0], [1], [0, 0, 1, 1], [], []>} : vector<5x4xbf16>, vector<4x32xbf16>, vector<5x32xf32> -> vector<5x32xf32>
    %c1744 = arith.constant 1744 : index
    %c0_84 = arith.constant 0 : index
    %311 = vector.load %arg3[%c1744, %c0_84] : memref<1904x128xbf16, #tpu.memory_space<vmem>>, vector<32x32xbf16>
    %312 = arith.truncf %310 : vector<5x32xf32> to vector<5x32xbf16>
    %cst_85 = arith.constant dense<0.000000e+00> : vector<5x32xf32>
    %313 = tpu.matmul %312, %311, %cst_85 {dimension_numbers = #tpu.dot_dimension_numbers<[1], [0], [0], [1], [0, 0, 1, 1], [], []>} : vector<5x32xbf16>, vector<32x32xbf16>, vector<5x32xf32> -> vector<5x32xf32>
    %c152 = arith.constant 152 : index
    %c0_86 = arith.constant 0 : index
    %314 = vector.load %arg4[%c152, %c0_86] : memref<216x128xf32, #tpu.memory_space<vmem>>, vector<1x32xf32>
    %315 = vector.broadcast %314 : vector<1x32xf32> to vector<5x32xf32>
    %316 = arith.addf %313, %315 : vector<5x32xf32>
    %317 = arith.addf %279, %316 : vector<5x32xf32>
    %c160 = arith.constant 160 : index
    %c0_87 = arith.constant 0 : index
    %318 = vector.load %arg4[%c160, %c0_87] : memref<216x128xf32, #tpu.memory_space<vmem>>, vector<1x32xf32>
    %c168 = arith.constant 168 : index
    %c0_88 = arith.constant 0 : index
    %319 = vector.load %arg4[%c168, %c0_88] : memref<216x128xf32, #tpu.memory_space<vmem>>, vector<1x32xf32>
    %cst_89 = arith.constant dense<0.000000e+00> : vector<5xf32>
    %320 = vector.multi_reduction <add>, %317, %cst_89 [1] : vector<5x32xf32> to vector<5xf32>
    %321 = vector.shape_cast %320 : vector<5xf32> to vector<5x1xf32>
    %cst_90 = arith.constant 3.200000e+01 : f32
    %322 = vector.broadcast %cst_90 : f32 to vector<5x1xf32>
    %323 = arith.divf %321, %322 : vector<5x1xf32>
    %324 = vector.broadcast %323 : vector<5x1xf32> to vector<5x32xf32>
    %325 = arith.subf %317, %324 : vector<5x32xf32>
    %326 = arith.mulf %325, %325 : vector<5x32xf32>
    %cst_91 = arith.constant dense<0.000000e+00> : vector<5xf32>
    %327 = vector.multi_reduction <add>, %326, %cst_91 [1] : vector<5x32xf32> to vector<5xf32>
    %328 = vector.shape_cast %327 : vector<5xf32> to vector<5x1xf32>
    %cst_92 = arith.constant 3.200000e+01 : f32
    %329 = vector.broadcast %cst_92 : f32 to vector<5x1xf32>
    %330 = arith.divf %328, %329 : vector<5x1xf32>
    %331 = vector.broadcast %323 : vector<5x1xf32> to vector<5x32xf32>
    %332 = arith.subf %317, %331 : vector<5x32xf32>
    %cst_93 = arith.constant 9.99999974E-6 : f32
    %333 = vector.broadcast %cst_93 : f32 to vector<5x1xf32>
    %334 = arith.addf %330, %333 : vector<5x1xf32>
    %335 = math.rsqrt %334 : vector<5x1xf32>
    %336 = vector.broadcast %335 : vector<5x1xf32> to vector<5x32xf32>
    %337 = arith.mulf %332, %336 : vector<5x32xf32>
    %338 = vector.broadcast %318 : vector<1x32xf32> to vector<5x32xf32>
    %339 = arith.mulf %337, %338 : vector<5x32xf32>
    %340 = vector.broadcast %319 : vector<1x32xf32> to vector<5x32xf32>
    %341 = arith.addf %339, %340 : vector<5x32xf32>
    %c1776 = arith.constant 1776 : index
    %c0_94 = arith.constant 0 : index
    %342 = vector.load %arg3[%c1776, %c0_94] : memref<1904x128xbf16, #tpu.memory_space<vmem>>, vector<32x64xbf16>
    %343 = arith.truncf %341 : vector<5x32xf32> to vector<5x32xbf16>
    %cst_95 = arith.constant dense<0.000000e+00> : vector<5x64xf32>
    %344 = tpu.matmul %343, %342, %cst_95 {dimension_numbers = #tpu.dot_dimension_numbers<[1], [0], [0], [1], [0, 0, 1, 1], [], []>} : vector<5x32xbf16>, vector<32x64xbf16>, vector<5x64xf32> -> vector<5x64xf32>
    %c176 = arith.constant 176 : index
    %c0_96 = arith.constant 0 : index
    %345 = vector.load %arg4[%c176, %c0_96] : memref<216x128xf32, #tpu.memory_space<vmem>>, vector<1x64xf32>
    %346 = vector.broadcast %345 : vector<1x64xf32> to vector<5x64xf32>
    %347 = arith.addf %344, %346 : vector<5x64xf32>
    %cst_97 = arith.constant 0.000000e+00 : f32
    %348 = vector.broadcast %cst_97 : f32 to vector<5x64xf32>
    %349 = arith.maximumf %347, %348 : vector<5x64xf32>
    %c1808 = arith.constant 1808 : index
    %c0_98 = arith.constant 0 : index
    %350 = vector.load %arg3[%c1808, %c0_98] : memref<1904x128xbf16, #tpu.memory_space<vmem>>, vector<64x32xbf16>
    %351 = arith.truncf %349 : vector<5x64xf32> to vector<5x64xbf16>
    %cst_99 = arith.constant dense<0.000000e+00> : vector<5x32xf32>
    %352 = tpu.matmul %351, %350, %cst_99 {dimension_numbers = #tpu.dot_dimension_numbers<[1], [0], [0], [1], [0, 0, 1, 1], [], []>} : vector<5x64xbf16>, vector<64x32xbf16>, vector<5x32xf32> -> vector<5x32xf32>
    %c184 = arith.constant 184 : index
    %c0_100 = arith.constant 0 : index
    %353 = vector.load %arg4[%c184, %c0_100] : memref<216x128xf32, #tpu.memory_space<vmem>>, vector<1x32xf32>
    %354 = vector.broadcast %353 : vector<1x32xf32> to vector<5x32xf32>
    %355 = arith.addf %352, %354 : vector<5x32xf32>
    %356 = arith.addf %341, %355 : vector<5x32xf32>
    %c192 = arith.constant 192 : index
    %c0_101 = arith.constant 0 : index
    %357 = vector.load %arg4[%c192, %c0_101] : memref<216x128xf32, #tpu.memory_space<vmem>>, vector<1x32xf32>
    %c200 = arith.constant 200 : index
    %c0_102 = arith.constant 0 : index
    %358 = vector.load %arg4[%c200, %c0_102] : memref<216x128xf32, #tpu.memory_space<vmem>>, vector<1x32xf32>
    %cst_103 = arith.constant dense<0.000000e+00> : vector<5xf32>
    %359 = vector.multi_reduction <add>, %356, %cst_103 [1] : vector<5x32xf32> to vector<5xf32>
    %360 = vector.shape_cast %359 : vector<5xf32> to vector<5x1xf32>
    %cst_104 = arith.constant 3.200000e+01 : f32
    %361 = vector.broadcast %cst_104 : f32 to vector<5x1xf32>
    %362 = arith.divf %360, %361 : vector<5x1xf32>
    %363 = vector.broadcast %362 : vector<5x1xf32> to vector<5x32xf32>
    %364 = arith.subf %356, %363 : vector<5x32xf32>
    %365 = arith.mulf %364, %364 : vector<5x32xf32>
    %cst_105 = arith.constant dense<0.000000e+00> : vector<5xf32>
    %366 = vector.multi_reduction <add>, %365, %cst_105 [1] : vector<5x32xf32> to vector<5xf32>
    %367 = vector.shape_cast %366 : vector<5xf32> to vector<5x1xf32>
    %cst_106 = arith.constant 3.200000e+01 : f32
    %368 = vector.broadcast %cst_106 : f32 to vector<5x1xf32>
    %369 = arith.divf %367, %368 : vector<5x1xf32>
    %370 = vector.broadcast %362 : vector<5x1xf32> to vector<5x32xf32>
    %371 = arith.subf %356, %370 : vector<5x32xf32>
    %cst_107 = arith.constant 9.99999974E-6 : f32
    %372 = vector.broadcast %cst_107 : f32 to vector<5x1xf32>
    %373 = arith.addf %369, %372 : vector<5x1xf32>
    %374 = math.rsqrt %373 : vector<5x1xf32>
    %375 = vector.broadcast %374 : vector<5x1xf32> to vector<5x32xf32>
    %376 = arith.mulf %371, %375 : vector<5x32xf32>
    %377 = vector.broadcast %357 : vector<1x32xf32> to vector<5x32xf32>
    %378 = arith.mulf %376, %377 : vector<5x32xf32>
    %379 = vector.broadcast %358 : vector<1x32xf32> to vector<5x32xf32>
    %380 = arith.addf %378, %379 : vector<5x32xf32>
    %c1872 = arith.constant 1872 : index
    %c0_108 = arith.constant 0 : index
    %381 = vector.load %arg3[%c1872, %c0_108] : memref<1904x128xbf16, #tpu.memory_space<vmem>>, vector<32x11xbf16>
    %382 = arith.truncf %380 : vector<5x32xf32> to vector<5x32xbf16>
    %cst_109 = arith.constant dense<0.000000e+00> : vector<5x11xf32>
    %383 = tpu.matmul %382, %381, %cst_109 {dimension_numbers = #tpu.dot_dimension_numbers<[1], [0], [0], [1], [0, 0, 1, 1], [], []>} : vector<5x32xbf16>, vector<32x11xbf16>, vector<5x11xf32> -> vector<5x11xf32>
    %c208 = arith.constant 208 : index
    %c0_110 = arith.constant 0 : index
    %384 = vector.load %arg4[%c208, %c0_110] : memref<216x128xf32, #tpu.memory_space<vmem>>, vector<1x11xf32>
    %385 = vector.broadcast %384 : vector<1x11xf32> to vector<5x11xf32>
    %386 = arith.addf %383, %385 : vector<5x11xf32>
    %c0_111 = arith.constant 0 : index
    %c0_112 = arith.constant 0 : index
    %c0_113 = arith.constant 0 : index
    %387 = vector.load %arg5[%c0_111, %c0_112, %c0_113] : memref<1x5x11xf32, #tpu.memory_space<vmem>>, vector<1x5x11xf32>
    %388 = vector.shape_cast %387 : vector<1x5x11xf32> to vector<5x11xf32>
    %389 = vector.shape_cast %386 : vector<5x11xf32> to vector<1x5x11xf32>
    tpu.vector_store %arg5[%c0_111, %c0_112, %c0_113], %389 {strides = array<i32>} : memref<1x5x11xf32, #tpu.memory_space<vmem>>, vector<1x5x11xf32>,
    %c0_114 = arith.constant 0 : index
    %c0_115 = arith.constant 0 : index
    %c0_116 = arith.constant 0 : index
    %390 = vector.load %arg6[%c0_114, %c0_115, %c0_116] : memref<1x5x4xf32, #tpu.memory_space<vmem>>, vector<1x5x4xf32>
    %391 = vector.shape_cast %390 : vector<1x5x4xf32> to vector<5x4xf32>
    %392 = vector.shape_cast %307 : vector<5x4xf32> to vector<1x5x4xf32>
    tpu.vector_store %arg6[%c0_114, %c0_115, %c0_116], %392 {strides = array<i32>} : memref<1x5x4xf32, #tpu.memory_space<vmem>>, vector<1x5x4xf32>,
    return
  }
  func.func @transform_0(%arg0: i32, %arg1: memref<2x5xi32, #tpu.memory_space<smem>>) -> (i32, i32, i32) {
    %c0_i32 = arith.constant 0 : i32
    %c0_i32_0 = arith.constant 0 : i32
    %c0_i32_1 = arith.constant 0 : i32
    return %arg0, %c0_i32, %c0_i32_0 : i32, i32, i32
  }
  func.func @transform_1(%arg0: i32, %arg1: memref<2x5xi32, #tpu.memory_space<smem>>) -> (i32, i32) {
    %c0_i32 = arith.constant 0 : i32
    %c0_i32_0 = arith.constant 0 : i32
    %c0_i32_1 = arith.constant 0 : i32
    return %c0_i32, %c0_i32_0 : i32, i32
  }
  func.func @transform_2(%arg0: i32, %arg1: memref<2x5xi32, #tpu.memory_space<smem>>) -> (i32, i32) {
    %c0_i32 = arith.constant 0 : i32
    %c0_i32_0 = arith.constant 0 : i32
    %c0_i32_1 = arith.constant 0 : i32
    return %c0_i32, %c0_i32_0 : i32, i32
  }
  func.func @transform_3(%arg0: i32, %arg1: memref<2x5xi32, #tpu.memory_space<smem>>) -> (i32, i32, i32) {
    %c0_i32 = arith.constant 0 : i32
    %c0_i32_0 = arith.constant 0 : i32
    %c0_i32_1 = arith.constant 0 : i32
    return %arg0, %c0_i32, %c0_i32_0 : i32, i32, i32
  }
  func.func @transform_4(%arg0: i32, %arg1: memref<2x5xi32, #tpu.memory_space<smem>>) -> (i32, i32, i32) {
    %c0_i32 = arith.constant 0 : i32
    %c0_i32_0 = arith.constant 0 : i32
    %c0_i32_1 = arith.constant 0 : i32
    return %arg0, %c0_i32, %c0_i32_0 : i32, i32, i32
  }
}

</mosaic_0001>

<llo_original>
// kernel: seq2seq_forward.1
$region0: #{seq2seq_forward.1}
  #allocation0 [shape = 'u32[]', space=smem, size = 0x4, offset = 0x4, fixed_abs, tag = 'smem constant byte address 0x4 - core index']
  #allocation1 [shape = 'u32[144,128]{1,0:T(1,128)}', space=vmem, size = 0x12000, scoped, tag = 'internal scratch']
  #allocation2 [shape = 's32[1]{0}', space=sflag, size = 0x4, scoped, tag = 'scoped memory for seq2seq_forward.1']
  #allocation3 [shape = 'u8[1024]{0}', space=smem, size = 0x400, scoped, tag = 'prefetched SMEM operand 0']
  %s0 = inlined_call_operand.vmem [shape: s32[2,5], index: 0, kind: input, shape index: {}]
  %s1 = inlined_call_operand.vmem [shape: bf16[2,256,27], index: 1, kind: input, shape index: {}]
  %s2 = inlined_call_operand.vmem [shape: bf16[1904,128], index: 2, kind: input, shape index: {}]
  %s3 = inlined_call_operand.vmem [shape: f32[216,128], index: 3, kind: input, shape index: {}]
  %s4 = inlined_call_operand.vmem [shape: f32[2,5,11], index: 4, kind: output, shape index: {0}]
  %s5 = inlined_call_operand.vmem [shape: f32[2,5,4], index: 5, kind: output, shape index: {1}]
  %6 = xla_tuple %s4, %s5
  %s7 = sld [smem:[#allocation0]]
  $region53: #{seq2seq_forward.1} parent=0
    _
  %s9 = ssub.s32 1, %s7
  %s10 = scalar_select 0, %s9, %s7
  %s11 = sshll.u32 %s0, 4
  %s12 = int_to_ptr.vmem [resolvable:$true] %s11
  %14 = dma.vmem_to_smem %s12, 32, [#allocation3], [#allocation2]
  %15 = dma.done [#allocation2], 32
  %16 = sfence
  loop: start=0, step=1, limit=4
  $region2: #{seq2seq_forward.1} parent=0 // loop_pre_header
    _
  $region3: #{seq2seq_forward.1} parent=0 // loop_header
    %s18 = sphi 0, %s22
    %p19 = scmp.ge.s32.totalorder %s18, 4
    %s28 = sphi 0, %s30
    %s31 = sphi 0, %s28
    %s32 = sphi 0, %s31
    %s48 = sphi 0, %s32
    %s52 = sphi 0, %s52
    %s54 = sphi 0, %s52
    %s55 = sphi 0, %s54
    %s69 = sphi 0, %s55
    %s73 = sphi 0, %s73
    %s75 = sphi 0, %s73
    %s76 = sphi 0, %s75
    %s90 = sphi 0, %s76
    %s96 = sphi 0, %s98
    %s99 = sphi 0, %s96
    %s100 = sphi 0, %s99
    %s116 = sphi 0, %s100
    %s122 = sphi 0, %s124
    %s125 = sphi 0, %s122
    %s126 = sphi 0, %s125
    %s142 = sphi 0, %s126
  $region4: #{seq2seq_forward.1} parent=0 // loop_header_branch
    %21 = sbr.rel (%p19) target = $region8
  $region5: #{seq2seq_forward.1} parent=0 // loop_body
    %s23 = ssub.s32 %s18, 1
    %s24 = ssub.s32 %s18, 2
    %s25 = sadd.s32 %s18, 1
    %s26 = ssub.s32 %s18, %s25
    %p27 = scmp.eq.s32.totalorder %s26, 0
    %s29 = sadd.s32 %s28, 1
    %s30 = scalar_select %p27, %s28, %s29
    %p33 = pneg %p27
    %p34 = scmp.eq.s32.totalorder %s18, 1
    %p35 = por %p33, %p34
    %p36 = scmp.ne.s32.totalorder %s28, %s31
    %p37 = scmp.eq.s32.totalorder %s18, 0
    %p38 = por %p36, %p37
    %p39 = scmp.ne.s32.totalorder %s28, %s31
    %p40 = scmp.eq.s32.totalorder %s23, 1
    %p41 = por %p39, %p40
    %p42 = scmp.ne.s32.totalorder %s31, %s32
    %p43 = scmp.eq.s32.totalorder %s23, 0
    %p44 = por %p42, %p43
    %p45 = scmp.ne.s32.totalorder %s31, %s32
    %p46 = scmp.eq.s32.totalorder %s24, 1
    %p47 = por %p45, %p46
    %p49 = scmp.ne.s32.totalorder %s32, %s48
    %p50 = scmp.eq.s32.totalorder %s24, 0
    %p51 = por %p49, %p50
    %s53 = sadd.s32 %s52, 1
    %p56 = scmp.eq.s32.totalorder %s18, 1
    %p57 = scmp.ne.s32.totalorder %s52, %s54
    %p58 = scmp.eq.s32.totalorder %s18, 0
    %p59 = por %p57, %p58
    %p60 = scmp.ne.s32.totalorder %s52, %s54
    %p61 = scmp.eq.s32.totalorder %s23, 1
    %p62 = por %p60, %p61
    %p63 = scmp.ne.s32.totalorder %s54, %s55
    %p64 = scmp.eq.s32.totalorder %s23, 0
    %p65 = por %p63, %p64
    %p66 = scmp.ne.s32.totalorder %s54, %s55
    %p67 = scmp.eq.s32.totalorder %s24, 1
    %p68 = por %p66, %p67
    %p70 = scmp.ne.s32.totalorder %s55, %s69
    %p71 = scmp.eq.s32.totalorder %s24, 0
    %p72 = por %p70, %p71
    %s74 = sadd.s32 %s73, 1
    %p77 = scmp.eq.s32.totalorder %s18, 1
    %p78 = scmp.ne.s32.totalorder %s73, %s75
    %p79 = scmp.eq.s32.totalorder %s18, 0
    %p80 = por %p78, %p79
    %p81 = scmp.ne.s32.totalorder %s73, %s75
    %p82 = scmp.eq.s32.totalorder %s23, 1
    %p83 = por %p81, %p82
    %p84 = scmp.ne.s32.totalorder %s75, %s76
    %p85 = scmp.eq.s32.totalorder %s23, 0
    %p86 = por %p84, %p85
    %p87 = scmp.ne.s32.totalorder %s75, %s76
    %p88 = scmp.eq.s32.totalorder %s24, 1
    %p89 = por %p87, %p88
    %p91 = scmp.ne.s32.totalorder %s76, %s90
    %p92 = scmp.eq.s32.totalorder %s24, 0
    %p93 = por %p91, %p92
    %s94 = ssub.s32 %s18, %s25
    %p95 = scmp.eq.s32.totalorder %s94, 0
    %s97 = sadd.s32 %s96, 1
    %s98 = scalar_select %p95, %s96, %s97
    %p101 = pneg %p95
    %p102 = scmp.eq.s32.totalorder %s18, 1
    %p103 = por %p101, %p102
    %p104 = scmp.ne.s32.totalorder %s96, %s99
    %p105 = scmp.eq.s32.totalorder %s18, 0
    %p106 = por %p104, %p105
    %p107 = scmp.ne.s32.totalorder %s96, %s99
    %p108 = scmp.eq.s32.totalorder %s23, 1
    %p109 = por %p107, %p108
    %p110 = scmp.ne.s32.totalorder %s99, %s100
    %p111 = scmp.eq.s32.totalorder %s23, 0
    %p112 = por %p110, %p111
    %p113 = scmp.ne.s32.totalorder %s99, %s100
    %p114 = scmp.eq.s32.totalorder %s24, 1
    %p115 = por %p113, %p114
    %p117 = scmp.ne.s32.totalorder %s100, %s116
    %p118 = scmp.eq.s32.totalorder %s24, 0
    %p119 = por %p117, %p118
    %s120 = ssub.s32 %s18, %s25
    %p121 = scmp.eq.s32.totalorder %s120, 0
    %s123 = sadd.s32 %s122, 1
    %s124 = scalar_select %p121, %s122, %s123
    %p127 = pneg %p121
    %p128 = scmp.eq.s32.totalorder %s18, 1
    %p129 = por %p127, %p128
    %p130 = scmp.ne.s32.totalorder %s122, %s125
    %p131 = scmp.eq.s32.totalorder %s18, 0
    %p132 = por %p130, %p131
    %p133 = scmp.ne.s32.totalorder %s122, %s125
    %p134 = scmp.eq.s32.totalorder %s23, 1
    %p135 = por %p133, %p134
    %p136 = scmp.ne.s32.totalorder %s125, %s126
    %p137 = scmp.eq.s32.totalorder %s23, 0
    %p138 = por %p136, %p137
    %p139 = scmp.ne.s32.totalorder %s125, %s126
    %p140 = scmp.eq.s32.totalorder %s24, 1
    %p141 = por %p139, %p140
    %p143 = scmp.ne.s32.totalorder %s126, %s142
    %p144 = scmp.eq.s32.totalorder %s24, 0
    %p145 = por %p143, %p144
    %p146 = scmp.le.s32.totalorder 1, %s18
    %p147 = scmp.lt.s32.totalorder %s18, 3
    %p148 = pnand %p146, %p147
    %p149 = pneg %p148
    // Predicated region
    $region9: #{seq2seq_forward.1} parent=5 // pred_check
      _
    $region10: #{seq2seq_forward.1} parent=5 // pred_check_branch
      %151 = sbr.rel (%p148) target = $region12
    $region11: #{seq2seq_forward.1} parent=5 // pred_region
      %s152 = ssub.s32 %s18, 1
      // Predicated region
      $region13: #{seq2seq_forward.1} parent=11 // pred_check
        %p153 = pneg %p65
      $region14: #{seq2seq_forward.1} parent=11 // pred_check_branch
        %155 = sbr.rel (%p153) target = $region16
      $region15: #{seq2seq_forward.1} parent=11 // pred_region
        _
      $region16: #{seq2seq_forward.1} parent=11 // pred_fallthru
        _
      // Predicated region
      $region17: #{seq2seq_forward.1} parent=11 // pred_check
        %p156 = pneg %p86
      $region18: #{seq2seq_forward.1} parent=11 // pred_check_branch
        %158 = sbr.rel (%p156) target = $region20
      $region19: #{seq2seq_forward.1} parent=11 // pred_region
        _
      $region20: #{seq2seq_forward.1} parent=11 // pred_fallthru
        _
    $region12: #{seq2seq_forward.1} parent=5 // pred_fallthru
      _
    %p159 = scmp.lt.s32.totalorder %s18, 2
    // Predicated region
    $region21: #{seq2seq_forward.1} parent=5 // pred_check
      %p160 = pneg %p159
    $region22: #{seq2seq_forward.1} parent=5 // pred_check_branch
      %162 = sbr.rel (%p160) target = $region24
    $region23: #{seq2seq_forward.1} parent=5 // pred_region
      // Predicated region
      $region25: #{seq2seq_forward.1} parent=23 // pred_check
        %p163 = pneg %p38
      $region26: #{seq2seq_forward.1} parent=23 // pred_check_branch
        %165 = sbr.rel (%p163) target = $region28
      $region27: #{seq2seq_forward.1} parent=23 // pred_region
        %p166 = scmp.lt.s32.totalorder %s18, 1
        %s167 = scalar_select %p166, %s18, 1
        %s168 = smul.addr %s167, 32
        %s169 = smul.addr %s168, 4
        %s170 = scalar_lea.vmem %s1, %s169
      $region28: #{seq2seq_forward.1} parent=23 // pred_fallthru
        _
    $region24: #{seq2seq_forward.1} parent=5 // pred_fallthru
      _
    %p171 = scmp.le.s32.totalorder 1, %s18
    %p172 = scmp.lt.s32.totalorder %s18, 3
    %p173 = pnand %p171, %p172
    %p174 = pneg %p173
    // Predicated region
    $region29: #{seq2seq_forward.1} parent=5 // pred_check
      _
    $region30: #{seq2seq_forward.1} parent=5 // pred_check_branch
      %176 = sbr.rel (%p173) target = $region32
    $region31: #{seq2seq_forward.1} parent=5 // pred_region
      %s177 = ssub.s32 %s18, 1
      %p178 = scmp.lt.s32.totalorder %s23, 1
      %s179 = scalar_select %p178, %s23, 1
      %s180 = smul.addr %s179, 32
      %s181 = smul.addr %s180, 4
      %s182 = scalar_lea.vmem %s1, %s181
      %p183 = pneg %p44
      %p184 = pneg %p41
      %p185 = pneg %p65
      %p186 = pneg %p62
      %p187 = pneg %p86
      %p188 = pneg %p83
      %p189 = pneg %p112
      %p190 = pneg %p109
      %p191 = scmp.lt.s32.totalorder %s23, 1
      %s192 = scalar_select %p191, %s23, 1
      %s193 = smul.addr %s192, 8
      %s194 = scalar_lea.vmem %s4, %s193
      %p195 = pneg %p138
      %p196 = pneg %p135
      %p197 = scmp.lt.s32.totalorder %s23, 1
      %s198 = scalar_select %p197, %s23, 1
      %s199 = smul.addr %s198, 8
      %s200 = scalar_lea.vmem %s5, %s199
      %p201 = scmp.lt.s32.totalorder %s23, 1
      %s202 = scalar_select %p201, %s23, 1
      %s203 = smul.addr %s202, 32
      %s204 = smul.addr %s203, 4
      %s205 = scalar_lea.vmem %s1, %s204
      %p206 = scmp.lt.s32.totalorder %s23, 1
      %s207 = scalar_select %p206, %s23, 1
      %s208 = smul.addr %s207, 8
      %s209 = scalar_lea.vmem %s4, %s208
      %p210 = scmp.lt.s32.totalorder %s23, 1
      %s211 = scalar_select %p210, %s23, 1
      %s212 = smul.addr %s211, 8
      %s213 = scalar_lea.vmem %s5, %s212
      %v215 = vld [vmem:[%s205] sm:$0xf]
      %v216 = vld [vmem:[%s205 + $0x4] sm:$0xf]
      %v217 = vld [vmem:[%s205 + $0x8] sm:$0xf]
      %v218 = vld [vmem:[%s205 + $0xc] sm:$0xf]
      %v219 = vld [vmem:[%s205 + $0x10] sm:$0xf]
      %v220 = vld [vmem:[%s205 + $0x14] sm:$0xf]
      %v221 = vld [vmem:[%s205 + $0x18] sm:$0xf]
      %v222 = vld [vmem:[%s205 + $0x1c] sm:$0xf]
      %v223 = vld [vmem:[%s205 + $0x20] sm:$0xf]
      %v224 = vld [vmem:[%s205 + $0x24] sm:$0xf]
      %v225 = vld [vmem:[%s205 + $0x28] sm:$0xf]
      %v226 = vld [vmem:[%s205 + $0x2c] sm:$0xf]
      %v227 = vld [vmem:[%s205 + $0x30] sm:$0xf]
      %v228 = vld [vmem:[%s205 + $0x34] sm:$0xf]
      %v229 = vld [vmem:[%s205 + $0x38] sm:$0xf]
      %v230 = vld [vmem:[%s205 + $0x3c] sm:$0xf]
      %v231 = vld [vmem:[%s205 + $0x40] sm:$0xf]
      %v232 = vld [vmem:[%s205 + $0x44] sm:$0xf]
      %v233 = vld [vmem:[%s205 + $0x48] sm:$0xf]
      %v234 = vld [vmem:[%s205 + $0x4c] sm:$0xf]
      %v235 = vld [vmem:[%s205 + $0x50] sm:$0xf]
      %v236 = vld [vmem:[%s205 + $0x54] sm:$0xf]
      %v237 = vld [vmem:[%s205 + $0x58] sm:$0xf]
      %v238 = vld [vmem:[%s205 + $0x5c] sm:$0xf]
      %v239 = vld [vmem:[%s205 + $0x60] sm:$0xf]
      %v240 = vld [vmem:[%s205 + $0x64] sm:$0xf]
      %v241 = vld [vmem:[%s205 + $0x68] sm:$0xf]
      %v242 = vld [vmem:[%s205 + $0x6c] sm:$0xf]
      %v243 = vld [vmem:[%s205 + $0x70] sm:$0xf]
      %v244 = vld [vmem:[%s205 + $0x74] sm:$0xf]
      %v245 = vld [vmem:[%s205 + $0x78] sm:$0xf]
      %v246 = vld [vmem:[%s205 + $0x7c] sm:$0xf]
      %v247 = vld [vmem:[%s2] sm:$0xf]
      %v248 = vld [vmem:[%s2 + $0x4] sm:$0xf]
      %v249 = vld [vmem:[%s2 + $0x8] sm:$0xf]
      %v250 = vld [vmem:[%s2 + $0xc] sm:$0x3]
      %v251 = vld [vmem:[%s3] sm:$0x1]
      %v252 = vlaneseq
      %v253 = vshrl.u32 %v252, 7
      %v254 = vsub.s32 0, %v253
      %v255 = vrot.slane %v251, %v254
      %v288 = vunpack.c.l.b16 %v215
      %v289 = vunpack.c.l.b16 %v216
      %v290 = vunpack.c.l.b16 %v217
      %v291 = vunpack.c.l.b16 %v218
      %v292 = vunpack.c.l.b16 %v219
      %v293 = vunpack.c.l.b16 %v220
      %v294 = vunpack.c.l.b16 %v221
      %v295 = vunpack.c.l.b16 %v222
      %v296 = vunpack.c.l.b16 %v223
      %v297 = vunpack.c.l.b16 %v224
      %v298 = vunpack.c.l.b16 %v225
      %v299 = vunpack.c.l.b16 %v226
      %v300 = vunpack.c.l.b16 %v227
      %v301 = vunpack.c.l.b16 %v228
      %v302 = vunpack.c.l.b16 %v229
      %v303 = vunpack.c.l.b16 %v230
      %v304 = vunpack.c.l.b16 %v231
      %v305 = vunpack.c.l.b16 %v232
      %v306 = vunpack.c.l.b16 %v233
      %v307 = vunpack.c.l.b16 %v234
      %v308 = vunpack.c.l.b16 %v235
      %v309 = vunpack.c.l.b16 %v236
      %v310 = vunpack.c.l.b16 %v237
      %v311 = vunpack.c.l.b16 %v238
      %v312 = vunpack.c.l.b16 %v239
      %v313 = vunpack.c.l.b16 %v240
      %v314 = vunpack.c.l.b16 %v241
      %v315 = vunpack.c.l.b16 %v242
      %v316 = vunpack.c.l.b16 %v243
      %v317 = vunpack.c.l.b16 %v244
      %v318 = vunpack.c.l.b16 %v245
      %v319 = vunpack.c.l.b16 %v246
      %v320 = vpack.c.b16 %v289, %v288
      %v321 = vpack.c.b16 %v291, %v290
      %v322 = vpack.c.b16 %v293, %v292
      %v323 = vpack.c.b16 %v295, %v294
      %v324 = vpack.c.b16 %v297, %v296
      %v325 = vpack.c.b16 %v299, %v298
      %v326 = vpack.c.b16 %v301, %v300
      %v327 = vpack.c.b16 %v303, %v302
      %v328 = vpack.c.b16 %v305, %v304
      %v329 = vpack.c.b16 %v307, %v306
      %v330 = vpack.c.b16 %v309, %v308
      %v331 = vpack.c.b16 %v311, %v310
      %v332 = vpack.c.b16 %v313, %v312
      %v333 = vpack.c.b16 %v315, %v314
      %v334 = vpack.c.b16 %v317, %v316
      %v335 = vpack.c.b16 %v319, %v318
      %v340 = vunpack.c.l.b16 %v247
      %v341 = vunpack.c.l.b16 %v248
      %v342 = vunpack.c.l.b16 %v249
      %v343 = vunpack.c.l.b16 %v250
      %v344 = vpack.c.b16 %v341, %v340
      %v345 = vpack.c.b16 %v343, %v342
      %vm347 = vcmask 220160
      %v349 = vsel %vm347, %v320, 0
      %v352 = vsel %vm347, %v321, 0
      %v355 = vsel %vm347, %v322, 0
      %v358 = vsel %vm347, %v323, 0
      %v361 = vsel %vm347, %v324, 0
      %v364 = vsel %vm347, %v325, 0
      %v367 = vsel %vm347, %v326, 0
      %v370 = vsel %vm347, %v327, 0
      %v373 = vsel %vm347, %v328, 0
      %v376 = vsel %vm347, %v329, 0
      %v379 = vsel %vm347, %v330, 0
      %v382 = vsel %vm347, %v331, 0
      %v385 = vsel %vm347, %v332, 0
      %v388 = vsel %vm347, %v333, 0
      %v391 = vsel %vm347, %v334, 0
      %v394 = vsel %vm347, %v335, 0
      %vm396 = vcmask 1044480
      %vm397 = vcmask 1045504
      %v398 = vsel %vm396, 4294967295, 65535
      %v399 = vsel %vm397, %v398, 0
      %v401 = vand.u32 %v345, %v399
      %403 = vmatprep.subr.bf16.mxu0 0
      %404 = vmatpush1.bf16.msra.mxu0 %v344
      %405 = vmatprep.subr.bf16.mxu0 0
      %406 = vmatpush1.bf16.msra.mxu0 %v401
      %407 = vmatprep.subr.bf16.mxu0 0
      %408 = vmatpush1.bf16.msra.mxu0 0
      %409 = vmatprep.subr.bf16.mxu0 0
      %410 = vmatpush1.bf16.msra.mxu0 0
      %411 = vmatprep.subr.bf16.mxu0 0
      %412 = vmatpush1.bf16.msra.mxu0 0
      %413 = vmatprep.subr.bf16.mxu0 0
      %414 = vmatpush1.bf16.msra.mxu0 0
      %415 = vmatprep.subr.bf16.mxu0 0
      %416 = vmatpush1.bf16.msra.mxu0 0
      %417 = vmatprep.subr.bf16.mxu0 0
      %418 = vmatpush1.bf16.msra.mxu0 0
      %419 = vmatprep.subr.bf16.mxu0 0
      %420 = vmatpush1.bf16.msra.mxu0 0
      %421 = vmatprep.subr.bf16.mxu0 0
      %422 = vmatpush1.bf16.msra.mxu0 0
      %423 = vmatprep.subr.bf16.mxu0 0
      %424 = vmatpush1.bf16.msra.mxu0 0
      %425 = vmatprep.subr.bf16.mxu0 0
      %426 = vmatpush1.bf16.msra.mxu0 0
      %427 = vmatprep.subr.bf16.mxu0 0
      %428 = vmatpush1.bf16.msra.mxu0 0
      %429 = vmatprep.subr.bf16.mxu0 0
      %430 = vmatpush1.bf16.msra.mxu0 0
      %431 = vmatprep.subr.bf16.mxu0 0
      %432 = vmatpush1.bf16.msra.mxu0 0
      %433 = vmatprep.subr.bf16.mxu0 0
      %434 = vmatpush1.bf16.msra.mxu0 0
      %435 = vmatprep.mubr.bf16.mxu0 0
      %436 = vmatmul.mubr.bf16.gmra.mrb[0].mxu0 %v349
      %v437 = vpop.f32.mrb[0].mxu0
      %v438 = vadd.f32 %v255, %v437
      %v439 = vpop.f32.mrb[0].mxu0
      %v440 = vpop.f32.mrb[0].mxu0
      %v441 = vadd.f32 %v255, %v440
      %v442 = vpop.f32.mrb[0].mxu0
      %443 = vmatprep.mubr.bf16.mxu0 0
      %444 = vmatmul.mubr.bf16.gmra.mrb[0].mxu0 %v352
      %v445 = vpop.f32.mrb[0].mxu0
      %v446 = vadd.f32 %v255, %v445
      %v447 = vpop.f32.mrb[0].mxu0
      %v448 = vpop.f32.mrb[0].mxu0
      %v449 = vadd.f32 %v255, %v448
      %v450 = vpop.f32.mrb[0].mxu0
      %451 = vmatprep.mubr.bf16.mxu0 0
      %452 = vmatmul.mubr.bf16.gmra.mrb[0].mxu0 %v355
      %v453 = vpop.f32.mrb[0].mxu0
      %v454 = vadd.f32 %v255, %v453
      %v455 = vpop.f32.mrb[0].mxu0
      %v456 = vpop.f32.mrb[0].mxu0
      %v457 = vadd.f32 %v255, %v456
      %v458 = vpop.f32.mrb[0].mxu0
      %459 = vmatprep.mubr.bf16.mxu0 0
      %460 = vmatmul.mubr.bf16.gmra.mrb[0].mxu0 %v358
      %v461 = vpop.f32.mrb[0].mxu0
      %v462 = vadd.f32 %v255, %v461
      %v463 = vpop.f32.mrb[0].mxu0
      %v464 = vpop.f32.mrb[0].mxu0
      %v465 = vadd.f32 %v255, %v464
      %v466 = vpop.f32.mrb[0].mxu0
      %467 = vmatprep.mubr.bf16.mxu0 0
      %468 = vmatmul.mubr.bf16.gmra.mrb[0].mxu0 %v361
      %v469 = vpop.f32.mrb[0].mxu0
      %v470 = vadd.f32 %v255, %v469
      %v471 = vpop.f32.mrb[0].mxu0
      %v472 = vpop.f32.mrb[0].mxu0
      %v473 = vadd.f32 %v255, %v472
      %v474 = vpop.f32.mrb[0].mxu0
      %475 = vmatprep.mubr.bf16.mxu0 0
      %476 = vmatmul.mubr.bf16.gmra.mrb[0].mxu0 %v364
      %v477 = vpop.f32.mrb[0].mxu0
      %v478 = vadd.f32 %v255, %v477
      %v479 = vpop.f32.mrb[0].mxu0
      %v480 = vpop.f32.mrb[0].mxu0
      %v481 = vadd.f32 %v255, %v480
      %v482 = vpop.f32.mrb[0].mxu0
      %483 = vmatprep.mubr.bf16.mxu0 0
      %484 = vmatmul.mubr.bf16.gmra.mrb[0].mxu0 %v367
      %v485 = vpop.f32.mrb[0].mxu0
      %v486 = vadd.f32 %v255, %v485
      %v487 = vpop.f32.mrb[0].mxu0
      %v488 = vpop.f32.mrb[0].mxu0
      %v489 = vadd.f32 %v255, %v488
      %v490 = vpop.f32.mrb[0].mxu0
      %491 = vmatprep.mubr.bf16.mxu0 0
      %492 = vmatmul.mubr.bf16.gmra.mrb[0].mxu0 %v370
      %v493 = vpop.f32.mrb[0].mxu0
      %v494 = vadd.f32 %v255, %v493
      %v495 = vpop.f32.mrb[0].mxu0
      %v496 = vpop.f32.mrb[0].mxu0
      %v497 = vadd.f32 %v255, %v496
      %v498 = vpop.f32.mrb[0].mxu0
      %499 = vmatprep.mubr.bf16.mxu0 0
      %500 = vmatmul.mubr.bf16.gmra.mrb[0].mxu0 %v373
      %v501 = vpop.f32.mrb[0].mxu0
      %v502 = vadd.f32 %v255, %v501
      %v503 = vpop.f32.mrb[0].mxu0
      %v504 = vpop.f32.mrb[0].mxu0
      %v505 = vadd.f32 %v255, %v504
      %v506 = vpop.f32.mrb[0].mxu0
      %507 = vmatprep.mubr.bf16.mxu0 0
      %508 = vmatmul.mubr.bf16.gmra.mrb[0].mxu0 %v376
      %v509 = vpop.f32.mrb[0].mxu0
      %v510 = vadd.f32 %v255, %v509
      %v511 = vpop.f32.mrb[0].mxu0
      %v512 = vpop.f32.mrb[0].mxu0
      %v513 = vadd.f32 %v255, %v512
      %v514 = vpop.f32.mrb[0].mxu0
      %515 = vmatprep.mubr.bf16.mxu0 0
      %516 = vmatmul.mubr.bf16.gmra.mrb[0].mxu0 %v379
      %v517 = vpop.f32.mrb[0].mxu0
      %v518 = vadd.f32 %v255, %v517
      %v519 = vpop.f32.mrb[0].mxu0
      %v520 = vpop.f32.mrb[0].mxu0
      %v521 = vadd.f32 %v255, %v520
      %v522 = vpop.f32.mrb[0].mxu0
      %523 = vmatprep.mubr.bf16.mxu0 0
      %524 = vmatmul.mubr.bf16.gmra.mrb[0].mxu0 %v382
      %v525 = vpop.f32.mrb[0].mxu0
      %v526 = vadd.f32 %v255, %v525
      %v527 = vpop.f32.mrb[0].mxu0
      %v528 = vpop.f32.mrb[0].mxu0
      %v529 = vadd.f32 %v255, %v528
      %v530 = vpop.f32.mrb[0].mxu0
      %531 = vmatprep.mubr.bf16.mxu0 0
      %532 = vmatmul.mubr.bf16.gmra.mrb[0].mxu0 %v385
      %v533 = vpop.f32.mrb[0].mxu0
      %v534 = vadd.f32 %v255, %v533
      %v535 = vpop.f32.mrb[0].mxu0
      %v536 = vpop.f32.mrb[0].mxu0
      %v537 = vadd.f32 %v255, %v536
      %v538 = vpop.f32.mrb[0].mxu0
      %539 = vmatprep.mubr.bf16.mxu0 0
      %540 = vmatmul.mubr.bf16.gmra.mrb[0].mxu0 %v388
      %v541 = vpop.f32.mrb[0].mxu0
      %v542 = vadd.f32 %v255, %v541
      %v543 = vpop.f32.mrb[0].mxu0
      %v544 = vpop.f32.mrb[0].mxu0
      %v545 = vadd.f32 %v255, %v544
      %v546 = vpop.f32.mrb[0].mxu0
      %547 = vmatprep.mubr.bf16.mxu0 0
      %548 = vmatmul.mubr.bf16.gmra.mrb[0].mxu0 %v391
      %v549 = vpop.f32.mrb[0].mxu0
      %v550 = vadd.f32 %v255, %v549
      %v551 = vpop.f32.mrb[0].mxu0
      %v552 = vpop.f32.mrb[0].mxu0
      %v553 = vadd.f32 %v255, %v552
      %v554 = vpop.f32.mrb[0].mxu0
      %555 = vmatprep.mubr.bf16.mxu0 0
      %556 = vmatmul.mubr.bf16.gmra.mrb[0].mxu0 %v394
      %v557 = vpop.f32.mrb[0].mxu0
      %v558 = vadd.f32 %v255, %v557
      %v559 = vpop.f32.mrb[0].mxu0
      %v560 = vpop.f32.mrb[0].mxu0
      %v561 = vadd.f32 %v255, %v560
      %v562 = vpop.f32.mrb[0].mxu0
      %563 = vdwg.mxu0
      %v564 = vmax.f32 %v438, 0.0
      %v565 = vmax.f32 %v441, 0.0
      %v566 = vmax.f32 %v446, 0.0
      %v567 = vmax.f32 %v449, 0.0
      %v568 = vmax.f32 %v454, 0.0
      %v569 = vmax.f32 %v457, 0.0
      %v570 = vmax.f32 %v462, 0.0
      %v571 = vmax.f32 %v465, 0.0
      %v572 = vmax.f32 %v470, 0.0
      %v573 = vmax.f32 %v473, 0.0
      %v574 = vmax.f32 %v478, 0.0
      %v575 = vmax.f32 %v481, 0.0
      %v576 = vmax.f32 %v486, 0.0
      %v577 = vmax.f32 %v489, 0.0
      %v578 = vmax.f32 %v494, 0.0
      %v579 = vmax.f32 %v497, 0.0
      %v580 = vmax.f32 %v502, 0.0
      %v581 = vmax.f32 %v505, 0.0
      %v582 = vmax.f32 %v510, 0.0
      %v583 = vmax.f32 %v513, 0.0
      %v584 = vmax.f32 %v518, 0.0
      %v585 = vmax.f32 %v521, 0.0
      %v586 = vmax.f32 %v526, 0.0
      %v587 = vmax.f32 %v529, 0.0
      %v588 = vmax.f32 %v534, 0.0
      %v589 = vmax.f32 %v537, 0.0
      %v590 = vmax.f32 %v542, 0.0
      %v591 = vmax.f32 %v545, 0.0
      %v592 = vmax.f32 %v550, 0.0
      %v593 = vmax.f32 %v553, 0.0
      %v594 = vmax.f32 %v558, 0.0
      %v595 = vmax.f32 %v561, 0.0
      %v628 = vcombine.high %v564, %v564
      %v630 = vunpack.c.l.s4 1983009808
      %v631 = vunpack.c.0.s8 %v630
      %v632 = vlaneseq
      %v633 = vshrl.u32 %v632, 7
      %v634 = vsub.s32 %v631, %v633
      %v635 = vrot.slane %v564, %v634
      %v637 = vunpack.c.l.s4 1983009808
      %v638 = vunpack.c.0.s8 %v637
      %v639 = vlaneseq
      %v640 = vshrl.u32 %v639, 7
      %v641 = vsub.s32 %v638, %v640
      %v642 = vrot.slane %v628, %v641
      %v643 = vcombine.high %v635, %v635
      %v644 = vcombine.high %v642, %v642
      %v645 = vcombine.high %v565, %v565
      %v647 = vunpack.c.l.s4 1983009808
      %v648 = vunpack.c.0.s8 %v647
      %v649 = vlaneseq
      %v650 = vshrl.u32 %v649, 7
      %v651 = vsub.s32 %v648, %v650
      %v652 = vrot.slane %v565, %v651
      %v654 = vunpack.c.l.s4 1983009808
      %v655 = vunpack.c.0.s8 %v654
      %v656 = vlaneseq
      %v657 = vshrl.u32 %v656, 7
      %v658 = vsub.s32 %v655, %v657
      %v659 = vrot.slane %v645, %v658
      %v660 = vcombine.high %v652, %v652
      %v661 = vcombine.high %v659, %v659
      %v662 = vcombine.high %v566, %v566
      %v664 = vunpack.c.l.s4 1983009808
      %v665 = vunpack.c.0.s8 %v664
      %v666 = vlaneseq
      %v667 = vshrl.u32 %v666, 7
      %v668 = vsub.s32 %v665, %v667
      %v669 = vrot.slane %v566, %v668
      %v671 = vunpack.c.l.s4 1983009808
      %v672 = vunpack.c.0.s8 %v671
      %v673 = vlaneseq
      %v674 = vshrl.u32 %v673, 7
      %v675 = vsub.s32 %v672, %v674
      %v676 = vrot.slane %v662, %v675
      %v677 = vcombine.high %v669, %v669
      %v678 = vcombine.high %v676, %v676
      %v679 = vcombine.high %v567, %v567
      %v681 = vunpack.c.l.s4 1983009808
      %v682 = vunpack.c.0.s8 %v681
      %v683 = vlaneseq
      %v684 = vshrl.u32 %v683, 7
      %v685 = vsub.s32 %v682, %v684
      %v686 = vrot.slane %v567, %v685
      %v688 = vunpack.c.l.s4 1983009808
      %v689 = vunpack.c.0.s8 %v688
      %v690 = vlaneseq
      %v691 = vshrl.u32 %v690, 7
      %v692 = vsub.s32 %v689, %v691
      %v693 = vrot.slane %v679, %v692
      %v694 = vcombine.high %v686, %v686
      %v695 = vcombine.high %v693, %v693
      %v696 = vcombine.high %v568, %v568
      %v698 = vunpack.c.l.s4 1983009808
      %v699 = vunpack.c.0.s8 %v698
      %v700 = vlaneseq
      %v701 = vshrl.u32 %v700, 7
      %v702 = vsub.s32 %v699, %v701
      %v703 = vrot.slane %v568, %v702
      %v705 = vunpack.c.l.s4 1983009808
      %v706 = vunpack.c.0.s8 %v705
      %v707 = vlaneseq
      %v708 = vshrl.u32 %v707, 7
      %v709 = vsub.s32 %v706, %v708
      %v710 = vrot.slane %v696, %v709
      %v711 = vcombine.high %v703, %v703
      %v712 = vcombine.high %v710, %v710
      %v713 = vcombine.high %v569, %v569
      %v715 = vunpack.c.l.s4 1983009808
      %v716 = vunpack.c.0.s8 %v715
      %v717 = vlaneseq
      %v718 = vshrl.u32 %v717, 7
      %v719 = vsub.s32 %v716, %v718
      %v720 = vrot.slane %v569, %v719
      %v722 = vunpack.c.l.s4 1983009808
      %v723 = vunpack.c.0.s8 %v722
      %v724 = vlaneseq
      %v725 = vshrl.u32 %v724, 7
      %v726 = vsub.s32 %v723, %v725
      %v727 = vrot.slane %v713, %v726
      %v728 = vcombine.high %v720, %v720
      %v729 = vcombine.high %v727, %v727
      %v730 = vcombine.high %v570, %v570
      %v732 = vunpack.c.l.s4 1983009808
      %v733 = vunpack.c.0.s8 %v732
      %v734 = vlaneseq
      %v735 = vshrl.u32 %v734, 7
      %v736 = vsub.s32 %v733, %v735
      %v737 = vrot.slane %v570, %v736
      %v739 = vunpack.c.l.s4 1983009808
      %v740 = vunpack.c.0.s8 %v739
      %v741 = vlaneseq
      %v742 = vshrl.u32 %v741, 7
      %v743 = vsub.s32 %v740, %v742
      %v744 = vrot.slane %v730, %v743
      %v745 = vcombine.high %v737, %v737
      %v746 = vcombine.high %v744, %v744
      %v747 = vcombine.high %v571, %v571
      %v749 = vunpack.c.l.s4 1983009808
      %v750 = vunpack.c.0.s8 %v749
      %v751 = vlaneseq
      %v752 = vshrl.u32 %v751, 7
      %v753 = vsub.s32 %v750, %v752
      %v754 = vrot.slane %v571, %v753
      %v756 = vunpack.c.l.s4 1983009808
      %v757 = vunpack.c.0.s8 %v756
      %v758 = vlaneseq
      %v759 = vshrl.u32 %v758, 7
      %v760 = vsub.s32 %v757, %v759
      %v761 = vrot.slane %v747, %v760
      %v762 = vcombine.high %v754, %v754
      %v763 = vcombine.high %v761, %v761
      %v764 = vcombine.high %v572, %v572
      %v766 = vunpack.c.l.s4 1983009808
      %v767 = vunpack.c.0.s8 %v766
      %v768 = vlaneseq
      %v769 = vshrl.u32 %v768, 7
      %v770 = vsub.s32 %v767, %v769
      %v771 = vrot.slane %v572, %v770
      %v773 = vunpack.c.l.s4 1983009808
      %v774 = vunpack.c.0.s8 %v773
      %v775 = vlaneseq
      %v776 = vshrl.u32 %v775, 7
      %v777 = vsub.s32 %v774, %v776
      %v778 = vrot.slane %v764, %v777
      %v779 = vcombine.high %v771, %v771
      %v780 = vcombine.high %v778, %v778
      %v781 = vcombine.high %v573, %v573
      %v783 = vunpack.c.l.s4 1983009808
      %v784 = vunpack.c.0.s8 %v783
      %v785 = vlaneseq
      %v786 = vshrl.u32 %v785, 7
      %v787 = vsub.s32 %v784, %v786
      %v788 = vrot.slane %v573, %v787
      %v790 = vunpack.c.l.s4 1983009808
      %v791 = vunpack.c.0.s8 %v790
      %v792 = vlaneseq
      %v793 = vshrl.u32 %v792, 7
      %v794 = vsub.s32 %v791, %v793
      %v795 = vrot.slane %v781, %v794
      %v796 = vcombine.high %v788, %v788
      %v797 = vcombine.high %v795, %v795
      %v798 = vcombine.high %v574, %v574
      %v800 = vunpack.c.l.s4 1983009808
      %v801 = vunpack.c.0.s8 %v800
      %v802 = vlaneseq
      %v803 = vshrl.u32 %v802, 7
      %v804 = vsub.s32 %v801, %v803
      %v805 = vrot.slane %v574, %v804
      %v807 = vunpack.c.l.s4 1983009808
      %v808 = vunpack.c.0.s8 %v807
      %v809 = vlaneseq
      %v810 = vshrl.u32 %v809, 7
      %v811 = vsub.s32 %v808, %v810
      %v812 = vrot.slane %v798, %v811
      %v813 = vcombine.high %v805, %v805
      %v814 = vcombine.high %v812, %v812
      %v815 = vcombine.high %v575, %v575
      %v817 = vunpack.c.l.s4 1983009808
      %v818 = vunpack.c.0.s8 %v817
      %v819 = vlaneseq
      %v820 = vshrl.u32 %v819, 7
      %v821 = vsub.s32 %v818, %v820
      %v822 = vrot.slane %v575, %v821
      %v824 = vunpack.c.l.s4 1983009808
      %v825 = vunpack.c.0.s8 %v824
      %v826 = vlaneseq
      %v827 = vshrl.u32 %v826, 7
      %v828 = vsub.s32 %v825, %v827
      %v829 = vrot.slane %v815, %v828
      %v830 = vcombine.high %v822, %v822
      %v831 = vcombine.high %v829, %v829
      %v832 = vcombine.high %v576, %v576
      %v834 = vunpack.c.l.s4 1983009808
      %v835 = vunpack.c.0.s8 %v834
      %v836 = vlaneseq
      %v837 = vshrl.u32 %v836, 7
      %v838 = vsub.s32 %v835, %v837
      %v839 = vrot.slane %v576, %v838
      %v841 = vunpack.c.l.s4 1983009808
      %v842 = vunpack.c.0.s8 %v841
      %v843 = vlaneseq
      %v844 = vshrl.u32 %v843, 7
      %v845 = vsub.s32 %v842, %v844
      %v846 = vrot.slane %v832, %v845
      %v847 = vcombine.high %v839, %v839
      %v848 = vcombine.high %v846, %v846
      %v849 = vcombine.high %v577, %v577
      %v851 = vunpack.c.l.s4 1983009808
      %v852 = vunpack.c.0.s8 %v851
      %v853 = vlaneseq
      %v854 = vshrl.u32 %v853, 7
      %v855 = vsub.s32 %v852, %v854
      %v856 = vrot.slane %v577, %v855
      %v858 = vunpack.c.l.s4 1983009808
      %v859 = vunpack.c.0.s8 %v858
      %v860 = vlaneseq
      %v861 = vshrl.u32 %v860, 7
      %v862 = vsub.s32 %v859, %v861
      %v863 = vrot.slane %v849, %v862
      %v864 = vcombine.high %v856, %v856
      %v865 = vcombine.high %v863, %v863
      %v866 = vcombine.high %v578, %v578
      %v868 = vunpack.c.l.s4 1983009808
      %v869 = vunpack.c.0.s8 %v868
      %v870 = vlaneseq
      %v871 = vshrl.u32 %v870, 7
      %v872 = vsub.s32 %v869, %v871
      %v873 = vrot.slane %v578, %v872
      %v875 = vunpack.c.l.s4 1983009808
      %v876 = vunpack.c.0.s8 %v875
      %v877 = vlaneseq
      %v878 = vshrl.u32 %v877, 7
      %v879 = vsub.s32 %v876, %v878
      %v880 = vrot.slane %v866, %v879
      %v881 = vcombine.high %v873, %v873
      %v882 = vcombine.high %v880, %v880
      %v883 = vcombine.high %v579, %v579
      %v885 = vunpack.c.l.s4 1983009808
      %v886 = vunpack.c.0.s8 %v885
      %v887 = vlaneseq
      %v888 = vshrl.u32 %v887, 7
      %v889 = vsub.s32 %v886, %v888
      %v890 = vrot.slane %v579, %v889
      %v892 = vunpack.c.l.s4 1983009808
      %v893 = vunpack.c.0.s8 %v892
      %v894 = vlaneseq
      %v895 = vshrl.u32 %v894, 7
      %v896 = vsub.s32 %v893, %v895
      %v897 = vrot.slane %v883, %v896
      %v898 = vcombine.high %v890, %v890
      %v899 = vcombine.high %v897, %v897
      %v900 = vcombine.high %v580, %v580
      %v902 = vunpack.c.l.s4 1983009808
      %v903 = vunpack.c.0.s8 %v902
      %v904 = vlaneseq
      %v905 = vshrl.u32 %v904, 7
      %v906 = vsub.s32 %v903, %v905
      %v907 = vrot.slane %v580, %v906
      %v909 = vunpack.c.l.s4 1983009808
      %v910 = vunpack.c.0.s8 %v909
      %v911 = vlaneseq
      %v912 = vshrl.u32 %v911, 7
      %v913 = vsub.s32 %v910, %v912
      %v914 = vrot.slane %v900, %v913
      %v915 = vcombine.high %v907, %v907
      %v916 = vcombine.high %v914, %v914
      %v917 = vcombine.high %v581, %v581
      %v919 = vunpack.c.l.s4 1983009808
      %v920 = vunpack.c.0.s8 %v919
      %v921 = vlaneseq
      %v922 = vshrl.u32 %v921, 7
      %v923 = vsub.s32 %v920, %v922
      %v924 = vrot.slane %v581, %v923
      %v926 = vunpack.c.l.s4 1983009808
      %v927 = vunpack.c.0.s8 %v926
      %v928 = vlaneseq
      %v929 = vshrl.u32 %v928, 7
      %v930 = vsub.s32 %v927, %v929
      %v931 = vrot.slane %v917, %v930
      %v932 = vcombine.high %v924, %v924
      %v933 = vcombine.high %v931, %v931
      %v934 = vcombine.high %v582, %v582
      %v936 = vunpack.c.l.s4 1983009808
      %v937 = vunpack.c.0.s8 %v936
      %v938 = vlaneseq
      %v939 = vshrl.u32 %v938, 7
      %v940 = vsub.s32 %v937, %v939
      %v941 = vrot.slane %v582, %v940
      %v943 = vunpack.c.l.s4 1983009808
      %v944 = vunpack.c.0.s8 %v943
      %v945 = vlaneseq
      %v946 = vshrl.u32 %v945, 7
      %v947 = vsub.s32 %v944, %v946
      %v948 = vrot.slane %v934, %v947
      %v949 = vcombine.high %v941, %v941
      %v950 = vcombine.high %v948, %v948
      %v951 = vcombine.high %v583, %v583
      %v953 = vunpack.c.l.s4 1983009808
      %v954 = vunpack.c.0.s8 %v953
      %v955 = vlaneseq
      %v956 = vshrl.u32 %v955, 7
      %v957 = vsub.s32 %v954, %v956
      %v958 = vrot.slane %v583, %v957
      %v960 = vunpack.c.l.s4 1983009808
      %v961 = vunpack.c.0.s8 %v960
      %v962 = vlaneseq
      %v963 = vshrl.u32 %v962, 7
      %v964 = vsub.s32 %v961, %v963
      %v965 = vrot.slane %v951, %v964
      %v966 = vcombine.high %v958, %v958
      %v967 = vcombine.high %v965, %v965
      %v968 = vcombine.high %v584, %v584
      %v970 = vunpack.c.l.s4 1983009808
      %v971 = vunpack.c.0.s8 %v970
      %v972 = vlaneseq
      %v973 = vshrl.u32 %v972, 7
      %v974 = vsub.s32 %v971, %v973
      %v975 = vrot.slane %v584, %v974
      %v977 = vunpack.c.l.s4 1983009808
      %v978 = vunpack.c.0.s8 %v977
      %v979 = vlaneseq
      %v980 = vshrl.u32 %v979, 7
      %v981 = vsub.s32 %v978, %v980
      %v982 = vrot.slane %v968, %v981
      %v983 = vcombine.high %v975, %v975
      %v984 = vcombine.high %v982, %v982
      %v985 = vcombine.high %v585, %v585
      %v987 = vunpack.c.l.s4 1983009808
      %v988 = vunpack.c.0.s8 %v987
      %v989 = vlaneseq
      %v990 = vshrl.u32 %v989, 7
      %v991 = vsub.s32 %v988, %v990
      %v992 = vrot.slane %v585, %v991
      %v994 = vunpack.c.l.s4 1983009808
      %v995 = vunpack.c.0.s8 %v994
      %v996 = vlaneseq
      %v997 = vshrl.u32 %v996, 7
      %v998 = vsub.s32 %v995, %v997
      %v999 = vrot.slane %v985, %v998
      %v1000 = vcombine.high %v992, %v992
      %v1001 = vcombine.high %v999, %v999
      %v1002 = vcombine.high %v586, %v586
      %v1004 = vunpack.c.l.s4 1983009808
      %v1005 = vunpack.c.0.s8 %v1004
      %v1006 = vlaneseq
      %v1007 = vshrl.u32 %v1006, 7
      %v1008 = vsub.s32 %v1005, %v1007
      %v1009 = vrot.slane %v586, %v1008
      %v1011 = vunpack.c.l.s4 1983009808
      %v1012 = vunpack.c.0.s8 %v1011
      %v1013 = vlaneseq
      %v1014 = vshrl.u32 %v1013, 7
      %v1015 = vsub.s32 %v1012, %v1014
      %v1016 = vrot.slane %v1002, %v1015
      %v1017 = vcombine.high %v1009, %v1009
      %v1018 = vcombine.high %v1016, %v1016
      %v1019 = vcombine.high %v587, %v587
      %v1021 = vunpack.c.l.s4 1983009808
      %v1022 = vunpack.c.0.s8 %v1021
      %v1023 = vlaneseq
      %v1024 = vshrl.u32 %v1023, 7
      %v1025 = vsub.s32 %v1022, %v1024
      %v1026 = vrot.slane %v587, %v1025
      %v1028 = vunpack.c.l.s4 1983009808
      %v1029 = vunpack.c.0.s8 %v1028
      %v1030 = vlaneseq
      %v1031 = vshrl.u32 %v1030, 7
      %v1032 = vsub.s32 %v1029, %v1031
      %v1033 = vrot.slane %v1019, %v1032
      %v1034 = vcombine.high %v1026, %v1026
      %v1035 = vcombine.high %v1033, %v1033
      %v1036 = vcombine.high %v588, %v588
      %v1038 = vunpack.c.l.s4 1983009808
      %v1039 = vunpack.c.0.s8 %v1038
      %v1040 = vlaneseq
      %v1041 = vshrl.u32 %v1040, 7
      %v1042 = vsub.s32 %v1039, %v1041
      %v1043 = vrot.slane %v588, %v1042
      %v1045 = vunpack.c.l.s4 1983009808
      %v1046 = vunpack.c.0.s8 %v1045
      %v1047 = vlaneseq
      %v1048 = vshrl.u32 %v1047, 7
      %v1049 = vsub.s32 %v1046, %v1048
      %v1050 = vrot.slane %v1036, %v1049
      %v1051 = vcombine.high %v1043, %v1043
      %v1052 = vcombine.high %v1050, %v1050
      %v1053 = vcombine.high %v589, %v589
      %v1055 = vunpack.c.l.s4 1983009808
      %v1056 = vunpack.c.0.s8 %v1055
      %v1057 = vlaneseq
      %v1058 = vshrl.u32 %v1057, 7
      %v1059 = vsub.s32 %v1056, %v1058
      %v1060 = vrot.slane %v589, %v1059
      %v1062 = vunpack.c.l.s4 1983009808
      %v1063 = vunpack.c.0.s8 %v1062
      %v1064 = vlaneseq
      %v1065 = vshrl.u32 %v1064, 7
      %v1066 = vsub.s32 %v1063, %v1065
      %v1067 = vrot.slane %v1053, %v1066
      %v1068 = vcombine.high %v1060, %v1060
      %v1069 = vcombine.high %v1067, %v1067
      %v1070 = vcombine.high %v590, %v590
      %v1072 = vunpack.c.l.s4 1983009808
      %v1073 = vunpack.c.0.s8 %v1072
      %v1074 = vlaneseq
      %v1075 = vshrl.u32 %v1074, 7
      %v1076 = vsub.s32 %v1073, %v1075
      %v1077 = vrot.slane %v590, %v1076
      %v1079 = vunpack.c.l.s4 1983009808
      %v1080 = vunpack.c.0.s8 %v1079
      %v1081 = vlaneseq
      %v1082 = vshrl.u32 %v1081, 7
      %v1083 = vsub.s32 %v1080, %v1082
      %v1084 = vrot.slane %v1070, %v1083
      %v1085 = vcombine.high %v1077, %v1077
      %v1086 = vcombine.high %v1084, %v1084
      %v1087 = vcombine.high %v591, %v591
      %v1089 = vunpack.c.l.s4 1983009808
      %v1090 = vunpack.c.0.s8 %v1089
      %v1091 = vlaneseq
      %v1092 = vshrl.u32 %v1091, 7
      %v1093 = vsub.s32 %v1090, %v1092
      %v1094 = vrot.slane %v591, %v1093
      %v1096 = vunpack.c.l.s4 1983009808
      %v1097 = vunpack.c.0.s8 %v1096
      %v1098 = vlaneseq
      %v1099 = vshrl.u32 %v1098, 7
      %v1100 = vsub.s32 %v1097, %v1099
      %v1101 = vrot.slane %v1087, %v1100
      %v1102 = vcombine.high %v1094, %v1094
      %v1103 = vcombine.high %v1101, %v1101
      %v1104 = vcombine.high %v592, %v592
      %v1106 = vunpack.c.l.s4 1983009808
      %v1107 = vunpack.c.0.s8 %v1106
      %v1108 = vlaneseq
      %v1109 = vshrl.u32 %v1108, 7
      %v1110 = vsub.s32 %v1107, %v1109
      %v1111 = vrot.slane %v592, %v1110
      %v1113 = vunpack.c.l.s4 1983009808
      %v1114 = vunpack.c.0.s8 %v1113
      %v1115 = vlaneseq
      %v1116 = vshrl.u32 %v1115, 7
      %v1117 = vsub.s32 %v1114, %v1116
      %v1118 = vrot.slane %v1104, %v1117
      %v1119 = vcombine.high %v1111, %v1111
      %v1120 = vcombine.high %v1118, %v1118
      %v1121 = vcombine.high %v593, %v593
      %v1123 = vunpack.c.l.s4 1983009808
      %v1124 = vunpack.c.0.s8 %v1123
      %v1125 = vlaneseq
      %v1126 = vshrl.u32 %v1125, 7
      %v1127 = vsub.s32 %v1124, %v1126
      %v1128 = vrot.slane %v593, %v1127
      %v1130 = vunpack.c.l.s4 1983009808
      %v1131 = vunpack.c.0.s8 %v1130
      %v1132 = vlaneseq
      %v1133 = vshrl.u32 %v1132, 7
      %v1134 = vsub.s32 %v1131, %v1133
      %v1135 = vrot.slane %v1121, %v1134
      %v1136 = vcombine.high %v1128, %v1128
      %v1137 = vcombine.high %v1135, %v1135
      %v1138 = vcombine.high %v594, %v594
      %v1140 = vunpack.c.l.s4 1983009808
      %v1141 = vunpack.c.0.s8 %v1140
      %v1142 = vlaneseq
      %v1143 = vshrl.u32 %v1142, 7
      %v1144 = vsub.s32 %v1141, %v1143
      %v1145 = vrot.slane %v594, %v1144
      %v1147 = vunpack.c.l.s4 1983009808
      %v1148 = vunpack.c.0.s8 %v1147
      %v1149 = vlaneseq
      %v1150 = vshrl.u32 %v1149, 7
      %v1151 = vsub.s32 %v1148, %v1150
      %v1152 = vrot.slane %v1138, %v1151
      %v1153 = vcombine.high %v1145, %v1145
      %v1154 = vcombine.high %v1152, %v1152
      %v1155 = vcombine.high %v595, %v595
      %v1157 = vunpack.c.l.s4 1983009808
      %v1158 = vunpack.c.0.s8 %v1157
      %v1159 = vlaneseq
      %v1160 = vshrl.u32 %v1159, 7
      %v1161 = vsub.s32 %v1158, %v1160
      %v1162 = vrot.slane %v595, %v1161
      %v1164 = vunpack.c.l.s4 1983009808
      %v1165 = vunpack.c.0.s8 %v1164
      %v1166 = vlaneseq
      %v1167 = vshrl.u32 %v1166, 7
      %v1168 = vsub.s32 %v1165, %v1167
      %v1169 = vrot.slane %v1155, %v1168
      %v1170 = vcombine.high %v1162, %v1162
      %v1171 = vcombine.high %v1169, %v1169
      %v1300 = vrot.slane %v635, 7
      %v1301 = vrot.slane %v1300, 2
      %v1302 = vrot.slane %v643, 7
      %v1303 = vrot.slane %v1302, 2
      %v1304 = vrot.slane %v642, 7
      %v1305 = vrot.slane %v1304, 2
      %v1306 = vrot.slane %v644, 7
      %v1307 = vrot.slane %v1306, 2
      %v1308 = vrot.slane %v652, 7
      %v1309 = vrot.slane %v1308, 2
      %v1310 = vrot.slane %v660, 7
      %v1311 = vrot.slane %v1310, 2
      %v1312 = vrot.slane %v659, 7
      %v1313 = vrot.slane %v1312, 2
      %v1314 = vrot.slane %v661, 7
      %v1315 = vrot.slane %v1314, 2
      %v1316 = vrot.slane %v669, 7
      %v1317 = vrot.slane %v1316, 2
      %v1318 = vrot.slane %v677, 7
      %v1319 = vrot.slane %v1318, 2
      %v1320 = vrot.slane %v676, 7
      %v1321 = vrot.slane %v1320, 2
      %v1322 = vrot.slane %v678, 7
      %v1323 = vrot.slane %v1322, 2
      %v1324 = vrot.slane %v686, 7
      %v1325 = vrot.slane %v1324, 2
      %v1326 = vrot.slane %v694, 7
      %v1327 = vrot.slane %v1326, 2
      %v1328 = vrot.slane %v693, 7
      %v1329 = vrot.slane %v1328, 2
      %v1330 = vrot.slane %v695, 7
      %v1331 = vrot.slane %v1330, 2
      %v1332 = vrot.slane %v703, 7
      %v1333 = vrot.slane %v1332, 2
      %v1334 = vrot.slane %v711, 7
      %v1335 = vrot.slane %v1334, 2
      %v1336 = vrot.slane %v710, 7
      %v1337 = vrot.slane %v1336, 2
      %v1338 = vrot.slane %v712, 7
      %v1339 = vrot.slane %v1338, 2
      %v1340 = vrot.slane %v720, 7
      %v1341 = vrot.slane %v1340, 2
      %v1342 = vrot.slane %v728, 7
      %v1343 = vrot.slane %v1342, 2
      %v1344 = vrot.slane %v727, 7
      %v1345 = vrot.slane %v1344, 2
      %v1346 = vrot.slane %v729, 7
      %v1347 = vrot.slane %v1346, 2
      %v1348 = vrot.slane %v737, 7
      %v1349 = vrot.slane %v1348, 2
      %v1350 = vrot.slane %v745, 7
      %v1351 = vrot.slane %v1350, 2
      %v1352 = vrot.slane %v744, 7
      %v1353 = vrot.slane %v1352, 2
      %v1354 = vrot.slane %v746, 7
      %v1355 = vrot.slane %v1354, 2
      %v1356 = vrot.slane %v754, 7
      %v1357 = vrot.slane %v1356, 2
      %v1358 = vrot.slane %v762, 7
      %v1359 = vrot.slane %v1358, 2
      %v1360 = vrot.slane %v761, 7
      %v1361 = vrot.slane %v1360, 2
      %v1362 = vrot.slane %v763, 7
      %v1363 = vrot.slane %v1362, 2
      %v1364 = vrot.slane %v771, 7
      %v1365 = vrot.slane %v1364, 2
      %v1366 = vrot.slane %v779, 7
      %v1367 = vrot.slane %v1366, 2
      %v1368 = vrot.slane %v778, 7
      %v1369 = vrot.slane %v1368, 2
      %v1370 = vrot.slane %v780, 7
      %v1371 = vrot.slane %v1370, 2
      %v1372 = vrot.slane %v788, 7
      %v1373 = vrot.slane %v1372, 2
      %v1374 = vrot.slane %v796, 7
      %v1375 = vrot.slane %v1374, 2
      %v1376 = vrot.slane %v795, 7
      %v1377 = vrot.slane %v1376, 2
      %v1378 = vrot.slane %v797, 7
      %v1379 = vrot.slane %v1378, 2
      %v1380 = vrot.slane %v805, 7
      %v1381 = vrot.slane %v1380, 2
      %v1382 = vrot.slane %v813, 7
      %v1383 = vrot.slane %v1382, 2
      %v1384 = vrot.slane %v812, 7
      %v1385 = vrot.slane %v1384, 2
      %v1386 = vrot.slane %v814, 7
      %v1387 = vrot.slane %v1386, 2
      %v1388 = vrot.slane %v822, 7
      %v1389 = vrot.slane %v1388, 2
      %v1390 = vrot.slane %v830, 7
      %v1391 = vrot.slane %v1390, 2
      %v1392 = vrot.slane %v829, 7
      %v1393 = vrot.slane %v1392, 2
      %v1394 = vrot.slane %v831, 7
      %v1395 = vrot.slane %v1394, 2
      %v1396 = vrot.slane %v839, 7
      %v1397 = vrot.slane %v1396, 2
      %v1398 = vrot.slane %v847, 7
      %v1399 = vrot.slane %v1398, 2
      %v1400 = vrot.slane %v846, 7
      %v1401 = vrot.slane %v1400, 2
      %v1402 = vrot.slane %v848, 7
      %v1403 = vrot.slane %v1402, 2
      %v1404 = vrot.slane %v856, 7
      %v1405 = vrot.slane %v1404, 2
      %v1406 = vrot.slane %v864, 7
      %v1407 = vrot.slane %v1406, 2
      %v1408 = vrot.slane %v863, 7
      %v1409 = vrot.slane %v1408, 2
      %v1410 = vrot.slane %v865, 7
      %v1411 = vrot.slane %v1410, 2
      %v1412 = vrot.slane %v873, 7
      %v1413 = vrot.slane %v1412, 2
      %v1414 = vrot.slane %v881, 7
      %v1415 = vrot.slane %v1414, 2
      %v1416 = vrot.slane %v880, 7
      %v1417 = vrot.slane %v1416, 2
      %v1418 = vrot.slane %v882, 7
      %v1419 = vrot.slane %v1418, 2
      %v1420 = vrot.slane %v890, 7
      %v1421 = vrot.slane %v1420, 2
      %v1422 = vrot.slane %v898, 7
      %v1423 = vrot.slane %v1422, 2
      %v1424 = vrot.slane %v897, 7
      %v1425 = vrot.slane %v1424, 2
      %v1426 = vrot.slane %v899, 7
      %v1427 = vrot.slane %v1426, 2
      %v1428 = vrot.slane %v907, 7
      %v1429 = vrot.slane %v1428, 2
      %v1430 = vrot.slane %v915, 7
      %v1431 = vrot.slane %v1430, 2
      %v1432 = vrot.slane %v914, 7
      %v1433 = vrot.slane %v1432, 2
      %v1434 = vrot.slane %v916, 7
      %v1435 = vrot.slane %v1434, 2
      %v1436 = vrot.slane %v924, 7
      %v1437 = vrot.slane %v1436, 2
      %v1438 = vrot.slane %v932, 7
      %v1439 = vrot.slane %v1438, 2
      %v1440 = vrot.slane %v931, 7
      %v1441 = vrot.slane %v1440, 2
      %v1442 = vrot.slane %v933, 7
      %v1443 = vrot.slane %v1442, 2
      %v1444 = vrot.slane %v941, 7
      %v1445 = vrot.slane %v1444, 2
      %v1446 = vrot.slane %v949, 7
      %v1447 = vrot.slane %v1446, 2
      %v1448 = vrot.slane %v948, 7
      %v1449 = vrot.slane %v1448, 2
      %v1450 = vrot.slane %v950, 7
      %v1451 = vrot.slane %v1450, 2
      %v1452 = vrot.slane %v958, 7
      %v1453 = vrot.slane %v1452, 2
      %v1454 = vrot.slane %v966, 7
      %v1455 = vrot.slane %v1454, 2
      %v1456 = vrot.slane %v965, 7
      %v1457 = vrot.slane %v1456, 2
      %v1458 = vrot.slane %v967, 7
      %v1459 = vrot.slane %v1458, 2
      %v1460 = vrot.slane %v975, 7
      %v1461 = vrot.slane %v1460, 2
      %v1462 = vrot.slane %v983, 7
      %v1463 = vrot.slane %v1462, 2
      %v1464 = vrot.slane %v982, 7
      %v1465 = vrot.slane %v1464, 2
      %v1466 = vrot.slane %v984, 7
      %v1467 = vrot.slane %v1466, 2
      %v1468 = vrot.slane %v992, 7
      %v1469 = vrot.slane %v1468, 2
      %v1470 = vrot.slane %v1000, 7
      %v1471 = vrot.slane %v1470, 2
      %v1472 = vrot.slane %v999, 7
      %v1473 = vrot.slane %v1472, 2
      %v1474 = vrot.slane %v1001, 7
      %v1475 = vrot.slane %v1474, 2
      %v1476 = vrot.slane %v1009, 7
      %v1477 = vrot.slane %v1476, 2
      %v1478 = vrot.slane %v1017, 7
      %v1479 = vrot.slane %v1478, 2
      %v1480 = vrot.slane %v1016, 7
      %v1481 = vrot.slane %v1480, 2
      %v1482 = vrot.slane %v1018, 7
      %v1483 = vrot.slane %v1482, 2
      %v1484 = vrot.slane %v1026, 7
      %v1485 = vrot.slane %v1484, 2
      %v1486 = vrot.slane %v1034, 7
      %v1487 = vrot.slane %v1486, 2
      %v1488 = vrot.slane %v1033, 7
      %v1489 = vrot.slane %v1488, 2
      %v1490 = vrot.slane %v1035, 7
      %v1491 = vrot.slane %v1490, 2
      %v1492 = vrot.slane %v1043, 7
      %v1493 = vrot.slane %v1492, 2
      %v1494 = vrot.slane %v1051, 7
      %v1495 = vrot.slane %v1494, 2
      %v1496 = vrot.slane %v1050, 7
      %v1497 = vrot.slane %v1496, 2
      %v1498 = vrot.slane %v1052, 7
      %v1499 = vrot.slane %v1498, 2
      %v1500 = vrot.slane %v1060, 7
      %v1501 = vrot.slane %v1500, 2
      %v1502 = vrot.slane %v1068, 7
      %v1503 = vrot.slane %v1502, 2
      %v1504 = vrot.slane %v1067, 7
      %v1505 = vrot.slane %v1504, 2
      %v1506 = vrot.slane %v1069, 7
      %v1507 = vrot.slane %v1506, 2
      %v1508 = vrot.slane %v1077, 7
      %v1509 = vrot.slane %v1508, 2
      %v1510 = vrot.slane %v1085, 7
      %v1511 = vrot.slane %v1510, 2
      %v1512 = vrot.slane %v1084, 7
      %v1513 = vrot.slane %v1512, 2
      %v1514 = vrot.slane %v1086, 7
      %v1515 = vrot.slane %v1514, 2
      %v1516 = vrot.slane %v1094, 7
      %v1517 = vrot.slane %v1516, 2
      %v1518 = vrot.slane %v1102, 7
      %v1519 = vrot.slane %v1518, 2
      %v1520 = vrot.slane %v1101, 7
      %v1521 = vrot.slane %v1520, 2
      %v1522 = vrot.slane %v1103, 7
      %v1523 = vrot.slane %v1522, 2
      %v1524 = vrot.slane %v1111, 7
      %v1525 = vrot.slane %v1524, 2
      %v1526 = vrot.slane %v1119, 7
      %v1527 = vrot.slane %v1526, 2
      %v1528 = vrot.slane %v1118, 7
      %v1529 = vrot.slane %v1528, 2
      %v1530 = vrot.slane %v1120, 7
      %v1531 = vrot.slane %v1530, 2
      %v1532 = vrot.slane %v1128, 7
      %v1533 = vrot.slane %v1532, 2
      %v1534 = vrot.slane %v1136, 7
      %v1535 = vrot.slane %v1534, 2
      %v1536 = vrot.slane %v1135, 7
      %v1537 = vrot.slane %v1536, 2
      %v1538 = vrot.slane %v1137, 7
      %v1539 = vrot.slane %v1538, 2
      %v1540 = vrot.slane %v1145, 7
      %v1541 = vrot.slane %v1540, 2
      %v1542 = vrot.slane %v1153, 7
      %v1543 = vrot.slane %v1542, 2
      %v1544 = vrot.slane %v1152, 7
      %v1545 = vrot.slane %v1544, 2
      %v1546 = vrot.slane %v1154, 7
      %v1547 = vrot.slane %v1546, 2
      %v1548 = vrot.slane %v1162, 7
      %v1549 = vrot.slane %v1548, 2
      %v1550 = vrot.slane %v1170, 7
      %v1551 = vrot.slane %v1550, 2
      %v1552 = vrot.slane %v1169, 7
      %v1553 = vrot.slane %v1552, 2
      %v1554 = vrot.slane %v1171, 7
      %v1555 = vrot.slane %v1554, 2
      %v1684 = vmax.f32 %v635, %v1301
      %v1685 = vmax.f32 %v643, %v1303
      %v1686 = vmax.f32 %v642, %v1305
      %v1687 = vmax.f32 %v644, %v1307
      %v1688 = vmax.f32 %v652, %v1309
      %v1689 = vmax.f32 %v660, %v1311
      %v1690 = vmax.f32 %v659, %v1313
      %v1691 = vmax.f32 %v661, %v1315
      %v1692 = vmax.f32 %v669, %v1317
      %v1693 = vmax.f32 %v677, %v1319
      %v1694 = vmax.f32 %v676, %v1321
      %v1695 = vmax.f32 %v678, %v1323
      %v1696 = vmax.f32 %v686, %v1325
      %v1697 = vmax.f32 %v694, %v1327
      %v1698 = vmax.f32 %v693, %v1329
      %v1699 = vmax.f32 %v695, %v1331
      %v1700 = vmax.f32 %v703, %v1333
      %v1701 = vmax.f32 %v711, %v1335
      %v1702 = vmax.f32 %v710, %v1337
      %v1703 = vmax.f32 %v712, %v1339
      %v1704 = vmax.f32 %v720, %v1341
      %v1705 = vmax.f32 %v728, %v1343
      %v1706 = vmax.f32 %v727, %v1345
      %v1707 = vmax.f32 %v729, %v1347
      %v1708 = vmax.f32 %v737, %v1349
      %v1709 = vmax.f32 %v745, %v1351
      %v1710 = vmax.f32 %v744, %v1353
      %v1711 = vmax.f32 %v746, %v1355
      %v1712 = vmax.f32 %v754, %v1357
      %v1713 = vmax.f32 %v762, %v1359
      %v1714 = vmax.f32 %v761, %v1361
      %v1715 = vmax.f32 %v763, %v1363
      %v1716 = vmax.f32 %v771, %v1365
      %v1717 = vmax.f32 %v779, %v1367
      %v1718 = vmax.f32 %v778, %v1369
      %v1719 = vmax.f32 %v780, %v1371
      %v1720 = vmax.f32 %v788, %v1373
      %v1721 = vmax.f32 %v796, %v1375
      %v1722 = vmax.f32 %v795, %v1377
      %v1723 = vmax.f32 %v797, %v1379
      %v1724 = vmax.f32 %v805, %v1381
      %v1725 = vmax.f32 %v813, %v1383
      %v1726 = vmax.f32 %v812, %v1385
      %v1727 = vmax.f32 %v814, %v1387
      %v1728 = vmax.f32 %v822, %v1389
      %v1729 = vmax.f32 %v830, %v1391
      %v1730 = vmax.f32 %v829, %v1393
      %v1731 = vmax.f32 %v831, %v1395
      %v1732 = vmax.f32 %v839, %v1397
      %v1733 = vmax.f32 %v847, %v1399
      %v1734 = vmax.f32 %v846, %v1401
      %v1735 = vmax.f32 %v848, %v1403
      %v1736 = vmax.f32 %v856, %v1405
      %v1737 = vmax.f32 %v864, %v1407
      %v1738 = vmax.f32 %v863, %v1409
      %v1739 = vmax.f32 %v865, %v1411
      %v1740 = vmax.f32 %v873, %v1413
      %v1741 = vmax.f32 %v881, %v1415
      %v1742 = vmax.f32 %v880, %v1417
      %v1743 = vmax.f32 %v882, %v1419
      %v1744 = vmax.f32 %v890, %v1421
      %v1745 = vmax.f32 %v898, %v1423
      %v1746 = vmax.f32 %v897, %v1425
      %v1747 = vmax.f32 %v899, %v1427
      %v1748 = vmax.f32 %v907, %v1429
      %v1749 = vmax.f32 %v915, %v1431
      %v1750 = vmax.f32 %v914, %v1433
      %v1751 = vmax.f32 %v916, %v1435
      %v1752 = vmax.f32 %v924, %v1437
      %v1753 = vmax.f32 %v932, %v1439
      %v1754 = vmax.f32 %v931, %v1441
      %v1755 = vmax.f32 %v933, %v1443
      %v1756 = vmax.f32 %v941, %v1445
      %v1757 = vmax.f32 %v949, %v1447
      %v1758 = vmax.f32 %v948, %v1449
      %v1759 = vmax.f32 %v950, %v1451
      %v1760 = vmax.f32 %v958, %v1453
      %v1761 = vmax.f32 %v966, %v1455
      %v1762 = vmax.f32 %v965, %v1457
      %v1763 = vmax.f32 %v967, %v1459
      %v1764 = vmax.f32 %v975, %v1461
      %v1765 = vmax.f32 %v983, %v1463
      %v1766 = vmax.f32 %v982, %v1465
      %v1767 = vmax.f32 %v984, %v1467
      %v1768 = vmax.f32 %v992, %v1469
      %v1769 = vmax.f32 %v1000, %v1471
      %v1770 = vmax.f32 %v999, %v1473
      %v1771 = vmax.f32 %v1001, %v1475
      %v1772 = vmax.f32 %v1009, %v1477
      %v1773 = vmax.f32 %v1017, %v1479
      %v1774 = vmax.f32 %v1016, %v1481
      %v1775 = vmax.f32 %v1018, %v1483
      %v1776 = vmax.f32 %v1026, %v1485
      %v1777 = vmax.f32 %v1034, %v1487
      %v1778 = vmax.f32 %v1033, %v1489
      %v1779 = vmax.f32 %v1035, %v1491
      %v1780 = vmax.f32 %v1043, %v1493
      %v1781 = vmax.f32 %v1051, %v1495
      %v1782 = vmax.f32 %v1050, %v1497
      %v1783 = vmax.f32 %v1052, %v1499
      %v1784 = vmax.f32 %v1060, %v1501
      %v1785 = vmax.f32 %v1068, %v1503
      %v1786 = vmax.f32 %v1067, %v1505
      %v1787 = vmax.f32 %v1069, %v1507
      %v1788 = vmax.f32 %v1077, %v1509
      %v1789 = vmax.f32 %v1085, %v1511
      %v1790 = vmax.f32 %v1084, %v1513
      %v1791 = vmax.f32 %v1086, %v1515
      %v1792 = vmax.f32 %v1094, %v1517
      %v1793 = vmax.f32 %v1102, %v1519
      %v1794 = vmax.f32 %v1101, %v1521
      %v1795 = vmax.f32 %v1103, %v1523
      %v1796 = vmax.f32 %v1111, %v1525
      %v1797 = vmax.f32 %v1119, %v1527
      %v1798 = vmax.f32 %v1118, %v1529
      %v1799 = vmax.f32 %v1120, %v1531
      %v1800 = vmax.f32 %v1128, %v1533
      %v1801 = vmax.f32 %v1136, %v1535
      %v1802 = vmax.f32 %v1135, %v1537
      %v1803 = vmax.f32 %v1137, %v1539
      %v1804 = vmax.f32 %v1145, %v1541
      %v1805 = vmax.f32 %v1153, %v1543
      %v1806 = vmax.f32 %v1152, %v1545
      %v1807 = vmax.f32 %v1154, %v1547
      %v1808 = vmax.f32 %v1162, %v1549
      %v1809 = vmax.f32 %v1170, %v1551
      %v1810 = vmax.f32 %v1169, %v1553
      %v1811 = vmax.f32 %v1171, %v1555
      %v1812 = vmax.f32 %v1684, %v1692
      %v1813 = vmax.f32 %v1685, %v1693
      %v1814 = vmax.f32 %v1686, %v1694
      %v1815 = vmax.f32 %v1687, %v1695
      %v1816 = vmax.f32 %v1688, %v1696
      %v1817 = vmax.f32 %v1689, %v1697
      %v1818 = vmax.f32 %v1690, %v1698
      %v1819 = vmax.f32 %v1691, %v1699
      %v1820 = vmax.f32 %v1700, %v1708
      %v1821 = vmax.f32 %v1701, %v1709
      %v1822 = vmax.f32 %v1702, %v1710
      %v1823 = vmax.f32 %v1703, %v1711
      %v1824 = vmax.f32 %v1704, %v1712
      %v1825 = vmax.f32 %v1705, %v1713
      %v1826 = vmax.f32 %v1706, %v1714
      %v1827 = vmax.f32 %v1707, %v1715
      %v1828 = vmax.f32 %v1716, %v1724
      %v1829 = vmax.f32 %v1717, %v1725
      %v1830 = vmax.f32 %v1718, %v1726
      %v1831 = vmax.f32 %v1719, %v1727
      %v1832 = vmax.f32 %v1720, %v1728
      %v1833 = vmax.f32 %v1721, %v1729
      %v1834 = vmax.f32 %v1722, %v1730
      %v1835 = vmax.f32 %v1723, %v1731
      %v1836 = vmax.f32 %v1732, %v1740
      %v1837 = vmax.f32 %v1733, %v1741
      %v1838 = vmax.f32 %v1734, %v1742
      %v1839 = vmax.f32 %v1735, %v1743
      %v1840 = vmax.f32 %v1736, %v1744
      %v1841 = vmax.f32 %v1737, %v1745
      %v1842 = vmax.f32 %v1738, %v1746
      %v1843 = vmax.f32 %v1739, %v1747
      %v1844 = vmax.f32 %v1748, %v1756
      %v1845 = vmax.f32 %v1749, %v1757
      %v1846 = vmax.f32 %v1750, %v1758
      %v1847 = vmax.f32 %v1751, %v1759
      %v1848 = vmax.f32 %v1752, %v1760
      %v1849 = vmax.f32 %v1753, %v1761
      %v1850 = vmax.f32 %v1754, %v1762
      %v1851 = vmax.f32 %v1755, %v1763
      %v1852 = vmax.f32 %v1764, %v1772
      %v1853 = vmax.f32 %v1765, %v1773
      %v1854 = vmax.f32 %v1766, %v1774
      %v1855 = vmax.f32 %v1767, %v1775
      %v1856 = vmax.f32 %v1768, %v1776
      %v1857 = vmax.f32 %v1769, %v1777
      %v1858 = vmax.f32 %v1770, %v1778
      %v1859 = vmax.f32 %v1771, %v1779
      %v1860 = vmax.f32 %v1780, %v1788
      %v1861 = vmax.f32 %v1781, %v1789
      %v1862 = vmax.f32 %v1782, %v1790
      %v1863 = vmax.f32 %v1783, %v1791
      %v1864 = vmax.f32 %v1784, %v1792
      %v1865 = vmax.f32 %v1785, %v1793
      %v1866 = vmax.f32 %v1786, %v1794
      %v1867 = vmax.f32 %v1787, %v1795
      %v1868 = vmax.f32 %v1796, %v1804
      %v1869 = vmax.f32 %v1797, %v1805
      %v1870 = vmax.f32 %v1798, %v1806
      %v1871 = vmax.f32 %v1799, %v1807
      %v1872 = vmax.f32 %v1800, %v1808
      %v1873 = vmax.f32 %v1801, %v1809
      %v1874 = vmax.f32 %v1802, %v1810
      %v1875 = vmax.f32 %v1803, %v1811
      %v1876 = vpack.c.bf16 %v1812, %v1812
      %v1877 = vpack.c.bf16 %v1813, %v1813
      %v1878 = vpack.c.bf16 %v1814, %v1814
      %v1879 = vpack.c.bf16 %v1815, %v1815
      %v1880 = vpack.c.bf16 %v1816, %v1816
      %v1881 = vpack.c.bf16 %v1817, %v1817
      %v1882 = vpack.c.bf16 %v1818, %v1818
      %v1883 = vpack.c.bf16 %v1819, %v1819
      %v1884 = vpack.c.bf16 %v1820, %v1820
      %v1885 = vpack.c.bf16 %v1821, %v1821
      %v1886 = vpack.c.bf16 %v1822, %v1822
      %v1887 = vpack.c.bf16 %v1823, %v1823
      %v1888 = vpack.c.bf16 %v1824, %v1824
      %v1889 = vpack.c.bf16 %v1825, %v1825
      %v1890 = vpack.c.bf16 %v1826, %v1826
      %v1891 = vpack.c.bf16 %v1827, %v1827
      %v1892 = vpack.c.bf16 %v1828, %v1828
      %v1893 = vpack.c.bf16 %v1829, %v1829
      %v1894 = vpack.c.bf16 %v1830, %v1830
      %v1895 = vpack.c.bf16 %v1831, %v1831
      %v1896 = vpack.c.bf16 %v1832, %v1832
      %v1897 = vpack.c.bf16 %v1833, %v1833
      %v1898 = vpack.c.bf16 %v1834, %v1834
      %v1899 = vpack.c.bf16 %v1835, %v1835
      %v1900 = vpack.c.bf16 %v1836, %v1836
      %v1901 = vpack.c.bf16 %v1837, %v1837
      %v1902 = vpack.c.bf16 %v1838, %v1838
      %v1903 = vpack.c.bf16 %v1839, %v1839
      %v1904 = vpack.c.bf16 %v1840, %v1840
      %v1905 = vpack.c.bf16 %v1841, %v1841
      %v1906 = vpack.c.bf16 %v1842, %v1842
      %v1907 = vpack.c.bf16 %v1843, %v1843
      %v1908 = vpack.c.bf16 %v1844, %v1844
      %v1909 = vpack.c.bf16 %v1845, %v1845
      %v1910 = vpack.c.bf16 %v1846, %v1846
      %v1911 = vpack.c.bf16 %v1847, %v1847
      %v1912 = vpack.c.bf16 %v1848, %v1848
      %v1913 = vpack.c.bf16 %v1849, %v1849
      %v1914 = vpack.c.bf16 %v1850, %v1850
      %v1915 = vpack.c.bf16 %v1851, %v1851
      %v1916 = vpack.c.bf16 %v1852, %v1852
      %v1917 = vpack.c.bf16 %v1853, %v1853
      %v1918 = vpack.c.bf16 %v1854, %v1854
      %v1919 = vpack.c.bf16 %v1855, %v1855
      %v1920 = vpack.c.bf16 %v1856, %v1856
      %v1921 = vpack.c.bf16 %v1857, %v1857
      %v1922 = vpack.c.bf16 %v1858, %v1858
      %v1923 = vpack.c.bf16 %v1859, %v1859
      %v1924 = vpack.c.bf16 %v1860, %v1860
      %v1925 = vpack.c.bf16 %v1861, %v1861
      %v1926 = vpack.c.bf16 %v1862, %v1862
      %v1927 = vpack.c.bf16 %v1863, %v1863
      %v1928 = vpack.c.bf16 %v1864, %v1864
      %v1929 = vpack.c.bf16 %v1865, %v1865
      %v1930 = vpack.c.bf16 %v1866, %v1866
      %v1931 = vpack.c.bf16 %v1867, %v1867
      %v1932 = vpack.c.bf16 %v1868, %v1868
      %v1933 = vpack.c.bf16 %v1869, %v1869
      %v1934 = vpack.c.bf16 %v1870, %v1870
      %v1935 = vpack.c.bf16 %v1871, %v1871
      %v1936 = vpack.c.bf16 %v1872, %v1872
      %v1937 = vpack.c.bf16 %v1873, %v1873
      %v1938 = vpack.c.bf16 %v1874, %v1874
      %v1939 = vpack.c.bf16 %v1875, %v1875
      %v2004 = vunpack.c.l.b16 %v1876
      %v2005 = vunpack.c.l.b16 %v1877
      %v2006 = vunpack.c.l.b16 %v1878
      %v2007 = vunpack.c.l.b16 %v1879
      %v2008 = vunpack.c.l.b16 %v1880
      %v2009 = vunpack.c.l.b16 %v1881
      %v2010 = vunpack.c.l.b16 %v1882
      %v2011 = vunpack.c.l.b16 %v1883
      %v2012 = vunpack.c.l.b16 %v1884
      %v2013 = vunpack.c.l.b16 %v1885
      %v2014 = vunpack.c.l.b16 %v1886
      %v2015 = vunpack.c.l.b16 %v1887
      %v2016 = vunpack.c.l.b16 %v1888
      %v2017 = vunpack.c.l.b16 %v1889
      %v2018 = vunpack.c.l.b16 %v1890
      %v2019 = vunpack.c.l.b16 %v1891
      %v2020 = vunpack.c.l.b16 %v1892
      %v2021 = vunpack.c.l.b16 %v1893
      %v2022 = vunpack.c.l.b16 %v1894
      %v2023 = vunpack.c.l.b16 %v1895
      %v2024 = vunpack.c.l.b16 %v1896
      %v2025 = vunpack.c.l.b16 %v1897
      %v2026 = vunpack.c.l.b16 %v1898
      %v2027 = vunpack.c.l.b16 %v1899
      %v2028 = vunpack.c.l.b16 %v1900
      %v2029 = vunpack.c.l.b16 %v1901
      %v2030 = vunpack.c.l.b16 %v1902
      %v2031 = vunpack.c.l.b16 %v1903
      %v2032 = vunpack.c.l.b16 %v1904
      %v2033 = vunpack.c.l.b16 %v1905
      %v2034 = vunpack.c.l.b16 %v1906
      %v2035 = vunpack.c.l.b16 %v1907
      %v2036 = vunpack.c.l.b16 %v1908
      %v2037 = vunpack.c.l.b16 %v1909
      %v2038 = vunpack.c.l.b16 %v1910
      %v2039 = vunpack.c.l.b16 %v1911
      %v2040 = vunpack.c.l.b16 %v1912
      %v2041 = vunpack.c.l.b16 %v1913
      %v2042 = vunpack.c.l.b16 %v1914
      %v2043 = vunpack.c.l.b16 %v1915
      %v2044 = vunpack.c.l.b16 %v1916
      %v2045 = vunpack.c.l.b16 %v1917
      %v2046 = vunpack.c.l.b16 %v1918
      %v2047 = vunpack.c.l.b16 %v1919
      %v2048 = vunpack.c.l.b16 %v1920
      %v2049 = vunpack.c.l.b16 %v1921
      %v2050 = vunpack.c.l.b16 %v1922
      %v2051 = vunpack.c.l.b16 %v1923
      %v2052 = vunpack.c.l.b16 %v1924
      %v2053 = vunpack.c.l.b16 %v1925
      %v2054 = vunpack.c.l.b16 %v1926
      %v2055 = vunpack.c.l.b16 %v1927
      %v2056 = vunpack.c.l.b16 %v1928
      %v2057 = vunpack.c.l.b16 %v1929
      %v2058 = vunpack.c.l.b16 %v1930
      %v2059 = vunpack.c.l.b16 %v1931
      %v2060 = vunpack.c.l.b16 %v1932
      %v2061 = vunpack.c.l.b16 %v1933
      %v2062 = vunpack.c.l.b16 %v1934
      %v2063 = vunpack.c.l.b16 %v1935
      %v2064 = vunpack.c.l.b16 %v1936
      %v2065 = vunpack.c.l.b16 %v1937
      %v2066 = vunpack.c.l.b16 %v1938
      %v2067 = vunpack.c.l.b16 %v1939
      %v2068 = vrot.slane %v2005, 7
      %vm2069 = vcmask 1041409
      %v2070 = vsel %vm2069, %v2068, %v2004
      %v2071 = vrot.slane %v2006, 6
      %vm2072 = vcmask 1042434
      %v2073 = vsel %vm2072, %v2071, %v2070
      %v2074 = vrot.slane %v2007, 5
      %vm2075 = vcmask 1043459
      %v2076 = vsel %vm2075, %v2074, %v2073
      %v2077 = vrot.slane %v2008, 4
      %vm2078 = vcmask 1044484
      %v2079 = vsel %vm2078, %v2077, %v2076
      %v2080 = vrot.slane %v2009, 3
      %vm2081 = vcmask 1045509
      %v2082 = vsel %vm2081, %v2080, %v2079
      %v2083 = vrot.slane %v2010, 2
      %vm2084 = vcmask 1046534
      %v2085 = vsel %vm2084, %v2083, %v2082
      %v2086 = vrot.slane %v2011, 1
      %vm2087 = vcmask 1047559
      %v2088 = vsel %vm2087, %v2086, %v2085
      %v2089 = vrot.slane %v2013, 7
      %v2090 = vsel %vm2069, %v2089, %v2012
      %v2091 = vrot.slane %v2014, 6
      %v2092 = vsel %vm2072, %v2091, %v2090
      %v2093 = vrot.slane %v2015, 5
      %v2094 = vsel %vm2075, %v2093, %v2092
      %v2095 = vrot.slane %v2016, 4
      %v2096 = vsel %vm2078, %v2095, %v2094
      %v2097 = vrot.slane %v2017, 3
      %v2098 = vsel %vm2081, %v2097, %v2096
      %v2099 = vrot.slane %v2018, 2
      %v2100 = vsel %vm2084, %v2099, %v2098
      %v2101 = vrot.slane %v2019, 1
      %v2102 = vsel %vm2087, %v2101, %v2100
      %v2103 = vrot.slane %v2021, 7
      %v2104 = vsel %vm2069, %v2103, %v2020
      %v2105 = vrot.slane %v2022, 6
      %v2106 = vsel %vm2072, %v2105, %v2104
      %v2107 = vrot.slane %v2023, 5
      %v2108 = vsel %vm2075, %v2107, %v2106
      %v2109 = vrot.slane %v2024, 4
      %v2110 = vsel %vm2078, %v2109, %v2108
      %v2111 = vrot.slane %v2025, 3
      %v2112 = vsel %vm2081, %v2111, %v2110
      %v2113 = vrot.slane %v2026, 2
      %v2114 = vsel %vm2084, %v2113, %v2112
      %v2115 = vrot.slane %v2027, 1
      %v2116 = vsel %vm2087, %v2115, %v2114
      %v2117 = vrot.slane %v2029, 7
      %v2118 = vsel %vm2069, %v2117, %v2028
      %v2119 = vrot.slane %v2030, 6
      %v2120 = vsel %vm2072, %v2119, %v2118
      %v2121 = vrot.slane %v2031, 5
      %v2122 = vsel %vm2075, %v2121, %v2120
      %v2123 = vrot.slane %v2032, 4
      %v2124 = vsel %vm2078, %v2123, %v2122
      %v2125 = vrot.slane %v2033, 3
      %v2126 = vsel %vm2081, %v2125, %v2124
      %v2127 = vrot.slane %v2034, 2
      %v2128 = vsel %vm2084, %v2127, %v2126
      %v2129 = vrot.slane %v2035, 1
      %v2130 = vsel %vm2087, %v2129, %v2128
      %v2131 = vrot.slane %v2037, 7
      %v2132 = vsel %vm2069, %v2131, %v2036
      %v2133 = vrot.slane %v2038, 6
      %v2134 = vsel %vm2072, %v2133, %v2132
      %v2135 = vrot.slane %v2039, 5
      %v2136 = vsel %vm2075, %v2135, %v2134
      %v2137 = vrot.slane %v2040, 4
      %v2138 = vsel %vm2078, %v2137, %v2136
      %v2139 = vrot.slane %v2041, 3
      %v2140 = vsel %vm2081, %v2139, %v2138
      %v2141 = vrot.slane %v2042, 2
      %v2142 = vsel %vm2084, %v2141, %v2140
      %v2143 = vrot.slane %v2043, 1
      %v2144 = vsel %vm2087, %v2143, %v2142
      %v2145 = vrot.slane %v2045, 7
      %v2146 = vsel %vm2069, %v2145, %v2044
      %v2147 = vrot.slane %v2046, 6
      %v2148 = vsel %vm2072, %v2147, %v2146
      %v2149 = vrot.slane %v2047, 5
      %v2150 = vsel %vm2075, %v2149, %v2148
      %v2151 = vrot.slane %v2048, 4
      %v2152 = vsel %vm2078, %v2151, %v2150
      %v2153 = vrot.slane %v2049, 3
      %v2154 = vsel %vm2081, %v2153, %v2152
      %v2155 = vrot.slane %v2050, 2
      %v2156 = vsel %vm2084, %v2155, %v2154
      %v2157 = vrot.slane %v2051, 1
      %v2158 = vsel %vm2087, %v2157, %v2156
      %v2159 = vrot.slane %v2053, 7
      %v2160 = vsel %vm2069, %v2159, %v2052
      %v2161 = vrot.slane %v2054, 6
      %v2162 = vsel %vm2072, %v2161, %v2160
      %v2163 = vrot.slane %v2055, 5
      %v2164 = vsel %vm2075, %v2163, %v2162
      %v2165 = vrot.slane %v2056, 4
      %v2166 = vsel %vm2078, %v2165, %v2164
      %v2167 = vrot.slane %v2057, 3
      %v2168 = vsel %vm2081, %v2167, %v2166
      %v2169 = vrot.slane %v2058, 2
      %v2170 = vsel %vm2084, %v2169, %v2168
      %v2171 = vrot.slane %v2059, 1
      %v2172 = vsel %vm2087, %v2171, %v2170
      %v2173 = vrot.slane %v2061, 7
      %v2174 = vsel %vm2069, %v2173, %v2060
      %v2175 = vrot.slane %v2062, 6
      %v2176 = vsel %vm2072, %v2175, %v2174
      %v2177 = vrot.slane %v2063, 5
      %v2178 = vsel %vm2075, %v2177, %v2176
      %v2179 = vrot.slane %v2064, 4
      %v2180 = vsel %vm2078, %v2179, %v2178
      %v2181 = vrot.slane %v2065, 3
      %v2182 = vsel %vm2081, %v2181, %v2180
      %v2183 = vrot.slane %v2066, 2
      %v2184 = vsel %vm2084, %v2183, %v2182
      %v2185 = vrot.slane %v2067, 1
      %v2186 = vsel %vm2087, %v2185, %v2184
      %v2187 = vpack.c.b16 %v2088, %v2088
      %v2188 = vpack.c.b16 %v2102, %v2102
      %v2189 = vpack.c.b16 %v2116, %v2116
      %v2190 = vpack.c.b16 %v2130, %v2130
      %v2191 = vpack.c.b16 %v2144, %v2144
      %v2192 = vpack.c.b16 %v2158, %v2158
      %v2193 = vpack.c.b16 %v2172, %v2172
      %v2194 = vpack.c.b16 %v2186, %v2186
      %v2196 = vshrl.u32 0, 16
      %v2198 = vrot.slane %v2196, 7
      %v2199 = vshll.u32 0, 16
      %v2201 = vor.u32 %v2198, %v2199
      %v2203 = vshrl.u32 %v2187, 16
      %v2205 = vrot.slane %v2203, 7
      %v2206 = vshll.u32 %v2187, 16
      %v2208 = vor.u32 %v2205, %v2206
      %v2210 = vshrl.u32 %v2188, 16
      %v2212 = vrot.slane %v2210, 7
      %v2213 = vshll.u32 %v2188, 16
      %v2215 = vor.u32 %v2212, %v2213
      %v2217 = vshrl.u32 %v2189, 16
      %v2219 = vrot.slane %v2217, 7
      %v2220 = vshll.u32 %v2189, 16
      %v2222 = vor.u32 %v2219, %v2220
      %v2224 = vshrl.u32 %v2190, 16
      %v2226 = vrot.slane %v2224, 7
      %v2227 = vshll.u32 %v2190, 16
      %v2229 = vor.u32 %v2226, %v2227
      %v2231 = vshrl.u32 %v2191, 16
      %v2233 = vrot.slane %v2231, 7
      %v2234 = vshll.u32 %v2191, 16
      %v2236 = vor.u32 %v2233, %v2234
      %v2238 = vshrl.u32 %v2192, 16
      %v2240 = vrot.slane %v2238, 7
      %v2241 = vshll.u32 %v2192, 16
      %v2243 = vor.u32 %v2240, %v2241
      %v2245 = vshrl.u32 %v2193, 16
      %v2247 = vrot.slane %v2245, 7
      %v2248 = vshll.u32 %v2193, 16
      %v2250 = vor.u32 %v2247, %v2248
      %v2252 = vshrl.u32 %v2194, 16
      %v2254 = vrot.slane %v2252, 7
      %v2255 = vshll.u32 %v2194, 16
      %v2257 = vor.u32 %v2254, %v2255
      %vm2267 = vcmask 1040384
      %vm2268 = vsmask.f32 256
      %vm2269 = vmand %vm2267, %vm2268
      %v2270 = vsel %vm2269, 0, %v2201
      %v2271 = vsel %vm2269, 0, %v2208
      %v2272 = vsel %vm2269, 0, %v2215
      %v2273 = vsel %vm2269, 0, %v2222
      %v2274 = vsel %vm2269, 0, %v2229
      %v2275 = vsel %vm2269, 0, %v2236
      %v2276 = vsel %vm2269, 0, %v2243
      %v2277 = vsel %vm2269, 0, %v2250
      %v2278 = vsel %vm2269, 0, %v2257
      %vm2279 = vcmask 1044480
      %vm2280 = vsmask.f32 4352
      %vm2281 = vmand %vm2279, %vm2280
      %v2282 = vsel %vm2281, %v2270, 0
      %v2283 = vsel %vm2281, %v2271, 0
      %v2284 = vsel %vm2281, %v2272, 0
      %v2285 = vsel %vm2281, %v2273, 0
      %v2286 = vsel %vm2281, %v2274, 0
      %v2287 = vsel %vm2281, %v2275, 0
      %v2288 = vsel %vm2281, %v2276, 0
      %v2289 = vsel %vm2281, %v2277, 0
      %v2290 = vsel %vm2281, %v2278, 0
      %v2292 = vshrl.u32 %v2282, 16
      %v2294 = vshll.u32 %v2282, 16
      %v2296 = vrot.slane %v2294, 1
      %v2297 = vor.u32 %v2292, %v2296
      %v2299 = vshrl.u32 %v2283, 16
      %v2301 = vshll.u32 %v2283, 16
      %v2303 = vrot.slane %v2301, 1
      %v2304 = vor.u32 %v2299, %v2303
      %v2306 = vshrl.u32 %v2284, 16
      %v2308 = vshll.u32 %v2284, 16
      %v2310 = vrot.slane %v2308, 1
      %v2311 = vor.u32 %v2306, %v2310
      %v2313 = vshrl.u32 %v2285, 16
      %v2315 = vshll.u32 %v2285, 16
      %v2317 = vrot.slane %v2315, 1
      %v2318 = vor.u32 %v2313, %v2317
      %v2320 = vshrl.u32 %v2286, 16
      %v2322 = vshll.u32 %v2286, 16
      %v2324 = vrot.slane %v2322, 1
      %v2325 = vor.u32 %v2320, %v2324
      %v2327 = vshrl.u32 %v2287, 16
      %v2329 = vshll.u32 %v2287, 16
      %v2331 = vrot.slane %v2329, 1
      %v2332 = vor.u32 %v2327, %v2331
      %v2334 = vshrl.u32 %v2288, 16
      %v2336 = vshll.u32 %v2288, 16
      %v2338 = vrot.slane %v2336, 1
      %v2339 = vor.u32 %v2334, %v2338
      %v2341 = vshrl.u32 %v2289, 16
      %v2343 = vshll.u32 %v2289, 16
      %v2345 = vrot.slane %v2343, 1
      %v2346 = vor.u32 %v2341, %v2345
      %v2348 = vshrl.u32 %v2290, 16
      %v2350 = vshll.u32 %v2290, 16
      %v2352 = vrot.slane %v2350, 1
      %v2353 = vor.u32 %v2348, %v2352
      %v2363 = vrot.slane %v2282, 1
      %v2364 = vrot.slane %v2283, 1
      %v2365 = vrot.slane %v2284, 1
      %v2366 = vrot.slane %v2285, 1
      %v2367 = vrot.slane %v2286, 1
      %v2368 = vrot.slane %v2287, 1
      %v2369 = vrot.slane %v2288, 1
      %v2370 = vrot.slane %v2289, 1
      %v2371 = vrot.slane %v2290, 1
      %v2372 = vunpack.c.l.b16 %v2282
      %v2373 = vunpack.c.l.b16 %v2297
      %v2374 = vunpack.c.l.b16 %v2363
      %v2375 = vunpack.c.l.b16 %v2283
      %v2376 = vunpack.c.l.b16 %v2304
      %v2377 = vunpack.c.l.b16 %v2364
      %v2378 = vunpack.c.l.b16 %v2284
      %v2379 = vunpack.c.l.b16 %v2311
      %v2380 = vunpack.c.l.b16 %v2365
      %v2381 = vunpack.c.l.b16 %v2285
      %v2382 = vunpack.c.l.b16 %v2318
      %v2383 = vunpack.c.l.b16 %v2366
      %v2384 = vunpack.c.l.b16 %v2286
      %v2385 = vunpack.c.l.b16 %v2325
      %v2386 = vunpack.c.l.b16 %v2367
      %v2387 = vunpack.c.l.b16 %v2287
      %v2388 = vunpack.c.l.b16 %v2332
      %v2389 = vunpack.c.l.b16 %v2368
      %v2390 = vunpack.c.l.b16 %v2288
      %v2391 = vunpack.c.l.b16 %v2339
      %v2392 = vunpack.c.l.b16 %v2369
      %v2393 = vunpack.c.l.b16 %v2289
      %v2394 = vunpack.c.l.b16 %v2346
      %v2395 = vunpack.c.l.b16 %v2370
      %v2396 = vunpack.c.l.b16 %v2290
      %v2397 = vunpack.c.l.b16 %v2353
      %v2398 = vunpack.c.l.b16 %v2371
      %v2399 = vpack.c.b16 %v2375, %v2372
      %v2400 = vpack.c.b16 %v2376, %v2373
      %v2401 = vpack.c.b16 %v2377, %v2374
      %v2402 = vpack.c.b16 %v2381, %v2378
      %v2403 = vpack.c.b16 %v2382, %v2379
      %v2404 = vpack.c.b16 %v2383, %v2380
      %v2405 = vpack.c.b16 %v2387, %v2384
      %v2406 = vpack.c.b16 %v2388, %v2385
      %v2407 = vpack.c.b16 %v2389, %v2386
      %v2408 = vpack.c.b16 %v2393, %v2390
      %v2409 = vpack.c.b16 %v2394, %v2391
      %v2410 = vpack.c.b16 %v2395, %v2392
      %v2423 = vpack.c.b16 %v2378, %v2375
      %v2424 = vpack.c.b16 %v2379, %v2376
      %v2425 = vpack.c.b16 %v2380, %v2377
      %v2426 = vpack.c.b16 %v2384, %v2381
      %v2427 = vpack.c.b16 %v2385, %v2382
      %v2428 = vpack.c.b16 %v2386, %v2383
      %v2429 = vpack.c.b16 %v2390, %v2387
      %v2430 = vpack.c.b16 %v2391, %v2388
      %v2431 = vpack.c.b16 %v2392, %v2389
      %v2432 = vpack.c.b16 %v2396, %v2393
      %v2433 = vpack.c.b16 %v2397, %v2394
      %v2434 = vpack.c.b16 %v2398, %v2395
      %v2447 = vpack.c.b16 %v2372, %v2396
      %v2448 = vpack.c.b16 %v2373, %v2397
      %v2449 = vpack.c.b16 %v2374, %v2398
      %v2453 = vld [vmem:[%s2 + $0x10] sm:$0xf]
      %v2454 = vld [vmem:[%s2 + $0x14] sm:$0xf]
      %v2455 = vld [vmem:[%s2 + $0x18] sm:$0xf]
      %v2456 = vld [vmem:[%s2 + $0x1c] sm:$0xf]
      %v2457 = vld [vmem:[%s2 + $0x20] sm:$0xf]
      %v2458 = vld [vmem:[%s2 + $0x24] sm:$0xf]
      %v2459 = vld [vmem:[%s2 + $0x28] sm:$0xf]
      %v2460 = vld [vmem:[%s2 + $0x2c] sm:$0xf]
      %v2461 = vld [vmem:[%s2 + $0x30] sm:$0xf]
      %v2462 = vld [vmem:[%s2 + $0x34] sm:$0xf]
      %v2463 = vld [vmem:[%s2 + $0x38] sm:$0xf]
      %v2464 = vld [vmem:[%s2 + $0x3c] sm:$0xf]
      %v2465 = vld [vmem:[%s2 + $0x40] sm:$0xf]
      %v2466 = vld [vmem:[%s2 + $0x44] sm:$0xf]
      %v2467 = vld [vmem:[%s2 + $0x48] sm:$0xf]
      %v2468 = vld [vmem:[%s2 + $0x4c] sm:$0xf]
      %v2469 = vld [vmem:[%s2 + $0x50] sm:$0xf]
      %v2470 = vld [vmem:[%s2 + $0x54] sm:$0xf]
      %v2471 = vld [vmem:[%s2 + $0x58] sm:$0xf]
      %v2472 = vld [vmem:[%s2 + $0x5c] sm:$0xf]
      %v2473 = vld [vmem:[%s2 + $0x60] sm:$0xf]
      %v2474 = vld [vmem:[%s2 + $0x64] sm:$0xf]
      %v2475 = vld [vmem:[%s2 + $0x68] sm:$0xf]
      %v2476 = vld [vmem:[%s2 + $0x6c] sm:$0xf]
      %v2477 = vld [vmem:[%s2 + $0x70] sm:$0xf]
      %v2478 = vld [vmem:[%s2 + $0x74] sm:$0xf]
      %v2479 = vld [vmem:[%s2 + $0x78] sm:$0xf]
      %v2480 = vld [vmem:[%s2 + $0x7c] sm:$0xf]
      %v2481 = vld [vmem:[%s2 + $0x80] sm:$0xf]
      %v2482 = vld [vmem:[%s2 + $0x84] sm:$0xf]
      %v2483 = vld [vmem:[%s2 + $0x88] sm:$0xf]
      %v2484 = vld [vmem:[%s2 + $0x8c] sm:$0xf]
      %v2485 = vld [vmem:[%s2 + $0x90] sm:$0xf]
      %v2486 = vld [vmem:[%s2 + $0x94] sm:$0xf]
      %v2487 = vld [vmem:[%s2 + $0x98] sm:$0xf]
      %v2488 = vld [vmem:[%s2 + $0x9c] sm:$0xf]
      %v2489 = vld [vmem:[%s2 + $0xa0] sm:$0xf]
      %v2490 = vld [vmem:[%s2 + $0xa4] sm:$0xf]
      %v2491 = vld [vmem:[%s2 + $0xa8] sm:$0xf]
      %v2492 = vld [vmem:[%s2 + $0xac] sm:$0xf]
      %v2493 = vld [vmem:[%s2 + $0xb0] sm:$0xf]
      %v2494 = vld [vmem:[%s2 + $0xb4] sm:$0xf]
      %v2495 = vld [vmem:[%s2 + $0xb8] sm:$0xf]
      %v2496 = vld [vmem:[%s2 + $0xbc] sm:$0xf]
      %v2497 = vld [vmem:[%s2 + $0xc0] sm:$0xf]
      %v2498 = vld [vmem:[%s2 + $0xc4] sm:$0xf]
      %v2499 = vld [vmem:[%s2 + $0xc8] sm:$0xf]
      %v2500 = vld [vmem:[%s2 + $0xcc] sm:$0xf]
      %v2501 = vld [vmem:[%s2 + $0xd0] sm:$0xf]
      %v2502 = vld [vmem:[%s2 + $0xd4] sm:$0xf]
      %v2503 = vld [vmem:[%s2 + $0xd8] sm:$0xf]
      %v2504 = vld [vmem:[%s2 + $0xdc] sm:$0xf]
      %v2505 = vld [vmem:[%s2 + $0xe0] sm:$0xf]
      %v2506 = vld [vmem:[%s2 + $0xe4] sm:$0xf]
      %v2507 = vld [vmem:[%s2 + $0xe8] sm:$0xf]
      %v2508 = vld [vmem:[%s2 + $0xec] sm:$0xf]
      %v2509 = vld [vmem:[%s2 + $0xf0] sm:$0xf]
      %v2510 = vld [vmem:[%s2 + $0xf4] sm:$0xf]
      %v2511 = vld [vmem:[%s2 + $0xf8] sm:$0xf]
      %v2512 = vld [vmem:[%s2 + $0xfc] sm:$0xf]
      %v2513 = vld [vmem:[%s2 + $0x100] sm:$0xf]
      %v2514 = vld [vmem:[%s2 + $0x104] sm:$0xf]
      %v2515 = vld [vmem:[%s2 + $0x108] sm:$0xf]
      %v2516 = vld [vmem:[%s2 + $0x10c] sm:$0xf]
      %v2517 = vld [vmem:[%s2 + $0x110] sm:$0xf]
      %v2518 = vld [vmem:[%s2 + $0x114] sm:$0xf]
      %v2519 = vld [vmem:[%s2 + $0x118] sm:$0xf]
      %v2520 = vld [vmem:[%s2 + $0x11c] sm:$0xf]
      %v2521 = vld [vmem:[%s2 + $0x120] sm:$0xf]
      %v2522 = vld [vmem:[%s2 + $0x124] sm:$0xf]
      %v2523 = vld [vmem:[%s2 + $0x128] sm:$0xf]
      %v2524 = vld [vmem:[%s2 + $0x12c] sm:$0xf]
      %v2525 = vld [vmem:[%s2 + $0x130] sm:$0xf]
      %v2526 = vld [vmem:[%s2 + $0x134] sm:$0xf]
      %v2527 = vld [vmem:[%s2 + $0x138] sm:$0xf]
      %v2528 = vld [vmem:[%s2 + $0x13c] sm:$0xf]
      %v2529 = vld [vmem:[%s2 + $0x140] sm:$0xf]
      %v2530 = vld [vmem:[%s2 + $0x144] sm:$0xf]
      %v2531 = vld [vmem:[%s2 + $0x148] sm:$0xf]
      %v2532 = vld [vmem:[%s2 + $0x14c] sm:$0xf]
      %v2533 = vld [vmem:[%s2 + $0x150] sm:$0xf]
      %v2534 = vld [vmem:[%s2 + $0x154] sm:$0xf]
      %v2535 = vld [vmem:[%s2 + $0x158] sm:$0xf]
      %v2536 = vld [vmem:[%s2 + $0x15c] sm:$0xf]
      %v2537 = vld [vmem:[%s2 + $0x160] sm:$0xf]
      %v2538 = vld [vmem:[%s2 + $0x164] sm:$0xf]
      %v2539 = vld [vmem:[%s2 + $0x168] sm:$0xf]
      %v2540 = vld [vmem:[%s2 + $0x16c] sm:$0xf]
      %v2541 = vld [vmem:[%s2 + $0x170] sm:$0xf]
      %v2542 = vld [vmem:[%s2 + $0x174] sm:$0xf]
      %v2543 = vld [vmem:[%s2 + $0x178] sm:$0xf]
      %v2544 = vld [vmem:[%s2 + $0x17c] sm:$0xf]
      %v2545 = vld [vmem:[%s2 + $0x180] sm:$0xf]
      %v2546 = vld [vmem:[%s2 + $0x184] sm:$0xf]
      %v2547 = vld [vmem:[%s2 + $0x188] sm:$0xf]
      %v2548 = vld [vmem:[%s2 + $0x18c] sm:$0xf]
      %v2549 = vld [vmem:[%s2 + $0x190] sm:$0xf]
      %v2550 = vld [vmem:[%s2 + $0x194] sm:$0xf]
      %v2551 = vld [vmem:[%s2 + $0x198] sm:$0xf]
      %v2552 = vld [vmem:[%s2 + $0x19c] sm:$0xf]
      %v2553 = vld [vmem:[%s2 + $0x1a0] sm:$0xf]
      %v2554 = vld [vmem:[%s2 + $0x1a4] sm:$0xf]
      %v2555 = vld [vmem:[%s2 + $0x1a8] sm:$0xf]
      %v2556 = vld [vmem:[%s2 + $0x1ac] sm:$0xf]
      %v2557 = vld [vmem:[%s2 + $0x1b0] sm:$0xf]
      %v2558 = vld [vmem:[%s2 + $0x1b4] sm:$0xf]
      %v2559 = vld [vmem:[%s2 + $0x1b8] sm:$0xf]
      %v2560 = vld [vmem:[%s2 + $0x1bc] sm:$0xf]
      %v2561 = vld [vmem:[%s2 + $0x1c0] sm:$0xf]
      %v2562 = vld [vmem:[%s2 + $0x1c4] sm:$0xf]
      %v2563 = vld [vmem:[%s2 + $0x1c8] sm:$0xf]
      %v2564 = vld [vmem:[%s2 + $0x1cc] sm:$0xf]
      %v2565 = vld [vmem:[%s2 + $0x1d0] sm:$0xf]
      %v2566 = vld [vmem:[%s2 + $0x1d4] sm:$0xf]
      %v2567 = vld [vmem:[%s2 + $0x1d8] sm:$0xf]
      %v2568 = vld [vmem:[%s2 + $0x1dc] sm:$0xf]
      %v2569 = vld [vmem:[%s2 + $0x1e0] sm:$0xf]
      %v2570 = vld [vmem:[%s2 + $0x1e4] sm:$0xf]
      %v2571 = vld [vmem:[%s2 + $0x1e8] sm:$0xf]
      %v2572 = vld [vmem:[%s2 + $0x1ec] sm:$0xf]
      %v2573 = vld [vmem:[%s2 + $0x1f0] sm:$0xf]
      %v2574 = vld [vmem:[%s2 + $0x1f4] sm:$0xf]
      %v2575 = vld [vmem:[%s2 + $0x1f8] sm:$0xf]
      %v2576 = vld [vmem:[%s2 + $0x1fc] sm:$0xf]
      %v2577 = vld [vmem:[%s2 + $0x200] sm:$0xf]
      %v2578 = vld [vmem:[%s2 + $0x204] sm:$0xf]
      %v2579 = vld [vmem:[%s2 + $0x208] sm:$0xf]
      %v2580 = vld [vmem:[%s2 + $0x20c] sm:$0xf]
      %v2581 = vld [vmem:[%s2 + $0x210] sm:$0xf]
      %v2582 = vld [vmem:[%s2 + $0x214] sm:$0xf]
      %v2583 = vld [vmem:[%s2 + $0x218] sm:$0xf]
      %v2584 = vld [vmem:[%s2 + $0x21c] sm:$0xf]
      %v2585 = vld [vmem:[%s2 + $0x220] sm:$0xf]
      %v2586 = vld [vmem:[%s2 + $0x224] sm:$0xf]
      %v2587 = vld [vmem:[%s2 + $0x228] sm:$0xf]
      %v2588 = vld [vmem:[%s2 + $0x22c] sm:$0xf]
      %v2589 = vld [vmem:[%s2 + $0x230] sm:$0xf]
      %v2590 = vld [vmem:[%s2 + $0x234] sm:$0xf]
      %v2591 = vld [vmem:[%s2 + $0x238] sm:$0xf]
      %v2592 = vld [vmem:[%s2 + $0x23c] sm:$0xf]
      %v2593 = vld [vmem:[%s2 + $0x240] sm:$0xf]
      %v2594 = vld [vmem:[%s2 + $0x244] sm:$0xf]
      %v2595 = vld [vmem:[%s2 + $0x248] sm:$0xf]
      %v2596 = vld [vmem:[%s2 + $0x24c] sm:$0xf]
      %v2597 = vld [vmem:[%s3 + $0x8] sm:$0x1]
      %v2598 = vlaneseq
      %v2599 = vshrl.u32 %v2598, 7
      %v2600 = vsub.s32 0, %v2599
      %v2601 = vrot.slane %v2597, %v2600
      %v2746 = vunpack.c.l.b16 %v2453
      %v2747 = vunpack.c.l.b16 %v2454
      %v2748 = vunpack.c.l.b16 %v2455
      %v2749 = vunpack.c.l.b16 %v2456
      %v2750 = vunpack.c.l.b16 %v2457
      %v2751 = vunpack.c.l.b16 %v2458
      %v2752 = vunpack.c.l.b16 %v2459
      %v2753 = vunpack.c.l.b16 %v2460
      %v2754 = vunpack.c.l.b16 %v2461
      %v2755 = vunpack.c.l.b16 %v2462
      %v2756 = vunpack.c.l.b16 %v2463
      %v2757 = vunpack.c.l.b16 %v2464
      %v2758 = vunpack.c.l.b16 %v2465
      %v2759 = vunpack.c.l.b16 %v2466
      %v2760 = vunpack.c.l.b16 %v2467
      %v2761 = vunpack.c.l.b16 %v2468
      %v2762 = vunpack.c.l.b16 %v2469
      %v2763 = vunpack.c.l.b16 %v2470
      %v2764 = vunpack.c.l.b16 %v2471
      %v2765 = vunpack.c.l.b16 %v2472
      %v2766 = vunpack.c.l.b16 %v2473
      %v2767 = vunpack.c.l.b16 %v2474
      %v2768 = vunpack.c.l.b16 %v2475
      %v2769 = vunpack.c.l.b16 %v2476
      %v2770 = vunpack.c.l.b16 %v2477
      %v2771 = vunpack.c.l.b16 %v2478
      %v2772 = vunpack.c.l.b16 %v2479
      %v2773 = vunpack.c.l.b16 %v2480
      %v2774 = vunpack.c.l.b16 %v2481
      %v2775 = vunpack.c.l.b16 %v2482
      %v2776 = vunpack.c.l.b16 %v2483
      %v2777 = vunpack.c.l.b16 %v2484
      %v2778 = vunpack.c.l.b16 %v2485
      %v2779 = vunpack.c.l.b16 %v2486
      %v2780 = vunpack.c.l.b16 %v2487
      %v2781 = vunpack.c.l.b16 %v2488
      %v2782 = vunpack.c.l.b16 %v2489
      %v2783 = vunpack.c.l.b16 %v2490
      %v2784 = vunpack.c.l.b16 %v2491
      %v2785 = vunpack.c.l.b16 %v2492
      %v2786 = vunpack.c.l.b16 %v2493
      %v2787 = vunpack.c.l.b16 %v2494
      %v2788 = vunpack.c.l.b16 %v2495
      %v2789 = vunpack.c.l.b16 %v2496
      %v2790 = vunpack.c.l.b16 %v2497
      %v2791 = vunpack.c.l.b16 %v2498
      %v2792 = vunpack.c.l.b16 %v2499
      %v2793 = vunpack.c.l.b16 %v2500
      %v2794 = vunpack.c.l.b16 %v2501
      %v2795 = vunpack.c.l.b16 %v2502
      %v2796 = vunpack.c.l.b16 %v2503
      %v2797 = vunpack.c.l.b16 %v2504
      %v2798 = vunpack.c.l.b16 %v2505
      %v2799 = vunpack.c.l.b16 %v2506
      %v2800 = vunpack.c.l.b16 %v2507
      %v2801 = vunpack.c.l.b16 %v2508
      %v2802 = vunpack.c.l.b16 %v2509
      %v2803 = vunpack.c.l.b16 %v2510
      %v2804 = vunpack.c.l.b16 %v2511
      %v2805 = vunpack.c.l.b16 %v2512
      %v2806 = vunpack.c.l.b16 %v2513
      %v2807 = vunpack.c.l.b16 %v2514
      %v2808 = vunpack.c.l.b16 %v2515
      %v2809 = vunpack.c.l.b16 %v2516
      %v2810 = vunpack.c.l.b16 %v2517
      %v2811 = vunpack.c.l.b16 %v2518
      %v2812 = vunpack.c.l.b16 %v2519
      %v2813 = vunpack.c.l.b16 %v2520
      %v2814 = vunpack.c.l.b16 %v2521
      %v2815 = vunpack.c.l.b16 %v2522
      %v2816 = vunpack.c.l.b16 %v2523
      %v2817 = vunpack.c.l.b16 %v2524
      %v2818 = vunpack.c.l.b16 %v2525
      %v2819 = vunpack.c.l.b16 %v2526
      %v2820 = vunpack.c.l.b16 %v2527
      %v2821 = vunpack.c.l.b16 %v2528
      %v2822 = vunpack.c.l.b16 %v2529
      %v2823 = vunpack.c.l.b16 %v2530
      %v2824 = vunpack.c.l.b16 %v2531
      %v2825 = vunpack.c.l.b16 %v2532
      %v2826 = vunpack.c.l.b16 %v2533
      %v2827 = vunpack.c.l.b16 %v2534
      %v2828 = vunpack.c.l.b16 %v2535
      %v2829 = vunpack.c.l.b16 %v2536
      %v2830 = vunpack.c.l.b16 %v2537
      %v2831 = vunpack.c.l.b16 %v2538
      %v2832 = vunpack.c.l.b16 %v2539
      %v2833 = vunpack.c.l.b16 %v2540
      %v2834 = vunpack.c.l.b16 %v2541
      %v2835 = vunpack.c.l.b16 %v2542
      %v2836 = vunpack.c.l.b16 %v2543
      %v2837 = vunpack.c.l.b16 %v2544
      %v2838 = vunpack.c.l.b16 %v2545
      %v2839 = vunpack.c.l.b16 %v2546
      %v2840 = vunpack.c.l.b16 %v2547
      %v2841 = vunpack.c.l.b16 %v2548
      %v2842 = vunpack.c.l.b16 %v2549
      %v2843 = vunpack.c.l.b16 %v2550
      %v2844 = vunpack.c.l.b16 %v2551
      %v2845 = vunpack.c.l.b16 %v2552
      %v2846 = vunpack.c.l.b16 %v2553
      %v2847 = vunpack.c.l.b16 %v2554
      %v2848 = vunpack.c.l.b16 %v2555
      %v2849 = vunpack.c.l.b16 %v2556
      %v2850 = vunpack.c.l.b16 %v2557
      %v2851 = vunpack.c.l.b16 %v2558
      %v2852 = vunpack.c.l.b16 %v2559
      %v2853 = vunpack.c.l.b16 %v2560
      %v2854 = vunpack.c.l.b16 %v2561
      %v2855 = vunpack.c.l.b16 %v2562
      %v2856 = vunpack.c.l.b16 %v2563
      %v2857 = vunpack.c.l.b16 %v2564
      %v2858 = vunpack.c.l.b16 %v2565
      %v2859 = vunpack.c.l.b16 %v2566
      %v2860 = vunpack.c.l.b16 %v2567
      %v2861 = vunpack.c.l.b16 %v2568
      %v2862 = vunpack.c.l.b16 %v2569
      %v2863 = vunpack.c.l.b16 %v2570
      %v2864 = vunpack.c.l.b16 %v2571
      %v2865 = vunpack.c.l.b16 %v2572
      %v2866 = vunpack.c.l.b16 %v2573
      %v2867 = vunpack.c.l.b16 %v2574
      %v2868 = vunpack.c.l.b16 %v2575
      %v2869 = vunpack.c.l.b16 %v2576
      %v2870 = vunpack.c.l.b16 %v2577
      %v2871 = vunpack.c.l.b16 %v2578
      %v2872 = vunpack.c.l.b16 %v2579
      %v2873 = vunpack.c.l.b16 %v2580
      %v2874 = vunpack.c.l.b16 %v2581
      %v2875 = vunpack.c.l.b16 %v2582
      %v2876 = vunpack.c.l.b16 %v2583
      %v2877 = vunpack.c.l.b16 %v2584
      %v2878 = vunpack.c.l.b16 %v2585
      %v2879 = vunpack.c.l.b16 %v2586
      %v2880 = vunpack.c.l.b16 %v2587
      %v2881 = vunpack.c.l.b16 %v2588
      %v2882 = vunpack.c.l.b16 %v2589
      %v2883 = vunpack.c.l.b16 %v2590
      %v2884 = vunpack.c.l.b16 %v2591
      %v2885 = vunpack.c.l.b16 %v2592
      %v2886 = vunpack.c.l.b16 %v2593
      %v2887 = vunpack.c.l.b16 %v2594
      %v2888 = vunpack.c.l.b16 %v2595
      %v2889 = vunpack.c.l.b16 %v2596
      %v2890 = vpack.c.b16 %v2747, %v2746
      %v2891 = vpack.c.b16 %v2749, %v2748
      %v2892 = vpack.c.b16 %v2751, %v2750
      %v2893 = vpack.c.b16 %v2753, %v2752
      %v2894 = vpack.c.b16 %v2755, %v2754
      %v2895 = vpack.c.b16 %v2757, %v2756
      %v2896 = vpack.c.b16 %v2759, %v2758
      %v2897 = vpack.c.b16 %v2761, %v2760
      %v2898 = vpack.c.b16 %v2763, %v2762
      %v2899 = vpack.c.b16 %v2765, %v2764
      %v2900 = vpack.c.b16 %v2767, %v2766
      %v2901 = vpack.c.b16 %v2769, %v2768
      %v2902 = vpack.c.b16 %v2771, %v2770
      %v2903 = vpack.c.b16 %v2773, %v2772
      %v2904 = vpack.c.b16 %v2775, %v2774
      %v2905 = vpack.c.b16 %v2777, %v2776
      %v2906 = vpack.c.b16 %v2779, %v2778
      %v2907 = vpack.c.b16 %v2781, %v2780
      %v2908 = vpack.c.b16 %v2783, %v2782
      %v2909 = vpack.c.b16 %v2785, %v2784
      %v2910 = vpack.c.b16 %v2787, %v2786
      %v2911 = vpack.c.b16 %v2789, %v2788
      %v2912 = vpack.c.b16 %v2791, %v2790
      %v2913 = vpack.c.b16 %v2793, %v2792
      %v2914 = vpack.c.b16 %v2795, %v2794
      %v2915 = vpack.c.b16 %v2797, %v2796
      %v2916 = vpack.c.b16 %v2799, %v2798
      %v2917 = vpack.c.b16 %v2801, %v2800
      %v2918 = vpack.c.b16 %v2803, %v2802
      %v2919 = vpack.c.b16 %v2805, %v2804
      %v2920 = vpack.c.b16 %v2807, %v2806
      %v2921 = vpack.c.b16 %v2809, %v2808
      %v2922 = vpack.c.b16 %v2811, %v2810
      %v2923 = vpack.c.b16 %v2813, %v2812
      %v2924 = vpack.c.b16 %v2815, %v2814
      %v2925 = vpack.c.b16 %v2817, %v2816
      %v2926 = vpack.c.b16 %v2819, %v2818
      %v2927 = vpack.c.b16 %v2821, %v2820
      %v2928 = vpack.c.b16 %v2823, %v2822
      %v2929 = vpack.c.b16 %v2825, %v2824
      %v2930 = vpack.c.b16 %v2827, %v2826
      %v2931 = vpack.c.b16 %v2829, %v2828
      %v2932 = vpack.c.b16 %v2831, %v2830
      %v2933 = vpack.c.b16 %v2833, %v2832
      %v2934 = vpack.c.b16 %v2835, %v2834
      %v2935 = vpack.c.b16 %v2837, %v2836
      %v2936 = vpack.c.b16 %v2839, %v2838
      %v2937 = vpack.c.b16 %v2841, %v2840
      %v2938 = vpack.c.b16 %v2843, %v2842
      %v2939 = vpack.c.b16 %v2845, %v2844
      %v2940 = vpack.c.b16 %v2847, %v2846
      %v2941 = vpack.c.b16 %v2849, %v2848
      %v2942 = vpack.c.b16 %v2851, %v2850
      %v2943 = vpack.c.b16 %v2853, %v2852
      %v2944 = vpack.c.b16 %v2855, %v2854
      %v2945 = vpack.c.b16 %v2857, %v2856
      %v2946 = vpack.c.b16 %v2859, %v2858
      %v2947 = vpack.c.b16 %v2861, %v2860
      %v2948 = vpack.c.b16 %v2863, %v2862
      %v2949 = vpack.c.b16 %v2865, %v2864
      %v2950 = vpack.c.b16 %v2867, %v2866
      %v2951 = vpack.c.b16 %v2869, %v2868
      %v2952 = vpack.c.b16 %v2871, %v2870
      %v2953 = vpack.c.b16 %v2873, %v2872
      %v2954 = vpack.c.b16 %v2875, %v2874
      %v2955 = vpack.c.b16 %v2877, %v2876
      %v2956 = vpack.c.b16 %v2879, %v2878
      %v2957 = vpack.c.b16 %v2881, %v2880
      %v2958 = vpack.c.b16 %v2883, %v2882
      %v2959 = vpack.c.b16 %v2885, %v2884
      %v2960 = vpack.c.b16 %v2887, %v2886
      %v2961 = vpack.c.b16 %v2889, %v2888
      %3034 = vmatprep.subr.bf16.mxu0 0
      %3035 = vmatpush1.bf16.msra.mxu0 %v2890
      %3036 = vmatprep.subr.bf16.mxu0 0
      %3037 = vmatpush1.bf16.msra.mxu0 %v2891
      %3038 = vmatprep.subr.bf16.mxu0 0
      %3039 = vmatpush1.bf16.msra.mxu0 %v2892
      %3040 = vmatprep.subr.bf16.mxu0 0
      %3041 = vmatpush1.bf16.msra.mxu0 %v2893
      %3042 = vmatprep.subr.bf16.mxu0 0
      %3043 = vmatpush1.bf16.msra.mxu0 %v2894
      %3044 = vmatprep.subr.bf16.mxu0 0
      %3045 = vmatpush1.bf16.msra.mxu0 %v2895
      %3046 = vmatprep.subr.bf16.mxu0 0
      %3047 = vmatpush1.bf16.msra.mxu0 %v2896
      %3048 = vmatprep.subr.bf16.mxu0 0
      %3049 = vmatpush1.bf16.msra.mxu0 %v2897
      %3050 = vmatprep.subr.bf16.mxu0 0
      %3051 = vmatpush1.bf16.msra.mxu0 %v2898
      %3052 = vmatprep.subr.bf16.mxu0 0
      %3053 = vmatpush1.bf16.msra.mxu0 %v2899
      %3054 = vmatprep.subr.bf16.mxu0 0
      %3055 = vmatpush1.bf16.msra.mxu0 %v2900
      %3056 = vmatprep.subr.bf16.mxu0 0
      %3057 = vmatpush1.bf16.msra.mxu0 %v2901
      %3058 = vmatprep.subr.bf16.mxu0 0
      %3059 = vmatpush1.bf16.msra.mxu0 %v2902
      %3060 = vmatprep.subr.bf16.mxu0 0
      %3061 = vmatpush1.bf16.msra.mxu0 %v2903
      %3062 = vmatprep.subr.bf16.mxu0 0
      %3063 = vmatpush1.bf16.msra.mxu0 %v2904
      %3064 = vmatprep.subr.bf16.mxu0 0
      %3065 = vmatpush1.bf16.msra.mxu0 %v2905
      %3066 = vmatprep.mubr.bf16.mxu0 %v2400
      %3067 = vmatmul.mubr.bf16.gmra.mrb[0].mxu0 %v2399
      %v3068 = vpop.f32.mrb[0].mxu0
      %v3069 = vadd.f32 %v2601, %v3068
      %v3070 = vpop.f32.mrb[0].mxu0
      %v3071 = vpop.f32.mrb[0].mxu0
      %v3072 = vadd.f32 %v2601, %v3071
      %v3073 = vpop.f32.mrb[0].mxu0
      %3074 = vmatprep.mubr.bf16.mxu0 %v2403
      %3075 = vmatmul.mubr.bf16.gmra.mrb[0].mxu0 %v2402
      %v3076 = vpop.f32.mrb[0].mxu0
      %v3077 = vadd.f32 %v2601, %v3076
      %v3078 = vpop.f32.mrb[0].mxu0
      %v3079 = vpop.f32.mrb[0].mxu0
      %v3080 = vadd.f32 %v2601, %v3079
      %v3081 = vpop.f32.mrb[0].mxu0
      %3082 = vmatprep.mubr.bf16.mxu0 %v2406
      %3083 = vmatmul.mubr.bf16.gmra.mrb[0].mxu0 %v2405
      %v3084 = vpop.f32.mrb[0].mxu0
      %v3085 = vadd.f32 %v2601, %v3084
      %v3086 = vpop.f32.mrb[0].mxu0
      %v3087 = vpop.f32.mrb[0].mxu0
      %v3088 = vadd.f32 %v2601, %v3087
      %v3089 = vpop.f32.mrb[0].mxu0
      %3090 = vmatprep.mubr.bf16.mxu0 %v2409
      %3091 = vmatmul.mubr.bf16.gmra.mrb[0].mxu0 %v2408
      %v3092 = vpop.f32.mrb[0].mxu0
      %v3093 = vadd.f32 %v2601, %v3092
      %v3094 = vpop.f32.mrb[0].mxu0
      %v3095 = vpop.f32.mrb[0].mxu0
      %v3096 = vadd.f32 %v2601, %v3095
      %v3097 = vpop.f32.mrb[0].mxu0
      %3098 = vdwg.mxu0
      %3099 = vmatprep.subr.bf16.mxu0 0
      %3100 = vmatpush1.bf16.msra.mxu0 %v2906
      %3101 = vmatprep.subr.bf16.mxu0 0
      %3102 = vmatpush1.bf16.msra.mxu0 %v2907
      %3103 = vmatprep.subr.bf16.mxu0 0
      %3104 = vmatpush1.bf16.msra.mxu0 %v2908
      %3105 = vmatprep.subr.bf16.mxu0 0
      %3106 = vmatpush1.bf16.msra.mxu0 %v2909
      %3107 = vmatprep.subr.bf16.mxu0 0
      %3108 = vmatpush1.bf16.msra.mxu0 %v2910
      %3109 = vmatprep.subr.bf16.mxu0 0
      %3110 = vmatpush1.bf16.msra.mxu0 %v2911
      %3111 = vmatprep.subr.bf16.mxu0 0
      %3112 = vmatpush1.bf16.msra.mxu0 %v2912
      %3113 = vmatprep.subr.bf16.mxu0 0
      %3114 = vmatpush1.bf16.msra.mxu0 %v2913
      %3115 = vmatprep.subr.bf16.mxu0 0
      %3116 = vmatpush1.bf16.msra.mxu0 %v2914
      %3117 = vmatprep.subr.bf16.mxu0 0
      %3118 = vmatpush1.bf16.msra.mxu0 %v2915
      %3119 = vmatprep.subr.bf16.mxu0 0
      %3120 = vmatpush1.bf16.msra.mxu0 %v2916
      %3121 = vmatprep.subr.bf16.mxu0 0
      %3122 = vmatpush1.bf16.msra.mxu0 %v2917
      %3123 = vmatprep.subr.bf16.mxu0 0
      %3124 = vmatpush1.bf16.msra.mxu0 %v2918
      %3125 = vmatprep.subr.bf16.mxu0 0
      %3126 = vmatpush1.bf16.msra.mxu0 %v2919
      %3127 = vmatprep.subr.bf16.mxu0 0
      %3128 = vmatpush1.bf16.msra.mxu0 %v2920
      %3129 = vmatprep.subr.bf16.mxu0 0
      %3130 = vmatpush1.bf16.msra.mxu0 %v2921
      %3131 = vmatprep.mubr.bf16.mxu0 %v2423
      %3132 = vmatmul.mubr.bf16.gmra.mrb[0].mxu0 %v2401
      %v3133 = vpop.f32.mrb[0].mxu0
      %v3134 = vadd.f32 %v3069, %v3133
      %v3135 = vpop.f32.mrb[0].mxu0
      %v3136 = vpop.f32.mrb[0].mxu0
      %v3137 = vadd.f32 %v3072, %v3136
      %v3138 = vpop.f32.mrb[0].mxu0
      %3139 = vmatprep.mubr.bf16.mxu0 %v2426
      %3140 = vmatmul.mubr.bf16.gmra.mrb[0].mxu0 %v2404
      %v3141 = vpop.f32.mrb[0].mxu0
      %v3142 = vadd.f32 %v3077, %v3141
      %v3143 = vpop.f32.mrb[0].mxu0
      %v3144 = vpop.f32.mrb[0].mxu0
      %v3145 = vadd.f32 %v3080, %v3144
      %v3146 = vpop.f32.mrb[0].mxu0
      %3147 = vmatprep.mubr.bf16.mxu0 %v2429
      %3148 = vmatmul.mubr.bf16.gmra.mrb[0].mxu0 %v2407
      %v3149 = vpop.f32.mrb[0].mxu0
      %v3150 = vadd.f32 %v3085, %v3149
      %v3151 = vpop.f32.mrb[0].mxu0
      %v3152 = vpop.f32.mrb[0].mxu0
      %v3153 = vadd.f32 %v3088, %v3152
      %v3154 = vpop.f32.mrb[0].mxu0
      %3155 = vmatprep.mubr.bf16.mxu0 %v2432
      %3156 = vmatmul.mubr.bf16.gmra.mrb[0].mxu0 %v2410
      %v3157 = vpop.f32.mrb[0].mxu0
      %v3158 = vadd.f32 %v3093, %v3157
      %v3159 = vpop.f32.mrb[0].mxu0
      %v3160 = vpop.f32.mrb[0].mxu0
      %v3161 = vadd.f32 %v3096, %v3160
      %v3162 = vpop.f32.mrb[0].mxu0
      %3163 = vdwg.mxu0
      %3164 = vmatprep.subr.bf16.mxu0 0
      %3165 = vmatpush1.bf16.msra.mxu0 %v2922
      %3166 = vmatprep.subr.bf16.mxu0 0
      %3167 = vmatpush1.bf16.msra.mxu0 %v2923
      %3168 = vmatprep.subr.bf16.mxu0 0
      %3169 = vmatpush1.bf16.msra.mxu0 %v2924
      %3170 = vmatprep.subr.bf16.mxu0 0
      %3171 = vmatpush1.bf16.msra.mxu0 %v2925
      %3172 = vmatprep.subr.bf16.mxu0 0
      %3173 = vmatpush1.bf16.msra.mxu0 %v2926
      %3174 = vmatprep.subr.bf16.mxu0 0
      %3175 = vmatpush1.bf16.msra.mxu0 %v2927
      %3176 = vmatprep.subr.bf16.mxu0 0
      %3177 = vmatpush1.bf16.msra.mxu0 %v2928
      %3178 = vmatprep.subr.bf16.mxu0 0
      %3179 = vmatpush1.bf16.msra.mxu0 %v2929
      %3180 = vmatprep.subr.bf16.mxu0 0
      %3181 = vmatpush1.bf16.msra.mxu0 %v2930
      %3182 = vmatprep.subr.bf16.mxu0 0
      %3183 = vmatpush1.bf16.msra.mxu0 %v2931
      %3184 = vmatprep.subr.bf16.mxu0 0
      %3185 = vmatpush1.bf16.msra.mxu0 %v2932
      %3186 = vmatprep.subr.bf16.mxu0 0
      %3187 = vmatpush1.bf16.msra.mxu0 %v2933
      %3188 = vmatprep.subr.bf16.mxu0 0
      %3189 = vmatpush1.bf16.msra.mxu0 %v2934
      %3190 = vmatprep.subr.bf16.mxu0 0
      %3191 = vmatpush1.bf16.msra.mxu0 %v2935
      %3192 = vmatprep.subr.bf16.mxu0 0
      %3193 = vmatpush1.bf16.msra.mxu0 %v2936
      %3194 = vmatprep.subr.bf16.mxu0 0
      %3195 = vmatpush1.bf16.msra.mxu0 %v2937
      %3196 = vmatprep.mubr.bf16.mxu0 %v2425
      %3197 = vmatmul.mubr.bf16.gmra.mrb[0].mxu0 %v2424
      %v3198 = vpop.f32.mrb[0].mxu0
      %v3199 = vadd.f32 %v3134, %v3198
      %v3200 = vpop.f32.mrb[0].mxu0
      %v3201 = vpop.f32.mrb[0].mxu0
      %v3202 = vadd.f32 %v3137, %v3201
      %v3203 = vpop.f32.mrb[0].mxu0
      %3204 = vmatprep.mubr.bf16.mxu0 %v2428
      %3205 = vmatmul.mubr.bf16.gmra.mrb[0].mxu0 %v2427
      %v3206 = vpop.f32.mrb[0].mxu0
      %v3207 = vadd.f32 %v3142, %v3206
      %v3208 = vpop.f32.mrb[0].mxu0
      %v3209 = vpop.f32.mrb[0].mxu0
      %v3210 = vadd.f32 %v3145, %v3209
      %v3211 = vpop.f32.mrb[0].mxu0
      %3212 = vmatprep.mubr.bf16.mxu0 %v2431
      %3213 = vmatmul.mubr.bf16.gmra.mrb[0].mxu0 %v2430
      %v3214 = vpop.f32.mrb[0].mxu0
      %v3215 = vadd.f32 %v3150, %v3214
      %v3216 = vpop.f32.mrb[0].mxu0
      %v3217 = vpop.f32.mrb[0].mxu0
      %v3218 = vadd.f32 %v3153, %v3217
      %v3219 = vpop.f32.mrb[0].mxu0
      %3220 = vmatprep.mubr.bf16.mxu0 %v2434
      %3221 = vmatmul.mubr.bf16.gmra.mrb[0].mxu0 %v2433
      %v3222 = vpop.f32.mrb[0].mxu0
      %v3223 = vadd.f32 %v3158, %v3222
      %v3224 = vpop.f32.mrb[0].mxu0
      %v3225 = vpop.f32.mrb[0].mxu0
      %v3226 = vadd.f32 %v3161, %v3225
      %v3227 = vpop.f32.mrb[0].mxu0
      %3228 = vdwg.mxu0
      %3229 = vmatprep.subr.bf16.mxu0 0
      %3230 = vmatpush1.bf16.msra.mxu0 %v2938
      %3231 = vmatprep.subr.bf16.mxu0 0
      %3232 = vmatpush1.bf16.msra.mxu0 %v2939
      %3233 = vmatprep.subr.bf16.mxu0 0
      %3234 = vmatpush1.bf16.msra.mxu0 %v2940
      %3235 = vmatprep.subr.bf16.mxu0 0
      %3236 = vmatpush1.bf16.msra.mxu0 %v2941
      %3237 = vmatprep.subr.bf16.mxu0 0
      %3238 = vmatpush1.bf16.msra.mxu0 %v2942
      %3239 = vmatprep.subr.bf16.mxu0 0
      %3240 = vmatpush1.bf16.msra.mxu0 %v2943
      %3241 = vmatprep.subr.bf16.mxu0 0
      %3242 = vmatpush1.bf16.msra.mxu0 %v2944
      %3243 = vmatprep.subr.bf16.mxu0 0
      %3244 = vmatpush1.bf16.msra.mxu0 %v2945
      %3245 = vmatprep.subr.bf16.mxu0 0
      %3246 = vmatpush1.bf16.msra.mxu0 %v2946
      %3247 = vmatprep.subr.bf16.mxu0 0
      %3248 = vmatpush1.bf16.msra.mxu0 %v2947
      %3249 = vmatprep.subr.bf16.mxu0 0
      %3250 = vmatpush1.bf16.msra.mxu0 %v2948
      %3251 = vmatprep.subr.bf16.mxu0 0
      %3252 = vmatpush1.bf16.msra.mxu0 %v2949
      %3253 = vmatprep.subr.bf16.mxu0 0
      %3254 = vmatpush1.bf16.msra.mxu0 %v2950
      %3255 = vmatprep.subr.bf16.mxu0 0
      %3256 = vmatpush1.bf16.msra.mxu0 %v2951
      %3257 = vmatprep.subr.bf16.mxu0 0
      %3258 = vmatpush1.bf16.msra.mxu0 %v2952
      %3259 = vmatprep.subr.bf16.mxu0 0
      %3260 = vmatpush1.bf16.msra.mxu0 %v2953
      %3261 = vmatprep.mubr.bf16.mxu0 %v2403
      %3262 = vmatmul.mubr.bf16.gmra.mrb[0].mxu0 %v2402
      %v3263 = vpop.f32.mrb[0].mxu0
      %v3264 = vadd.f32 %v3199, %v3263
      %v3265 = vpop.f32.mrb[0].mxu0
      %v3266 = vpop.f32.mrb[0].mxu0
      %v3267 = vadd.f32 %v3202, %v3266
      %v3268 = vpop.f32.mrb[0].mxu0
      %3269 = vmatprep.mubr.bf16.mxu0 %v2406
      %3270 = vmatmul.mubr.bf16.gmra.mrb[0].mxu0 %v2405
      %v3271 = vpop.f32.mrb[0].mxu0
      %v3272 = vadd.f32 %v3207, %v3271
      %v3273 = vpop.f32.mrb[0].mxu0
      %v3274 = vpop.f32.mrb[0].mxu0
      %v3275 = vadd.f32 %v3210, %v3274
      %v3276 = vpop.f32.mrb[0].mxu0
      %3277 = vmatprep.mubr.bf16.mxu0 %v2409
      %3278 = vmatmul.mubr.bf16.gmra.mrb[0].mxu0 %v2408
      %v3279 = vpop.f32.mrb[0].mxu0
      %v3280 = vadd.f32 %v3215, %v3279
      %v3281 = vpop.f32.mrb[0].mxu0
      %v3282 = vpop.f32.mrb[0].mxu0
      %v3283 = vadd.f32 %v3218, %v3282
      %v3284 = vpop.f32.mrb[0].mxu0
      %3285 = vmatprep.mubr.bf16.mxu0 %v2448
      %3286 = vmatmul.mubr.bf16.gmra.mrb[0].mxu0 %v2447
      %v3287 = vpop.f32.mrb[0].mxu0
      %v3288 = vadd.f32 %v3223, %v3287
      %v3289 = vpop.f32.mrb[0].mxu0
      %v3290 = vpop.f32.mrb[0].mxu0
      %v3291 = vadd.f32 %v3226, %v3290
      %v3292 = vpop.f32.mrb[0].mxu0
      %3293 = vdwg.mxu0
      %3294 = vmatprep.subr.bf16.mxu0 0
      %3295 = vmatpush1.bf16.msra.mxu0 %v2954
      %3296 = vmatprep.subr.bf16.mxu0 0
      %3297 = vmatpush1.bf16.msra.mxu0 %v2955
      %3298 = vmatprep.subr.bf16.mxu0 0
      %3299 = vmatpush1.bf16.msra.mxu0 %v2956
      %3300 = vmatprep.subr.bf16.mxu0 0
      %3301 = vmatpush1.bf16.msra.mxu0 %v2957
      %3302 = vmatprep.subr.bf16.mxu0 0
      %3303 = vmatpush1.bf16.msra.mxu0 %v2958
      %3304 = vmatprep.subr.bf16.mxu0 0
      %3305 = vmatpush1.bf16.msra.mxu0 %v2959
      %3306 = vmatprep.subr.bf16.mxu0 0
      %3307 = vmatpush1.bf16.msra.mxu0 %v2960
      %3308 = vmatprep.subr.bf16.mxu0 0
      %3309 = vmatpush1.bf16.msra.mxu0 %v2961
      %3310 = vmatprep.subr.bf16.mxu0 0
      %3311 = vmatpush1.bf16.msra.mxu0 0
      %3312 = vmatprep.subr.bf16.mxu0 0
      %3313 = vmatpush1.bf16.msra.mxu0 0
      %3314 = vmatprep.subr.bf16.mxu0 0
      %3315 = vmatpush1.bf16.msra.mxu0 0
      %3316 = vmatprep.subr.bf16.mxu0 0
      %3317 = vmatpush1.bf16.msra.mxu0 0
      %3318 = vmatprep.subr.bf16.mxu0 0
      %3319 = vmatpush1.bf16.msra.mxu0 0
      %3320 = vmatprep.subr.bf16.mxu0 0
      %3321 = vmatpush1.bf16.msra.mxu0 0
      %3322 = vmatprep.subr.bf16.mxu0 0
      %3323 = vmatpush1.bf16.msra.mxu0 0
      %3324 = vmatprep.subr.bf16.mxu0 0
      %3325 = vmatpush1.bf16.msra.mxu0 0
      %3326 = vmatprep.mubr.bf16.mxu0 0
      %3327 = vmatmul.mubr.bf16.gmra.mrb[0].mxu0 %v2404
      %v3328 = vpop.f32.mrb[0].mxu0
      %v3329 = vadd.f32 %v3264, %v3328
      %v3330 = vpop.f32.mrb[0].mxu0
      %v3331 = vpop.f32.mrb[0].mxu0
      %v3332 = vadd.f32 %v3267, %v3331
      %v3333 = vpop.f32.mrb[0].mxu0
      %3334 = vmatprep.mubr.bf16.mxu0 0
      %3335 = vmatmul.mubr.bf16.gmra.mrb[0].mxu0 %v2407
      %v3336 = vpop.f32.mrb[0].mxu0
      %v3337 = vadd.f32 %v3272, %v3336
      %v3338 = vpop.f32.mrb[0].mxu0
      %v3339 = vpop.f32.mrb[0].mxu0
      %v3340 = vadd.f32 %v3275, %v3339
      %v3341 = vpop.f32.mrb[0].mxu0
      %3342 = vmatprep.mubr.bf16.mxu0 0
      %3343 = vmatmul.mubr.bf16.gmra.mrb[0].mxu0 %v2410
      %v3344 = vpop.f32.mrb[0].mxu0
      %v3345 = vadd.f32 %v3280, %v3344
      %v3346 = vpop.f32.mrb[0].mxu0
      %v3347 = vpop.f32.mrb[0].mxu0
      %v3348 = vadd.f32 %v3283, %v3347
      %v3349 = vpop.f32.mrb[0].mxu0
      %3350 = vmatprep.mubr.bf16.mxu0 0
      %3351 = vmatmul.mubr.bf16.gmra.mrb[0].mxu0 %v2449
      %v3352 = vpop.f32.mrb[0].mxu0
      %v3353 = vadd.f32 %v3288, %v3352
      %v3354 = vpop.f32.mrb[0].mxu0
      %v3355 = vpop.f32.mrb[0].mxu0
      %v3356 = vadd.f32 %v3291, %v3355
      %v3357 = vpop.f32.mrb[0].mxu0
      %3358 = vdwg.mxu0
      %v3359 = vmax.f32 %v3329, 0.0
      %v3360 = vmax.f32 %v3332, 0.0
      %v3361 = vmax.f32 %v3337, 0.0
      %v3362 = vmax.f32 %v3340, 0.0
      %v3363 = vmax.f32 %v3345, 0.0
      %v3364 = vmax.f32 %v3348, 0.0
      %v3365 = vmax.f32 %v3353, 0.0
      %v3366 = vmax.f32 %v3356, 0.0
      %v3375 = vcombine.high %v3359, %v3359
      %v3377 = vunpack.c.l.s4 1983009808
      %v3378 = vunpack.c.0.s8 %v3377
      %v3379 = vlaneseq
      %v3380 = vshrl.u32 %v3379, 7
      %v3381 = vsub.s32 %v3378, %v3380
      %v3382 = vrot.slane %v3359, %v3381
      %v3384 = vunpack.c.l.s4 1983009808
      %v3385 = vunpack.c.0.s8 %v3384
      %v3386 = vlaneseq
      %v3387 = vshrl.u32 %v3386, 7
      %v3388 = vsub.s32 %v3385, %v3387
      %v3389 = vrot.slane %v3375, %v3388
      %v3390 = vcombine.high %v3382, %v3382
      %v3391 = vcombine.high %v3389, %v3389
      %v3392 = vcombine.high %v3360, %v3360
      %v3394 = vunpack.c.l.s4 1983009808
      %v3395 = vunpack.c.0.s8 %v3394
      %v3396 = vlaneseq
      %v3397 = vshrl.u32 %v3396, 7
      %v3398 = vsub.s32 %v3395, %v3397
      %v3399 = vrot.slane %v3360, %v3398
      %v3401 = vunpack.c.l.s4 1983009808
      %v3402 = vunpack.c.0.s8 %v3401
      %v3403 = vlaneseq
      %v3404 = vshrl.u32 %v3403, 7
      %v3405 = vsub.s32 %v3402, %v3404
      %v3406 = vrot.slane %v3392, %v3405
      %v3407 = vcombine.high %v3399, %v3399
      %v3408 = vcombine.high %v3406, %v3406
      %v3409 = vcombine.high %v3361, %v3361
      %v3411 = vunpack.c.l.s4 1983009808
      %v3412 = vunpack.c.0.s8 %v3411
      %v3413 = vlaneseq
      %v3414 = vshrl.u32 %v3413, 7
      %v3415 = vsub.s32 %v3412, %v3414
      %v3416 = vrot.slane %v3361, %v3415
      %v3418 = vunpack.c.l.s4 1983009808
      %v3419 = vunpack.c.0.s8 %v3418
      %v3420 = vlaneseq
      %v3421 = vshrl.u32 %v3420, 7
      %v3422 = vsub.s32 %v3419, %v3421
      %v3423 = vrot.slane %v3409, %v3422
      %v3424 = vcombine.high %v3416, %v3416
      %v3425 = vcombine.high %v3423, %v3423
      %v3426 = vcombine.high %v3362, %v3362
      %v3428 = vunpack.c.l.s4 1983009808
      %v3429 = vunpack.c.0.s8 %v3428
      %v3430 = vlaneseq
      %v3431 = vshrl.u32 %v3430, 7
      %v3432 = vsub.s32 %v3429, %v3431
      %v3433 = vrot.slane %v3362, %v3432
      %v3435 = vunpack.c.l.s4 1983009808
      %v3436 = vunpack.c.0.s8 %v3435
      %v3437 = vlaneseq
      %v3438 = vshrl.u32 %v3437, 7
      %v3439 = vsub.s32 %v3436, %v3438
      %v3440 = vrot.slane %v3426, %v3439
      %v3441 = vcombine.high %v3433, %v3433
      %v3442 = vcombine.high %v3440, %v3440
      %v3443 = vcombine.high %v3363, %v3363
      %v3445 = vunpack.c.l.s4 1983009808
      %v3446 = vunpack.c.0.s8 %v3445
      %v3447 = vlaneseq
      %v3448 = vshrl.u32 %v3447, 7
      %v3449 = vsub.s32 %v3446, %v3448
      %v3450 = vrot.slane %v3363, %v3449
      %v3452 = vunpack.c.l.s4 1983009808
      %v3453 = vunpack.c.0.s8 %v3452
      %v3454 = vlaneseq
      %v3455 = vshrl.u32 %v3454, 7
      %v3456 = vsub.s32 %v3453, %v3455
      %v3457 = vrot.slane %v3443, %v3456
      %v3458 = vcombine.high %v3450, %v3450
      %v3459 = vcombine.high %v3457, %v3457
      %v3460 = vcombine.high %v3364, %v3364
      %v3462 = vunpack.c.l.s4 1983009808
      %v3463 = vunpack.c.0.s8 %v3462
      %v3464 = vlaneseq
      %v3465 = vshrl.u32 %v3464, 7
      %v3466 = vsub.s32 %v3463, %v3465
      %v3467 = vrot.slane %v3364, %v3466
      %v3469 = vunpack.c.l.s4 1983009808
      %v3470 = vunpack.c.0.s8 %v3469
      %v3471 = vlaneseq
      %v3472 = vshrl.u32 %v3471, 7
      %v3473 = vsub.s32 %v3470, %v3472
      %v3474 = vrot.slane %v3460, %v3473
      %v3475 = vcombine.high %v3467, %v3467
      %v3476 = vcombine.high %v3474, %v3474
      %v3477 = vcombine.high %v3365, %v3365
      %v3479 = vunpack.c.l.s4 1983009808
      %v3480 = vunpack.c.0.s8 %v3479
      %v3481 = vlaneseq
      %v3482 = vshrl.u32 %v3481, 7
      %v3483 = vsub.s32 %v3480, %v3482
      %v3484 = vrot.slane %v3365, %v3483
      %v3486 = vunpack.c.l.s4 1983009808
      %v3487 = vunpack.c.0.s8 %v3486
      %v3488 = vlaneseq
      %v3489 = vshrl.u32 %v3488, 7
      %v3490 = vsub.s32 %v3487, %v3489
      %v3491 = vrot.slane %v3477, %v3490
      %v3492 = vcombine.high %v3484, %v3484
      %v3493 = vcombine.high %v3491, %v3491
      %v3494 = vcombine.high %v3366, %v3366
      %v3496 = vunpack.c.l.s4 1983009808
      %v3497 = vunpack.c.0.s8 %v3496
      %v3498 = vlaneseq
      %v3499 = vshrl.u32 %v3498, 7
      %v3500 = vsub.s32 %v3497, %v3499
      %v3501 = vrot.slane %v3366, %v3500
      %v3503 = vunpack.c.l.s4 1983009808
      %v3504 = vunpack.c.0.s8 %v3503
      %v3505 = vlaneseq
      %v3506 = vshrl.u32 %v3505, 7
      %v3507 = vsub.s32 %v3504, %v3506
      %v3508 = vrot.slane %v3494, %v3507
      %v3509 = vcombine.high %v3501, %v3501
      %v3510 = vcombine.high %v3508, %v3508
      %v3543 = vrot.slane %v3382, 7
      %v3544 = vrot.slane %v3543, 2
      %v3545 = vrot.slane %v3390, 7
      %v3546 = vrot.slane %v3545, 2
      %v3547 = vrot.slane %v3389, 7
      %v3548 = vrot.slane %v3547, 2
      %v3549 = vrot.slane %v3391, 7
      %v3550 = vrot.slane %v3549, 2
      %v3551 = vrot.slane %v3399, 7
      %v3552 = vrot.slane %v3551, 2
      %v3553 = vrot.slane %v3407, 7
      %v3554 = vrot.slane %v3553, 2
      %v3555 = vrot.slane %v3406, 7
      %v3556 = vrot.slane %v3555, 2
      %v3557 = vrot.slane %v3408, 7
      %v3558 = vrot.slane %v3557, 2
      %v3559 = vrot.slane %v3416, 7
      %v3560 = vrot.slane %v3559, 2
      %v3561 = vrot.slane %v3424, 7
      %v3562 = vrot.slane %v3561, 2
      %v3563 = vrot.slane %v3423, 7
      %v3564 = vrot.slane %v3563, 2
      %v3565 = vrot.slane %v3425, 7
      %v3566 = vrot.slane %v3565, 2
      %v3567 = vrot.slane %v3433, 7
      %v3568 = vrot.slane %v3567, 2
      %v3569 = vrot.slane %v3441, 7
      %v3570 = vrot.slane %v3569, 2
      %v3571 = vrot.slane %v3440, 7
      %v3572 = vrot.slane %v3571, 2
      %v3573 = vrot.slane %v3442, 7
      %v3574 = vrot.slane %v3573, 2
      %v3575 = vrot.slane %v3450, 7
      %v3576 = vrot.slane %v3575, 2
      %v3577 = vrot.slane %v3458, 7
      %v3578 = vrot.slane %v3577, 2
      %v3579 = vrot.slane %v3457, 7
      %v3580 = vrot.slane %v3579, 2
      %v3581 = vrot.slane %v3459, 7
      %v3582 = vrot.slane %v3581, 2
      %v3583 = vrot.slane %v3467, 7
      %v3584 = vrot.slane %v3583, 2
      %v3585 = vrot.slane %v3475, 7
      %v3586 = vrot.slane %v3585, 2
      %v3587 = vrot.slane %v3474, 7
      %v3588 = vrot.slane %v3587, 2
      %v3589 = vrot.slane %v3476, 7
      %v3590 = vrot.slane %v3589, 2
      %v3591 = vrot.slane %v3484, 7
      %v3592 = vrot.slane %v3591, 2
      %v3593 = vrot.slane %v3492, 7
      %v3594 = vrot.slane %v3593, 2
      %v3595 = vrot.slane %v3491, 7
      %v3596 = vrot.slane %v3595, 2
      %v3597 = vrot.slane %v3493, 7
      %v3598 = vrot.slane %v3597, 2
      %v3599 = vrot.slane %v3501, 7
      %v3600 = vrot.slane %v3599, 2
      %v3601 = vrot.slane %v3509, 7
      %v3602 = vrot.slane %v3601, 2
      %v3603 = vrot.slane %v3508, 7
      %v3604 = vrot.slane %v3603, 2
      %v3605 = vrot.slane %v3510, 7
      %v3606 = vrot.slane %v3605, 2
      %v3639 = vmax.f32 %v3382, %v3544
      %v3640 = vmax.f32 %v3390, %v3546
      %v3641 = vmax.f32 %v3389, %v3548
      %v3642 = vmax.f32 %v3391, %v3550
      %v3643 = vmax.f32 %v3399, %v3552
      %v3644 = vmax.f32 %v3407, %v3554
      %v3645 = vmax.f32 %v3406, %v3556
      %v3646 = vmax.f32 %v3408, %v3558
      %v3647 = vmax.f32 %v3416, %v3560
      %v3648 = vmax.f32 %v3424, %v3562
      %v3649 = vmax.f32 %v3423, %v3564
      %v3650 = vmax.f32 %v3425, %v3566
      %v3651 = vmax.f32 %v3433, %v3568
      %v3652 = vmax.f32 %v3441, %v3570
      %v3653 = vmax.f32 %v3440, %v3572
      %v3654 = vmax.f32 %v3442, %v3574
      %v3655 = vmax.f32 %v3450, %v3576
      %v3656 = vmax.f32 %v3458, %v3578
      %v3657 = vmax.f32 %v3457, %v3580
      %v3658 = vmax.f32 %v3459, %v3582
      %v3659 = vmax.f32 %v3467, %v3584
      %v3660 = vmax.f32 %v3475, %v3586
      %v3661 = vmax.f32 %v3474, %v3588
      %v3662 = vmax.f32 %v3476, %v3590
      %v3663 = vmax.f32 %v3484, %v3592
      %v3664 = vmax.f32 %v3492, %v3594
      %v3665 = vmax.f32 %v3491, %v3596
      %v3666 = vmax.f32 %v3493, %v3598
      %v3667 = vmax.f32 %v3501, %v3600
      %v3668 = vmax.f32 %v3509, %v3602
      %v3669 = vmax.f32 %v3508, %v3604
      %v3670 = vmax.f32 %v3510, %v3606
      %v3671 = vmax.f32 %v3639, %v3643
      %v3672 = vmax.f32 %v3640, %v3644
      %v3673 = vmax.f32 %v3641, %v3645
      %v3674 = vmax.f32 %v3642, %v3646
      %v3675 = vmax.f32 %v3647, %v3651
      %v3676 = vmax.f32 %v3648, %v3652
      %v3677 = vmax.f32 %v3649, %v3653
      %v3678 = vmax.f32 %v3650, %v3654
      %v3679 = vmax.f32 %v3655, %v3659
      %v3680 = vmax.f32 %v3656, %v3660
      %v3681 = vmax.f32 %v3657, %v3661
      %v3682 = vmax.f32 %v3658, %v3662
      %v3683 = vmax.f32 %v3663, %v3667
      %v3684 = vmax.f32 %v3664, %v3668
      %v3685 = vmax.f32 %v3665, %v3669
      %v3686 = vmax.f32 %v3666, %v3670
      %v3691 = vlaneseq
      %v3692 = vshrl.u32 %v3691, 7
      %v3693 = vsub.s32 0, %v3692
      %v3694 = vrot.slane %v3671, %v3693
      %v3695 = vlaneseq
      %v3696 = vshrl.u32 %v3695, 7
      %v3697 = vsub.s32 0, %v3696
      %v3698 = vrot.slane %v3672, %v3697
      %v3699 = vlaneseq
      %v3700 = vshrl.u32 %v3699, 7
      %v3701 = vsub.s32 0, %v3700
      %v3702 = vrot.slane %v3673, %v3701
      %v3703 = vlaneseq
      %v3704 = vshrl.u32 %v3703, 7
      %v3705 = vsub.s32 0, %v3704
      %v3706 = vrot.slane %v3674, %v3705
      %v3707 = vsel %vm2069, %v3698, %v3694
      %v3708 = vsel %vm2072, %v3702, %v3707
      %v3709 = vsel %vm2075, %v3706, %v3708
      %v3715 = vlaneseq
      %v3716 = vshrl.u32 %v3715, 7
      %v3717 = vsub.s32 0, %v3716
      %v3718 = vrot.slane %v3675, %v3717
      %v3719 = vlaneseq
      %v3720 = vshrl.u32 %v3719, 7
      %v3721 = vsub.s32 0, %v3720
      %v3722 = vrot.slane %v3676, %v3721
      %v3723 = vlaneseq
      %v3724 = vshrl.u32 %v3723, 7
      %v3725 = vsub.s32 0, %v3724
      %v3726 = vrot.slane %v3677, %v3725
      %v3727 = vlaneseq
      %v3728 = vshrl.u32 %v3727, 7
      %v3729 = vsub.s32 0, %v3728
      %v3730 = vrot.slane %v3678, %v3729
      %v3731 = vsel %vm2069, %v3722, %v3718
      %v3732 = vsel %vm2072, %v3726, %v3731
      %v3733 = vsel %vm2075, %v3730, %v3732
      %3734 = vrot.lane.b32.xlu0 %v3733, 64
      %v3735 = vpop.permute.xlu0 %3734
      %v3741 = vlaneseq
      %v3742 = vshrl.u32 %v3741, 7
      %v3743 = vsub.s32 0, %v3742
      %v3744 = vrot.slane %v3679, %v3743
      %v3745 = vlaneseq
      %v3746 = vshrl.u32 %v3745, 7
      %v3747 = vsub.s32 0, %v3746
      %v3748 = vrot.slane %v3680, %v3747
      %v3749 = vlaneseq
      %v3750 = vshrl.u32 %v3749, 7
      %v3751 = vsub.s32 0, %v3750
      %v3752 = vrot.slane %v3681, %v3751
      %v3753 = vlaneseq
      %v3754 = vshrl.u32 %v3753, 7
      %v3755 = vsub.s32 0, %v3754
      %v3756 = vrot.slane %v3682, %v3755
      %v3757 = vsel %vm2069, %v3748, %v3744
      %v3758 = vsel %vm2072, %v3752, %v3757
      %v3759 = vsel %vm2075, %v3756, %v3758
      %v3765 = vlaneseq
      %v3766 = vshrl.u32 %v3765, 7
      %v3767 = vsub.s32 0, %v3766
      %v3768 = vrot.slane %v3683, %v3767
      %v3769 = vlaneseq
      %v3770 = vshrl.u32 %v3769, 7
      %v3771 = vsub.s32 0, %v3770
      %v3772 = vrot.slane %v3684, %v3771
      %v3773 = vlaneseq
      %v3774 = vshrl.u32 %v3773, 7
      %v3775 = vsub.s32 0, %v3774
      %v3776 = vrot.slane %v3685, %v3775
      %v3777 = vlaneseq
      %v3778 = vshrl.u32 %v3777, 7
      %v3779 = vsub.s32 0, %v3778
      %v3780 = vrot.slane %v3686, %v3779
      %v3781 = vsel %vm2069, %v3772, %v3768
      %v3782 = vsel %vm2072, %v3776, %v3781
      %v3783 = vsel %vm2075, %v3780, %v3782
      %3784 = vrot.lane.b32.xlu0 %v3783, 64
      %v3785 = vpop.permute.xlu0 %3784
      %vm3787 = vcmask 523264
      %v3788 = vsel %vm3787, %v3709, %v3735
      %v3789 = vsel %vm3787, %v3759, %v3785
      %v3790 = vld [vmem:[%s2 + $0x250] sm:$0xf]
      %v3791 = vld [vmem:[%s2 + $0x254] sm:$0xf]
      %v3792 = vld [vmem:[%s2 + $0x258] sm:$0xf]
      %v3793 = vld [vmem:[%s2 + $0x25c] sm:$0xf]
      %v3794 = vld [vmem:[%s2 + $0x260] sm:$0xf]
      %v3795 = vld [vmem:[%s2 + $0x264] sm:$0xf]
      %v3796 = vld [vmem:[%s2 + $0x268] sm:$0xf]
      %v3797 = vld [vmem:[%s2 + $0x26c] sm:$0xf]
      %v3798 = vld [vmem:[%s2 + $0x270] sm:$0xf]
      %v3799 = vld [vmem:[%s2 + $0x274] sm:$0xf]
      %v3800 = vld [vmem:[%s2 + $0x278] sm:$0xf]
      %v3801 = vld [vmem:[%s2 + $0x27c] sm:$0xf]
      %v3802 = vld [vmem:[%s2 + $0x280] sm:$0xf]
      %v3803 = vld [vmem:[%s2 + $0x284] sm:$0xf]
      %v3804 = vld [vmem:[%s2 + $0x288] sm:$0xf]
      %v3805 = vld [vmem:[%s2 + $0x28c] sm:$0xf]
      %v3806 = vld [vmem:[%s2 + $0x290] sm:$0xf]
      %v3807 = vld [vmem:[%s2 + $0x294] sm:$0xf]
      %v3808 = vld [vmem:[%s2 + $0x298] sm:$0xf]
      %v3809 = vld [vmem:[%s2 + $0x29c] sm:$0xf]
      %v3810 = vld [vmem:[%s2 + $0x2a0] sm:$0xf]
      %v3811 = vld [vmem:[%s2 + $0x2a4] sm:$0xf]
      %v3812 = vld [vmem:[%s2 + $0x2a8] sm:$0xf]
      %v3813 = vld [vmem:[%s2 + $0x2ac] sm:$0xf]
      %v3814 = vld [vmem:[%s2 + $0x2b0] sm:$0xf]
      %v3815 = vld [vmem:[%s2 + $0x2b4] sm:$0xf]
      %v3816 = vld [vmem:[%s2 + $0x2b8] sm:$0xf]
      %v3817 = vld [vmem:[%s2 + $0x2bc] sm:$0xf]
      %v3818 = vld [vmem:[%s2 + $0x2c0] sm:$0xf]
      %v3819 = vld [vmem:[%s2 + $0x2c4] sm:$0xf]
      %v3820 = vld [vmem:[%s2 + $0x2c8] sm:$0xf]
      %v3821 = vld [vmem:[%s2 + $0x2cc] sm:$0xf]
      %v3822 = vpack.c.bf16 %v3788, %v3788
      %v3823 = vpack.c.bf16 %v3789, %v3789
      %v3824 = vld [vmem:[%s3 + $0x10] sm:$0x1]
      %v3825 = vlaneseq
      %v3826 = vshrl.u32 %v3825, 7
      %v3827 = vsub.s32 0, %v3826
      %v3828 = vrot.slane %v3824, %v3827
      %v3861 = vunpack.c.l.b16 %v3790
      %v3862 = vunpack.c.l.b16 %v3791
      %v3863 = vunpack.c.l.b16 %v3792
      %v3864 = vunpack.c.l.b16 %v3793
      %v3865 = vunpack.c.l.b16 %v3794
      %v3866 = vunpack.c.l.b16 %v3795
      %v3867 = vunpack.c.l.b16 %v3796
      %v3868 = vunpack.c.l.b16 %v3797
      %v3869 = vunpack.c.l.b16 %v3798
      %v3870 = vunpack.c.l.b16 %v3799
      %v3871 = vunpack.c.l.b16 %v3800
      %v3872 = vunpack.c.l.b16 %v3801
      %v3873 = vunpack.c.l.b16 %v3802
      %v3874 = vunpack.c.l.b16 %v3803
      %v3875 = vunpack.c.l.b16 %v3804
      %v3876 = vunpack.c.l.b16 %v3805
      %v3877 = vunpack.c.l.b16 %v3806
      %v3878 = vunpack.c.l.b16 %v3807
      %v3879 = vunpack.c.l.b16 %v3808
      %v3880 = vunpack.c.l.b16 %v3809
      %v3881 = vunpack.c.l.b16 %v3810
      %v3882 = vunpack.c.l.b16 %v3811
      %v3883 = vunpack.c.l.b16 %v3812
      %v3884 = vunpack.c.l.b16 %v3813
      %v3885 = vunpack.c.l.b16 %v3814
      %v3886 = vunpack.c.l.b16 %v3815
      %v3887 = vunpack.c.l.b16 %v3816
      %v3888 = vunpack.c.l.b16 %v3817
      %v3889 = vunpack.c.l.b16 %v3818
      %v3890 = vunpack.c.l.b16 %v3819
      %v3891 = vunpack.c.l.b16 %v3820
      %v3892 = vunpack.c.l.b16 %v3821
      %v3893 = vpack.c.b16 %v3862, %v3861
      %v3894 = vpack.c.b16 %v3864, %v3863
      %v3895 = vpack.c.b16 %v3866, %v3865
      %v3896 = vpack.c.b16 %v3868, %v3867
      %v3897 = vpack.c.b16 %v3870, %v3869
      %v3898 = vpack.c.b16 %v3872, %v3871
      %v3899 = vpack.c.b16 %v3874, %v3873
      %v3900 = vpack.c.b16 %v3876, %v3875
      %v3901 = vpack.c.b16 %v3878, %v3877
      %v3902 = vpack.c.b16 %v3880, %v3879
      %v3903 = vpack.c.b16 %v3882, %v3881
      %v3904 = vpack.c.b16 %v3884, %v3883
      %v3905 = vpack.c.b16 %v3886, %v3885
      %v3906 = vpack.c.b16 %v3888, %v3887
      %v3907 = vpack.c.b16 %v3890, %v3889
      %v3908 = vpack.c.b16 %v3892, %v3891
      %3925 = vmatprep.subr.bf16.mxu0 0
      %3926 = vmatpush1.bf16.msra.mxu0 %v3893
      %3927 = vmatprep.subr.bf16.mxu0 0
      %3928 = vmatpush1.bf16.msra.mxu0 %v3894
      %3929 = vmatprep.subr.bf16.mxu0 0
      %3930 = vmatpush1.bf16.msra.mxu0 %v3895
      %3931 = vmatprep.subr.bf16.mxu0 0
      %3932 = vmatpush1.bf16.msra.mxu0 %v3896
      %3933 = vmatprep.subr.bf16.mxu0 0
      %3934 = vmatpush1.bf16.msra.mxu0 %v3897
      %3935 = vmatprep.subr.bf16.mxu0 0
      %3936 = vmatpush1.bf16.msra.mxu0 %v3898
      %3937 = vmatprep.subr.bf16.mxu0 0
      %3938 = vmatpush1.bf16.msra.mxu0 %v3899
      %3939 = vmatprep.subr.bf16.mxu0 0
      %3940 = vmatpush1.bf16.msra.mxu0 %v3900
      %3941 = vmatprep.subr.bf16.mxu0 0
      %3942 = vmatpush1.bf16.msra.mxu0 %v3901
      %3943 = vmatprep.subr.bf16.mxu0 0
      %3944 = vmatpush1.bf16.msra.mxu0 %v3902
      %3945 = vmatprep.subr.bf16.mxu0 0
      %3946 = vmatpush1.bf16.msra.mxu0 %v3903
      %3947 = vmatprep.subr.bf16.mxu0 0
      %3948 = vmatpush1.bf16.msra.mxu0 %v3904
      %3949 = vmatprep.subr.bf16.mxu0 0
      %3950 = vmatpush1.bf16.msra.mxu0 %v3905
      %3951 = vmatprep.subr.bf16.mxu0 0
      %3952 = vmatpush1.bf16.msra.mxu0 %v3906
      %3953 = vmatprep.subr.bf16.mxu0 0
      %3954 = vmatpush1.bf16.msra.mxu0 %v3907
      %3955 = vmatprep.subr.bf16.mxu0 0
      %3956 = vmatpush1.bf16.msra.mxu0 %v3908
      %3957 = vmatprep.mubr.bf16.mxu0 %v3823
      %3958 = vmatmul.mubr.bf16.gmra.mrb[0].mxu0 %v3822
      %v3959 = vpop.f32.mrb[0].mxu0
      %v3960 = vadd.f32 %v3828, %v3959
      %v3961 = vpop.f32.mrb[0].mxu0
      %v3962 = vpop.f32.mrb[0].mxu0
      %v3963 = vpop.f32.mrb[0].mxu0
      %3964 = vdwg.mxu0
      %v3965 = vld [vmem:[%s2 + $0x2d0] sm:$0xf]
      %v3966 = vld [vmem:[%s2 + $0x2d4] sm:$0xf]
      %v3967 = vld [vmem:[%s2 + $0x2d8] sm:$0xf]
      %v3968 = vld [vmem:[%s2 + $0x2dc] sm:$0xf]
      %v3969 = vpack.c.bf16 %v3960, %v3960
      %v3970 = vld [vmem:[%s3 + $0x18] sm:$0x1]
      %v3971 = vlaneseq
      %v3972 = vshrl.u32 %v3971, 7
      %v3973 = vsub.s32 0, %v3972
      %v3974 = vrot.slane %v3970, %v3973
      %v3979 = vunpack.c.l.b16 %v3965
      %v3980 = vunpack.c.l.b16 %v3966
      %v3981 = vunpack.c.l.b16 %v3967
      %v3982 = vunpack.c.l.b16 %v3968
      %v3983 = vpack.c.b16 %v3980, %v3979
      %v3984 = vpack.c.b16 %v3982, %v3981
      %vm3987 = vcmask 261120
      %v3989 = vsel %vm3987, %v3969, 0
      %3991 = vmatprep.subr.bf16.mxu0 0
      %3992 = vmatpush1.bf16.msra.mxu0 %v3983
      %3993 = vmatprep.subr.bf16.mxu0 0
      %3994 = vmatpush1.bf16.msra.mxu0 %v3984
      %3995 = vmatprep.subr.bf16.mxu0 0
      %3996 = vmatpush1.bf16.msra.mxu0 0
      %3997 = vmatprep.subr.bf16.mxu0 0
      %3998 = vmatpush1.bf16.msra.mxu0 0
      %3999 = vmatprep.subr.bf16.mxu0 0
      %4000 = vmatpush1.bf16.msra.mxu0 0
      %4001 = vmatprep.subr.bf16.mxu0 0
      %4002 = vmatpush1.bf16.msra.mxu0 0
      %4003 = vmatprep.subr.bf16.mxu0 0
      %4004 = vmatpush1.bf16.msra.mxu0 0
      %4005 = vmatprep.subr.bf16.mxu0 0
      %4006 = vmatpush1.bf16.msra.mxu0 0
      %4007 = vmatprep.subr.bf16.mxu0 0
      %4008 = vmatpush1.bf16.msra.mxu0 0
      %4009 = vmatprep.subr.bf16.mxu0 0
      %4010 = vmatpush1.bf16.msra.mxu0 0
      %4011 = vmatprep.subr.bf16.mxu0 0
      %4012 = vmatpush1.bf16.msra.mxu0 0
      %4013 = vmatprep.subr.bf16.mxu0 0
      %4014 = vmatpush1.bf16.msra.mxu0 0
      %4015 = vmatprep.subr.bf16.mxu0 0
      %4016 = vmatpush1.bf16.msra.mxu0 0
      %4017 = vmatprep.subr.bf16.mxu0 0
      %4018 = vmatpush1.bf16.msra.mxu0 0
      %4019 = vmatprep.subr.bf16.mxu0 0
      %4020 = vmatpush1.bf16.msra.mxu0 0
      %4021 = vmatprep.subr.bf16.mxu0 0
      %4022 = vmatpush1.bf16.msra.mxu0 0
      %4023 = vmatprep.mubr.bf16.mxu0 0
      %4024 = vmatmul.mubr.bf16.gmra.mrb[0].mxu0 %v3989
      %v4025 = vpop.f32.mrb[0].mxu0
      %v4026 = vadd.f32 %v3974, %v4025
      %v4027 = vpop.f32.mrb[0].mxu0
      %v4028 = vpop.f32.mrb[0].mxu0
      %v4029 = vpop.f32.mrb[0].mxu0
      %4030 = vdwg.mxu0
      %v4031 = vpack.c.bf16 %v4026, %v4026
      %4033 = vrot.lane.b32.xlu0 %v4031, 96
      %v4034 = vpop.permute.xlu0 %4033
      %v4036 = vsel %vm3987, %v4031, 0
      %v4039 = vsel %vm3987, %v4034, 0
      %4041 = vmatprep.subr.bf16.mxu0 0
      %4042 = vmatpush1.bf16.xpose.msra.mxu0 %v4039
      %4043 = vmatprep.subr.bf16.mxu0 0
      %4044 = vmatpush1.bf16.xpose.msra.mxu0 0
      %4045 = vmatprep.subr.bf16.mxu0 0
      %4046 = vmatpush1.bf16.xpose.msra.mxu0 0
      %4047 = vmatprep.subr.bf16.mxu0 0
      %4048 = vmatpush1.bf16.xpose.msra.mxu0 0
      %4049 = vmatprep.subr.bf16.mxu0 0
      %4050 = vmatpush1.bf16.xpose.msra.mxu0 0
      %4051 = vmatprep.subr.bf16.mxu0 0
      %4052 = vmatpush1.bf16.xpose.msra.mxu0 0
      %4053 = vmatprep.subr.bf16.mxu0 0
      %4054 = vmatpush1.bf16.xpose.msra.mxu0 0
      %4055 = vmatprep.subr.bf16.mxu0 0
      %4056 = vmatpush1.bf16.xpose.msra.mxu0 0
      %4057 = vmatprep.subr.bf16.mxu0 0
      %4058 = vmatpush1.bf16.xpose.msra.mxu0 0
      %4059 = vmatprep.subr.bf16.mxu0 0
      %4060 = vmatpush1.bf16.xpose.msra.mxu0 0
      %4061 = vmatprep.subr.bf16.mxu0 0
      %4062 = vmatpush1.bf16.xpose.msra.mxu0 0
      %4063 = vmatprep.subr.bf16.mxu0 0
      %4064 = vmatpush1.bf16.xpose.msra.mxu0 0
      %4065 = vmatprep.subr.bf16.mxu0 0
      %4066 = vmatpush1.bf16.xpose.msra.mxu0 0
      %4067 = vmatprep.subr.bf16.mxu0 0
      %4068 = vmatpush1.bf16.xpose.msra.mxu0 0
      %4069 = vmatprep.subr.bf16.mxu0 0
      %4070 = vmatpush1.bf16.xpose.msra.mxu0 0
      %4071 = vmatprep.subr.bf16.mxu0 0
      %4072 = vmatpush1.bf16.xpose.msra.mxu0 0
      %4073 = vmatprep.mubr.bf16.mxu0 0
      %4074 = vmatmul.mubr.bf16.gmra.mrb[0].mxu0 %v4036
      %v4075 = vpop.f32.mrb[0].mxu0
      %v4076 = vadd.f32 0.0, %v4075
      %v4077 = vpop.f32.mrb[0].mxu0
      %v4078 = vpop.f32.mrb[0].mxu0
      %v4079 = vpop.f32.mrb[0].mxu0
      %4080 = vdwg.mxu0
      %v4081 = vmul.f32 %v4076, 0.17677669
      %vm4082 = vcmask 27648
      %v4083 = vsel %vm4082, %v4081, -inf
      %4084 = vmax.xlane.f32.xlu0 %v4083
      %v4085 = vpop.xlane.xlu0 %4084
      %v4086 = vsub.f32 %v4081, %v4085
      %v4087 = vmul.f32 %v4086, 1.442695
      %v4088 = vpow.pop %v4087
      %v4089 = vsel %vm4082, %v4088, 0.0
      %4090 = vadd.xlane.f32.xlu0 %v4089
      %v4091 = vpop.xlane.xlu0 %4090
      %v4092 = vrcp.pop %v4091
      %v4093 = vmul.f32 %v4088, %v4092
      %v4094 = vpack.c.bf16 %v4093, %v4093
      %4095 = vrot.lane.b32.xlu0 %v4031, 64
      %v4096 = vpop.permute.xlu0 %4095
      %vm4097 = vcmask 31744
      %v4099 = vsel %vm4097, %v4094, 0
      %vm4101 = vcmask 1041408
      %v4103 = vsel %vm4101, %v4096, 0
      %4105 = vmatprep.subr.bf16.mxu0 0
      %4106 = vmatpush1.bf16.msra.mxu0 %v4103
      %4107 = vmatprep.subr.bf16.mxu0 0
      %4108 = vmatpush1.bf16.msra.mxu0 0
      %4109 = vmatprep.subr.bf16.mxu0 0
      %4110 = vmatpush1.bf16.msra.mxu0 0
      %4111 = vmatprep.subr.bf16.mxu0 0
      %4112 = vmatpush1.bf16.msra.mxu0 0
      %4113 = vmatprep.subr.bf16.mxu0 0
      %4114 = vmatpush1.bf16.msra.mxu0 0
      %4115 = vmatprep.subr.bf16.mxu0 0
      %4116 = vmatpush1.bf16.msra.mxu0 0
      %4117 = vmatprep.subr.bf16.mxu0 0
      %4118 = vmatpush1.bf16.msra.mxu0 0
      %4119 = vmatprep.subr.bf16.mxu0 0
      %4120 = vmatpush1.bf16.msra.mxu0 0
      %4121 = vmatprep.subr.bf16.mxu0 0
      %4122 = vmatpush1.bf16.msra.mxu0 0
      %4123 = vmatprep.subr.bf16.mxu0 0
      %4124 = vmatpush1.bf16.msra.mxu0 0
      %4125 = vmatprep.subr.bf16.mxu0 0
      %4126 = vmatpush1.bf16.msra.mxu0 0
      %4127 = vmatprep.subr.bf16.mxu0 0
      %4128 = vmatpush1.bf16.msra.mxu0 0
      %4129 = vmatprep.subr.bf16.mxu0 0
      %4130 = vmatpush1.bf16.msra.mxu0 0
      %4131 = vmatprep.subr.bf16.mxu0 0
      %4132 = vmatpush1.bf16.msra.mxu0 0
      %4133 = vmatprep.subr.bf16.mxu0 0
      %4134 = vmatpush1.bf16.msra.mxu0 0
      %4135 = vmatprep.subr.bf16.mxu0 0
      %4136 = vmatpush1.bf16.msra.mxu0 0
      %4137 = vmatprep.mubr.bf16.mxu0 0
      %4138 = vmatmul.mubr.bf16.gmra.mrb[0].mxu0 %v4099
      %v4139 = vpop.f32.mrb[0].mxu0
      %v4140 = vadd.f32 0.0, %v4139
      %v4141 = vpop.f32.mrb[0].mxu0
      %v4142 = vpop.f32.mrb[0].mxu0
      %v4143 = vpop.f32.mrb[0].mxu0
      %4144 = vdwg.mxu0
      %v4145 = vld [vmem:[%s2 + $0x2e0] sm:$0xf]
      %v4146 = vld [vmem:[%s2 + $0x2e4] sm:$0xf]
      %v4147 = vld [vmem:[%s2 + $0x2e8] sm:$0xf]
      %v4148 = vld [vmem:[%s2 + $0x2ec] sm:$0xf]
      %v4149 = vpack.c.bf16 %v4140, %v4140
      %v4150 = vld [vmem:[%s3 + $0x20] sm:$0x1]
      %v4151 = vlaneseq
      %v4152 = vshrl.u32 %v4151, 7
      %v4153 = vsub.s32 0, %v4152
      %v4154 = vrot.slane %v4150, %v4153
      %v4159 = vunpack.c.l.b16 %v4145
      %v4160 = vunpack.c.l.b16 %v4146
      %v4161 = vunpack.c.l.b16 %v4147
      %v4162 = vunpack.c.l.b16 %v4148
      %v4163 = vpack.c.b16 %v4160, %v4159
      %v4164 = vpack.c.b16 %v4162, %v4161
      %v4168 = vsel %vm3987, %v4149, 0
      %4170 = vmatprep.subr.bf16.mxu0 0
      %4171 = vmatpush1.bf16.msra.mxu0 %v4163
      %4172 = vmatprep.subr.bf16.mxu0 0
      %4173 = vmatpush1.bf16.msra.mxu0 %v4164
      %4174 = vmatprep.subr.bf16.mxu0 0
      %4175 = vmatpush1.bf16.msra.mxu0 0
      %4176 = vmatprep.subr.bf16.mxu0 0
      %4177 = vmatpush1.bf16.msra.mxu0 0
      %4178 = vmatprep.subr.bf16.mxu0 0
      %4179 = vmatpush1.bf16.msra.mxu0 0
      %4180 = vmatprep.subr.bf16.mxu0 0
      %4181 = vmatpush1.bf16.msra.mxu0 0
      %4182 = vmatprep.subr.bf16.mxu0 0
      %4183 = vmatpush1.bf16.msra.mxu0 0
      %4184 = vmatprep.subr.bf16.mxu0 0
      %4185 = vmatpush1.bf16.msra.mxu0 0
      %4186 = vmatprep.subr.bf16.mxu0 0
      %4187 = vmatpush1.bf16.msra.mxu0 0
      %4188 = vmatprep.subr.bf16.mxu0 0
      %4189 = vmatpush1.bf16.msra.mxu0 0
      %4190 = vmatprep.subr.bf16.mxu0 0
      %4191 = vmatpush1.bf16.msra.mxu0 0
      %4192 = vmatprep.subr.bf16.mxu0 0
      %4193 = vmatpush1.bf16.msra.mxu0 0
      %4194 = vmatprep.subr.bf16.mxu0 0
      %4195 = vmatpush1.bf16.msra.mxu0 0
      %4196 = vmatprep.subr.bf16.mxu0 0
      %4197 = vmatpush1.bf16.msra.mxu0 0
      %4198 = vmatprep.subr.bf16.mxu0 0
      %4199 = vmatpush1.bf16.msra.mxu0 0
      %4200 = vmatprep.subr.bf16.mxu0 0
      %4201 = vmatpush1.bf16.msra.mxu0 0
      %4202 = vmatprep.mubr.bf16.mxu0 0
      %4203 = vmatmul.mubr.bf16.gmra.mrb[0].mxu0 %v4168
      %v4204 = vpop.f32.mrb[0].mxu0
      %v4205 = vadd.f32 %v4154, %v4204
      %v4206 = vpop.f32.mrb[0].mxu0
      %v4207 = vpop.f32.mrb[0].mxu0
      %v4208 = vpop.f32.mrb[0].mxu0
      %4209 = vdwg.mxu0
      %v4210 = vadd.f32 %v3960, %v4205
      %v4211 = vld [vmem:[%s3 + $0x28] sm:$0x1]
      %v4212 = vld [vmem:[%s3 + $0x30] sm:$0x1]
      %vm4213 = vcmask 257024
      %v4214 = vsel %vm4213, %v4210, 0.0
      %4215 = vadd.xlane.f32.xlu0 %v4214
      %v4216 = vpop.xlane.xlu0 %4215
      %v4217 = vrcp.pop 32.0
      %v4218 = vmul.f32 %v4216, %v4217
      %v4219 = vsub.f32 %v4210, %v4218
      %v4220 = vmul.f32 %v4219, %v4219
      %v4221 = vsel %vm4213, %v4220, 0.0
      %4222 = vadd.xlane.f32.xlu0 %v4221
      %v4223 = vpop.xlane.xlu0 %4222
      %v4224 = vmul.f32 %v4223, %v4217
      %v4225 = vadd.f32 %v4224, 1e-05
      %v4226 = vrsqrt.pop %v4225
      %v4227 = vmul.f32 %v4219, %v4226
      %v4228 = vlaneseq
      %v4229 = vshrl.u32 %v4228, 7
      %v4230 = vsub.s32 0, %v4229
      %v4231 = vrot.slane %v4211, %v4230
      %v4232 = vmul.f32 %v4227, %v4231
      %v4233 = vlaneseq
      %v4234 = vshrl.u32 %v4233, 7
      %v4235 = vsub.s32 0, %v4234
      %v4236 = vrot.slane %v4212, %v4235
      %v4237 = vadd.f32 %v4232, %v4236
      %v4238 = vld [vmem:[%s2 + $0x2f0] sm:$0xf]
      %v4239 = vld [vmem:[%s2 + $0x2f4] sm:$0xf]
      %v4240 = vld [vmem:[%s2 + $0x2f8] sm:$0xf]
      %v4241 = vld [vmem:[%s2 + $0x2fc] sm:$0xf]
      %v4242 = vpack.c.bf16 %v4237, %v4237
      %v4243 = vld [vmem:[%s3 + $0x38] sm:$0x1]
      %v4244 = vlaneseq
      %v4245 = vshrl.u32 %v4244, 7
      %v4246 = vsub.s32 0, %v4245
      %v4247 = vrot.slane %v4243, %v4246
      %v4252 = vunpack.c.l.b16 %v4238
      %v4253 = vunpack.c.l.b16 %v4239
      %v4254 = vunpack.c.l.b16 %v4240
      %v4255 = vunpack.c.l.b16 %v4241
      %v4256 = vpack.c.b16 %v4253, %v4252
      %v4257 = vpack.c.b16 %v4255, %v4254
      %v4261 = vsel %vm3987, %v4242, 0
      %4263 = vmatprep.subr.bf16.mxu0 0
      %4264 = vmatpush1.bf16.msra.mxu0 %v4256
      %4265 = vmatprep.subr.bf16.mxu0 0
      %4266 = vmatpush1.bf16.msra.mxu0 %v4257
      %4267 = vmatprep.subr.bf16.mxu0 0
      %4268 = vmatpush1.bf16.msra.mxu0 0
      %4269 = vmatprep.subr.bf16.mxu0 0
      %4270 = vmatpush1.bf16.msra.mxu0 0
      %4271 = vmatprep.subr.bf16.mxu0 0
      %4272 = vmatpush1.bf16.msra.mxu0 0
      %4273 = vmatprep.subr.bf16.mxu0 0
      %4274 = vmatpush1.bf16.msra.mxu0 0
      %4275 = vmatprep.subr.bf16.mxu0 0
      %4276 = vmatpush1.bf16.msra.mxu0 0
      %4277 = vmatprep.subr.bf16.mxu0 0
      %4278 = vmatpush1.bf16.msra.mxu0 0
      %4279 = vmatprep.subr.bf16.mxu0 0
      %4280 = vmatpush1.bf16.msra.mxu0 0
      %4281 = vmatprep.subr.bf16.mxu0 0
      %4282 = vmatpush1.bf16.msra.mxu0 0
      %4283 = vmatprep.subr.bf16.mxu0 0
      %4284 = vmatpush1.bf16.msra.mxu0 0
      %4285 = vmatprep.subr.bf16.mxu0 0
      %4286 = vmatpush1.bf16.msra.mxu0 0
      %4287 = vmatprep.subr.bf16.mxu0 0
      %4288 = vmatpush1.bf16.msra.mxu0 0
      %4289 = vmatprep.subr.bf16.mxu0 0
      %4290 = vmatpush1.bf16.msra.mxu0 0
      %4291 = vmatprep.subr.bf16.mxu0 0
      %4292 = vmatpush1.bf16.msra.mxu0 0
      %4293 = vmatprep.subr.bf16.mxu0 0
      %4294 = vmatpush1.bf16.msra.mxu0 0
      %4295 = vmatprep.mubr.bf16.mxu0 0
      %4296 = vmatmul.mubr.bf16.gmra.mrb[0].mxu0 %v4261
      %v4297 = vpop.f32.mrb[0].mxu0
      %v4298 = vadd.f32 %v4247, %v4297
      %v4299 = vpop.f32.mrb[0].mxu0
      %v4300 = vpop.f32.mrb[0].mxu0
      %v4301 = vpop.f32.mrb[0].mxu0
      %4302 = vdwg.mxu0
      %v4303 = vmax.f32 %v4298, 0.0
      %v4304 = vld [vmem:[%s2 + $0x300] sm:$0xf]
      %v4305 = vld [vmem:[%s2 + $0x304] sm:$0xf]
      %v4306 = vld [vmem:[%s2 + $0x308] sm:$0xf]
      %v4307 = vld [vmem:[%s2 + $0x30c] sm:$0xf]
      %v4308 = vld [vmem:[%s2 + $0x310] sm:$0xf]
      %v4309 = vld [vmem:[%s2 + $0x314] sm:$0xf]
      %v4310 = vld [vmem:[%s2 + $0x318] sm:$0xf]
      %v4311 = vld [vmem:[%s2 + $0x31c] sm:$0xf]
      %v4312 = vpack.c.bf16 %v4303, %v4303
      %v4313 = vld [vmem:[%s3 + $0x40] sm:$0x1]
      %v4314 = vlaneseq
      %v4315 = vshrl.u32 %v4314, 7
      %v4316 = vsub.s32 0, %v4315
      %v4317 = vrot.slane %v4313, %v4316
      %v4326 = vunpack.c.l.b16 %v4304
      %v4327 = vunpack.c.l.b16 %v4305
      %v4328 = vunpack.c.l.b16 %v4306
      %v4329 = vunpack.c.l.b16 %v4307
      %v4330 = vunpack.c.l.b16 %v4308
      %v4331 = vunpack.c.l.b16 %v4309
      %v4332 = vunpack.c.l.b16 %v4310
      %v4333 = vunpack.c.l.b16 %v4311
      %v4334 = vpack.c.b16 %v4327, %v4326
      %v4335 = vpack.c.b16 %v4329, %v4328
      %v4336 = vpack.c.b16 %v4331, %v4330
      %v4337 = vpack.c.b16 %v4333, %v4332
      %v4343 = vsel %vm3787, %v4312, 0
      %4345 = vmatprep.subr.bf16.mxu0 0
      %4346 = vmatpush1.bf16.msra.mxu0 %v4334
      %4347 = vmatprep.subr.bf16.mxu0 0
      %4348 = vmatpush1.bf16.msra.mxu0 %v4335
      %4349 = vmatprep.subr.bf16.mxu0 0
      %4350 = vmatpush1.bf16.msra.mxu0 %v4336
      %4351 = vmatprep.subr.bf16.mxu0 0
      %4352 = vmatpush1.bf16.msra.mxu0 %v4337
      %4353 = vmatprep.subr.bf16.mxu0 0
      %4354 = vmatpush1.bf16.msra.mxu0 0
      %4355 = vmatprep.subr.bf16.mxu0 0
      %4356 = vmatpush1.bf16.msra.mxu0 0
      %4357 = vmatprep.subr.bf16.mxu0 0
      %4358 = vmatpush1.bf16.msra.mxu0 0
      %4359 = vmatprep.subr.bf16.mxu0 0
      %4360 = vmatpush1.bf16.msra.mxu0 0
      %4361 = vmatprep.subr.bf16.mxu0 0
      %4362 = vmatpush1.bf16.msra.mxu0 0
      %4363 = vmatprep.subr.bf16.mxu0 0
      %4364 = vmatpush1.bf16.msra.mxu0 0
      %4365 = vmatprep.subr.bf16.mxu0 0
      %4366 = vmatpush1.bf16.msra.mxu0 0
      %4367 = vmatprep.subr.bf16.mxu0 0
      %4368 = vmatpush1.bf16.msra.mxu0 0
      %4369 = vmatprep.subr.bf16.mxu0 0
      %4370 = vmatpush1.bf16.msra.mxu0 0
      %4371 = vmatprep.subr.bf16.mxu0 0
      %4372 = vmatpush1.bf16.msra.mxu0 0
      %4373 = vmatprep.subr.bf16.mxu0 0
      %4374 = vmatpush1.bf16.msra.mxu0 0
      %4375 = vmatprep.subr.bf16.mxu0 0
      %4376 = vmatpush1.bf16.msra.mxu0 0
      %4377 = vmatprep.mubr.bf16.mxu0 0
      %4378 = vmatmul.mubr.bf16.gmra.mrb[0].mxu0 %v4343
      %v4379 = vpop.f32.mrb[0].mxu0
      %v4380 = vadd.f32 %v4317, %v4379
      %v4381 = vpop.f32.mrb[0].mxu0
      %v4382 = vpop.f32.mrb[0].mxu0
      %v4383 = vpop.f32.mrb[0].mxu0
      %4384 = vdwg.mxu0
      %v4385 = vadd.f32 %v4237, %v4380
      %v4386 = vld [vmem:[%s3 + $0x48] sm:$0x1]
      %v4387 = vld [vmem:[%s3 + $0x50] sm:$0x1]
      %v4388 = vsel %vm4213, %v4385, 0.0
      %4389 = vadd.xlane.f32.xlu0 %v4388
      %v4390 = vpop.xlane.xlu0 %4389
      %v4391 = vmul.f32 %v4390, %v4217
      %v4392 = vsub.f32 %v4385, %v4391
      %v4393 = vmul.f32 %v4392, %v4392
      %v4394 = vsel %vm4213, %v4393, 0.0
      %4395 = vadd.xlane.f32.xlu0 %v4394
      %v4396 = vpop.xlane.xlu0 %4395
      %v4397 = vmul.f32 %v4396, %v4217
      %v4398 = vadd.f32 %v4397, 1e-05
      %v4399 = vrsqrt.pop %v4398
      %v4400 = vmul.f32 %v4392, %v4399
      %v4401 = vlaneseq
      %v4402 = vshrl.u32 %v4401, 7
      %v4403 = vsub.s32 0, %v4402
      %v4404 = vrot.slane %v4386, %v4403
      %v4405 = vmul.f32 %v4400, %v4404
      %v4406 = vlaneseq
      %v4407 = vshrl.u32 %v4406, 7
      %v4408 = vsub.s32 0, %v4407
      %v4409 = vrot.slane %v4387, %v4408
      %v4410 = vadd.f32 %v4405, %v4409
      %v4411 = vlaneseq
      %v4412 = vand.u32 %v4411, 127
      %s4413 = smul.u32 %s23, 128
      %s4414 = sld [smem:[#allocation3 + %s4413]]
      %v4415 = vstv %s4414
      %vm4416 = vcmp.eq.s32.totalorder %v4412, %v4415
      %v4417 = vsel %vm4416, 1, 0
      %v4418 = vcvt.s32.f32 %v4417
      %s4419 = sadd.s32 %s4413, 1
      %s4420 = sld [smem:[#allocation3 + %s4419]]
      %v4421 = vstv %s4420
      %vm4422 = vcmp.eq.s32.totalorder %v4412, %v4421
      %v4423 = vsel %vm4422, 1, 0
      %v4424 = vcvt.s32.f32 %v4423
      %s4425 = sadd.s32 %s4413, 2
      %s4426 = sld [smem:[#allocation3 + %s4425]]
      %v4427 = vstv %s4426
      %vm4428 = vcmp.eq.s32.totalorder %v4412, %v4427
      %v4429 = vsel %vm4428, 1, 0
      %v4430 = vcvt.s32.f32 %v4429
      %s4431 = sadd.s32 %s4413, 3
      %s4432 = sld [smem:[#allocation3 + %s4431]]
      %v4433 = vstv %s4432
      %vm4434 = vcmp.eq.s32.totalorder %v4412, %v4433
      %v4435 = vsel %vm4434, 1, 0
      %v4436 = vcvt.s32.f32 %v4435
      %s4437 = sadd.s32 %s4413, 4
      %s4438 = sld [smem:[#allocation3 + %s4437]]
      %v4439 = vstv %s4438
      %vm4440 = vcmp.eq.s32.totalorder %v4412, %v4439
      %v4441 = vsel %vm4440, 1, 0
      %v4442 = vcvt.s32.f32 %v4441
      %vm4443 = vcmask 1040384
      %v4444 = vsel %vm4443, %v4418, %v4424
      %v4445 = vsel %vm4101, %v4444, %v4430
      %vm4446 = vcmask 1042432
      %v4447 = vsel %vm4446, %v4445, %v4436
      %vm4448 = vcmask 1043456
      %v4449 = vsel %vm4448, %v4447, %v4442
      %vm4450 = vcmask 7168
      %v4451 = vsel %vm4450, %v4415, %v4421
      %vm4452 = vcmask 15360
      %v4453 = vsel %vm4452, %v4451, %v4427
      %vm4454 = vcmask 23552
      %v4455 = vsel %vm4454, %v4453, %v4433
      %v4456 = vsel %vm4097, %v4455, %v4439
      %v4457 = vlaneseq
      %v4458 = vshrl.u32 %v4457, 7
      %vm4459 = vcmp.le.s32.totalorder %v4412, %v4458
      %vm4460 = vcmp.ne.s32.totalorder %v4456, 0
      %v4461 = vsel %vm4460, 1, 0
      %v4462 = vlaneseq
      %v4463 = vshrl.u32 %v4462, 7
      %v4464 = vsub.s32 0, %v4463
      %v4465 = vrot.slane %v4461, %v4464
      %vm4466 = vcmp.eq.s32.totalorder %v4465, 1
      %vm4467 = vmand %vm4459, %vm4466
      %v4468 = vld [vmem:[%s2 + $0x320] sm:$0xf]
      %v4469 = vld [vmem:[%s2 + $0x324] sm:$0x3]
      %v4470 = vpack.c.bf16 %v4449, %v4449
      %v4473 = vunpack.c.l.b16 %v4468
      %v4474 = vunpack.c.l.b16 %v4469
      %v4475 = vpack.c.b16 %v4474, %v4473
      %vm4476 = vcmask 89088
      %v4478 = vsel %vm4476, %v4470, 0
      %v4481 = vand.u32 %v4475, %v399
      %4483 = vmatprep.subr.bf16.mxu0 0
      %4484 = vmatpush1.bf16.msra.mxu0 %v4481
      %4485 = vmatprep.subr.bf16.mxu0 0
      %4486 = vmatpush1.bf16.msra.mxu0 0
      %4487 = vmatprep.subr.bf16.mxu0 0
      %4488 = vmatpush1.bf16.msra.mxu0 0
      %4489 = vmatprep.subr.bf16.mxu0 0
      %4490 = vmatpush1.bf16.msra.mxu0 0
      %4491 = vmatprep.subr.bf16.mxu0 0
      %4492 = vmatpush1.bf16.msra.mxu0 0
      %4493 = vmatprep.subr.bf16.mxu0 0
      %4494 = vmatpush1.bf16.msra.mxu0 0
      %4495 = vmatprep.subr.bf16.mxu0 0
      %4496 = vmatpush1.bf16.msra.mxu0 0
      %4497 = vmatprep.subr.bf16.mxu0 0
      %4498 = vmatpush1.bf16.msra.mxu0 0
      %4499 = vmatprep.subr.bf16.mxu0 0
      %4500 = vmatpush1.bf16.msra.mxu0 0
      %4501 = vmatprep.subr.bf16.mxu0 0
      %4502 = vmatpush1.bf16.msra.mxu0 0
      %4503 = vmatprep.subr.bf16.mxu0 0
      %4504 = vmatpush1.bf16.msra.mxu0 0
      %4505 = vmatprep.subr.bf16.mxu0 0
      %4506 = vmatpush1.bf16.msra.mxu0 0
      %4507 = vmatprep.subr.bf16.mxu0 0
      %4508 = vmatpush1.bf16.msra.mxu0 0
      %4509 = vmatprep.subr.bf16.mxu0 0
      %4510 = vmatpush1.bf16.msra.mxu0 0
      %4511 = vmatprep.subr.bf16.mxu0 0
      %4512 = vmatpush1.bf16.msra.mxu0 0
      %4513 = vmatprep.subr.bf16.mxu0 0
      %4514 = vmatpush1.bf16.msra.mxu0 0
      %4515 = vmatprep.mubr.bf16.mxu0 0
      %4516 = vmatmul.mubr.bf16.gmra.mrb[0].mxu0 %v4478
      %v4517 = vpop.f32.mrb[0].mxu0
      %v4518 = vadd.f32 0.0, %v4517
      %v4519 = vpop.f32.mrb[0].mxu0
      %v4520 = vpop.f32.mrb[0].mxu0
      %v4521 = vpop.f32.mrb[0].mxu0
      %4522 = vdwg.mxu0
      %v4523 = vmul.f32 %v4518, 5.656854
      %v4524 = vld [vmem:[%s3 + $0x58] sm:$0x1f]
      %v4525 = vadd.f32 %v4523, %v4524
      %v4526 = vld [vmem:[%s2 + $0x328] sm:$0xf]
      %v4527 = vld [vmem:[%s2 + $0x32c] sm:$0xf]
      %v4528 = vld [vmem:[%s2 + $0x330] sm:$0xf]
      %v4529 = vld [vmem:[%s2 + $0x334] sm:$0xf]
      %v4530 = vpack.c.bf16 %v4525, %v4525
      %v4531 = vld [vmem:[%s3 + $0x68] sm:$0x1]
      %v4532 = vlaneseq
      %v4533 = vshrl.u32 %v4532, 7
      %v4534 = vsub.s32 0, %v4533
      %v4535 = vrot.slane %v4531, %v4534
      %v4540 = vunpack.c.l.b16 %v4526
      %v4541 = vunpack.c.l.b16 %v4527
      %v4542 = vunpack.c.l.b16 %v4528
      %v4543 = vunpack.c.l.b16 %v4529
      %v4544 = vpack.c.b16 %v4541, %v4540
      %v4545 = vpack.c.b16 %v4543, %v4542
      %v4549 = vsel %vm3987, %v4530, 0
      %4551 = vmatprep.subr.bf16.mxu0 0
      %4552 = vmatpush1.bf16.msra.mxu0 %v4544
      %4553 = vmatprep.subr.bf16.mxu0 0
      %4554 = vmatpush1.bf16.msra.mxu0 %v4545
      %4555 = vmatprep.subr.bf16.mxu0 0
      %4556 = vmatpush1.bf16.msra.mxu0 0
      %4557 = vmatprep.subr.bf16.mxu0 0
      %4558 = vmatpush1.bf16.msra.mxu0 0
      %4559 = vmatprep.subr.bf16.mxu0 0
      %4560 = vmatpush1.bf16.msra.mxu0 0
      %4561 = vmatprep.subr.bf16.mxu0 0
      %4562 = vmatpush1.bf16.msra.mxu0 0
      %4563 = vmatprep.subr.bf16.mxu0 0
      %4564 = vmatpush1.bf16.msra.mxu0 0
      %4565 = vmatprep.subr.bf16.mxu0 0
      %4566 = vmatpush1.bf16.msra.mxu0 0
      %4567 = vmatprep.subr.bf16.mxu0 0
      %4568 = vmatpush1.bf16.msra.mxu0 0
      %4569 = vmatprep.subr.bf16.mxu0 0
      %4570 = vmatpush1.bf16.msra.mxu0 0
      %4571 = vmatprep.subr.bf16.mxu0 0
      %4572 = vmatpush1.bf16.msra.mxu0 0
      %4573 = vmatprep.subr.bf16.mxu0 0
      %4574 = vmatpush1.bf16.msra.mxu0 0
      %4575 = vmatprep.subr.bf16.mxu0 0
      %4576 = vmatpush1.bf16.msra.mxu0 0
      %4577 = vmatprep.subr.bf16.mxu0 0
      %4578 = vmatpush1.bf16.msra.mxu0 0
      %4579 = vmatprep.subr.bf16.mxu0 0
      %4580 = vmatpush1.bf16.msra.mxu0 0
      %4581 = vmatprep.subr.bf16.mxu0 0
      %4582 = vmatpush1.bf16.msra.mxu0 0
      %4583 = vmatprep.mubr.bf16.mxu0 0
      %4584 = vmatmul.mubr.bf16.gmra.mrb[0].mxu0 %v4549
      %v4585 = vpop.f32.mrb[0].mxu0
      %v4586 = vadd.f32 %v4535, %v4585
      %v4587 = vpop.f32.mrb[0].mxu0
      %v4588 = vpop.f32.mrb[0].mxu0
      %v4589 = vpop.f32.mrb[0].mxu0
      %4590 = vdwg.mxu0
      %v4591 = vpack.c.bf16 %v4586, %v4586
      %4593 = vrot.lane.b32.xlu0 %v4591, 96
      %v4594 = vpop.permute.xlu0 %4593
      %v4596 = vsel %vm3987, %v4591, 0
      %v4599 = vsel %vm3987, %v4594, 0
      %4601 = vmatprep.subr.bf16.mxu0 0
      %4602 = vmatpush1.bf16.xpose.msra.mxu0 %v4599
      %4603 = vmatprep.subr.bf16.mxu0 0
      %4604 = vmatpush1.bf16.xpose.msra.mxu0 0
      %4605 = vmatprep.subr.bf16.mxu0 0
      %4606 = vmatpush1.bf16.xpose.msra.mxu0 0
      %4607 = vmatprep.subr.bf16.mxu0 0
      %4608 = vmatpush1.bf16.xpose.msra.mxu0 0
      %4609 = vmatprep.subr.bf16.mxu0 0
      %4610 = vmatpush1.bf16.xpose.msra.mxu0 0
      %4611 = vmatprep.subr.bf16.mxu0 0
      %4612 = vmatpush1.bf16.xpose.msra.mxu0 0
      %4613 = vmatprep.subr.bf16.mxu0 0
      %4614 = vmatpush1.bf16.xpose.msra.mxu0 0
      %4615 = vmatprep.subr.bf16.mxu0 0
      %4616 = vmatpush1.bf16.xpose.msra.mxu0 0
      %4617 = vmatprep.subr.bf16.mxu0 0
      %4618 = vmatpush1.bf16.xpose.msra.mxu0 0
      %4619 = vmatprep.subr.bf16.mxu0 0
      %4620 = vmatpush1.bf16.xpose.msra.mxu0 0
      %4621 = vmatprep.subr.bf16.mxu0 0
      %4622 = vmatpush1.bf16.xpose.msra.mxu0 0
      %4623 = vmatprep.subr.bf16.mxu0 0
      %4624 = vmatpush1.bf16.xpose.msra.mxu0 0
      %4625 = vmatprep.subr.bf16.mxu0 0
      %4626 = vmatpush1.bf16.xpose.msra.mxu0 0
      %4627 = vmatprep.subr.bf16.mxu0 0
      %4628 = vmatpush1.bf16.xpose.msra.mxu0 0
      %4629 = vmatprep.subr.bf16.mxu0 0
      %4630 = vmatpush1.bf16.xpose.msra.mxu0 0
      %4631 = vmatprep.subr.bf16.mxu0 0
      %4632 = vmatpush1.bf16.xpose.msra.mxu0 0
      %4633 = vmatprep.mubr.bf16.mxu0 0
      %4634 = vmatmul.mubr.bf16.gmra.mrb[0].mxu0 %v4596
      %v4635 = vpop.f32.mrb[0].mxu0
      %v4636 = vadd.f32 0.0, %v4635
      %v4637 = vpop.f32.mrb[0].mxu0
      %v4638 = vpop.f32.mrb[0].mxu0
      %v4639 = vpop.f32.mrb[0].mxu0
      %4640 = vdwg.mxu0
      %v4641 = vmul.f32 %v4636, 0.17677669
      %v4642 = vsel %vm4467, %v4641, -1e+10
      %vm4643 = vcmask 36864
      %v4644 = vsel %vm4643, %v4642, -inf
      %4645 = vmax.xlane.f32.xlu0 %v4644
      %v4646 = vpop.xlane.xlu0 %4645
      %v4647 = vsub.f32 %v4642, %v4646
      %v4648 = vmul.f32 %v4647, 1.442695
      %v4649 = vpow.pop %v4648
      %v4650 = vsel %vm4643, %v4649, 0.0
      %4651 = vadd.xlane.f32.xlu0 %v4650
      %v4652 = vpop.xlane.xlu0 %4651
      %v4653 = vrcp.pop %v4652
      %v4654 = vmul.f32 %v4649, %v4653
      %v4655 = vpack.c.bf16 %v4654, %v4654
      %4656 = vrot.lane.b32.xlu0 %v4591, 64
      %v4657 = vpop.permute.xlu0 %4656
      %vm4658 = vcmask 39936
      %v4660 = vsel %vm4658, %v4655, 0
      %v4662 = vsel %vm4101, 4294967295, 65535
      %v4663 = vsel %vm4446, %v4662, 0
      %v4665 = vand.u32 %v4657, %v4663
      %4667 = vmatprep.subr.bf16.mxu0 0
      %4668 = vmatpush1.bf16.msra.mxu0 %v4665
      %4669 = vmatprep.subr.bf16.mxu0 0
      %4670 = vmatpush1.bf16.msra.mxu0 0
      %4671 = vmatprep.subr.bf16.mxu0 0
      %4672 = vmatpush1.bf16.msra.mxu0 0
      %4673 = vmatprep.subr.bf16.mxu0 0
      %4674 = vmatpush1.bf16.msra.mxu0 0
      %4675 = vmatprep.subr.bf16.mxu0 0
      %4676 = vmatpush1.bf16.msra.mxu0 0
      %4677 = vmatprep.subr.bf16.mxu0 0
      %4678 = vmatpush1.bf16.msra.mxu0 0
      %4679 = vmatprep.subr.bf16.mxu0 0
      %4680 = vmatpush1.bf16.msra.mxu0 0
      %4681 = vmatprep.subr.bf16.mxu0 0
      %4682 = vmatpush1.bf16.msra.mxu0 0
      %4683 = vmatprep.subr.bf16.mxu0 0
      %4684 = vmatpush1.bf16.msra.mxu0 0
      %4685 = vmatprep.subr.bf16.mxu0 0
      %4686 = vmatpush1.bf16.msra.mxu0 0
      %4687 = vmatprep.subr.bf16.mxu0 0
      %4688 = vmatpush1.bf16.msra.mxu0 0
      %4689 = vmatprep.subr.bf16.mxu0 0
      %4690 = vmatpush1.bf16.msra.mxu0 0
      %4691 = vmatprep.subr.bf16.mxu0 0
      %4692 = vmatpush1.bf16.msra.mxu0 0
      %4693 = vmatprep.subr.bf16.mxu0 0
      %4694 = vmatpush1.bf16.msra.mxu0 0
      %4695 = vmatprep.subr.bf16.mxu0 0
      %4696 = vmatpush1.bf16.msra.mxu0 0
      %4697 = vmatprep.subr.bf16.mxu0 0
      %4698 = vmatpush1.bf16.msra.mxu0 0
      %4699 = vmatprep.mubr.bf16.mxu0 0
      %4700 = vmatmul.mubr.bf16.gmra.mrb[0].mxu0 %v4660
      %v4701 = vpop.f32.mrb[0].mxu0
      %v4702 = vadd.f32 0.0, %v4701
      %v4703 = vpop.f32.mrb[0].mxu0
      %v4704 = vpop.f32.mrb[0].mxu0
      %v4705 = vpop.f32.mrb[0].mxu0
      %4706 = vdwg.mxu0
      %v4707 = vld [vmem:[%s2 + $0x338] sm:$0xf]
      %v4708 = vld [vmem:[%s2 + $0x33c] sm:$0xf]
      %v4709 = vld [vmem:[%s2 + $0x340] sm:$0xf]
      %v4710 = vld [vmem:[%s2 + $0x344] sm:$0xf]
      %v4711 = vpack.c.bf16 %v4702, %v4702
      %v4712 = vld [vmem:[%s3 + $0x70] sm:$0x1]
      %v4713 = vlaneseq
      %v4714 = vshrl.u32 %v4713, 7
      %v4715 = vsub.s32 0, %v4714
      %v4716 = vrot.slane %v4712, %v4715
      %v4721 = vunpack.c.l.b16 %v4707
      %v4722 = vunpack.c.l.b16 %v4708
      %v4723 = vunpack.c.l.b16 %v4709
      %v4724 = vunpack.c.l.b16 %v4710
      %v4725 = vpack.c.b16 %v4722, %v4721
      %v4726 = vpack.c.b16 %v4724, %v4723
      %v4730 = vsel %vm3987, %v4711, 0
      %4732 = vmatprep.subr.bf16.mxu0 0
      %4733 = vmatpush1.bf16.msra.mxu0 %v4725
      %4734 = vmatprep.subr.bf16.mxu0 0
      %4735 = vmatpush1.bf16.msra.mxu0 %v4726
      %4736 = vmatprep.subr.bf16.mxu0 0
      %4737 = vmatpush1.bf16.msra.mxu0 0
      %4738 = vmatprep.subr.bf16.mxu0 0
      %4739 = vmatpush1.bf16.msra.mxu0 0
      %4740 = vmatprep.subr.bf16.mxu0 0
      %4741 = vmatpush1.bf16.msra.mxu0 0
      %4742 = vmatprep.subr.bf16.mxu0 0
      %4743 = vmatpush1.bf16.msra.mxu0 0
      %4744 = vmatprep.subr.bf16.mxu0 0
      %4745 = vmatpush1.bf16.msra.mxu0 0
      %4746 = vmatprep.subr.bf16.mxu0 0
      %4747 = vmatpush1.bf16.msra.mxu0 0
      %4748 = vmatprep.subr.bf16.mxu0 0
      %4749 = vmatpush1.bf16.msra.mxu0 0
      %4750 = vmatprep.subr.bf16.mxu0 0
      %4751 = vmatpush1.bf16.msra.mxu0 0
      %4752 = vmatprep.subr.bf16.mxu0 0
      %4753 = vmatpush1.bf16.msra.mxu0 0
      %4754 = vmatprep.subr.bf16.mxu0 0
      %4755 = vmatpush1.bf16.msra.mxu0 0
      %4756 = vmatprep.subr.bf16.mxu0 0
      %4757 = vmatpush1.bf16.msra.mxu0 0
      %4758 = vmatprep.subr.bf16.mxu0 0
      %4759 = vmatpush1.bf16.msra.mxu0 0
      %4760 = vmatprep.subr.bf16.mxu0 0
      %4761 = vmatpush1.bf16.msra.mxu0 0
      %4762 = vmatprep.subr.bf16.mxu0 0
      %4763 = vmatpush1.bf16.msra.mxu0 0
      %4764 = vmatprep.mubr.bf16.mxu0 0
      %4765 = vmatmul.mubr.bf16.gmra.mrb[0].mxu0 %v4730
      %v4766 = vpop.f32.mrb[0].mxu0
      %v4767 = vadd.f32 %v4716, %v4766
      %v4768 = vpop.f32.mrb[0].mxu0
      %v4769 = vpop.f32.mrb[0].mxu0
      %v4770 = vpop.f32.mrb[0].mxu0
      %4771 = vdwg.mxu0
      %v4772 = vadd.f32 %v4525, %v4767
      %v4773 = vld [vmem:[%s3 + $0x78] sm:$0x1]
      %v4774 = vld [vmem:[%s3 + $0x80] sm:$0x1]
      %vm4775 = vcmask 258048
      %v4776 = vsel %vm4775, %v4772, 0.0
      %4777 = vadd.xlane.f32.xlu0 %v4776
      %v4778 = vpop.xlane.xlu0 %4777
      %v4779 = vmul.f32 %v4778, %v4217
      %v4780 = vsub.f32 %v4772, %v4779
      %v4781 = vmul.f32 %v4780, %v4780
      %v4782 = vsel %vm4775, %v4781, 0.0
      %4783 = vadd.xlane.f32.xlu0 %v4782
      %v4784 = vpop.xlane.xlu0 %4783
      %v4785 = vmul.f32 %v4784, %v4217
      %v4786 = vadd.f32 %v4785, 1e-05
      %v4787 = vrsqrt.pop %v4786
      %v4788 = vmul.f32 %v4780, %v4787
      %v4789 = vlaneseq
      %v4790 = vshrl.u32 %v4789, 7
      %v4791 = vsub.s32 0, %v4790
      %v4792 = vrot.slane %v4773, %v4791
      %v4793 = vmul.f32 %v4788, %v4792
      %v4794 = vlaneseq
      %v4795 = vshrl.u32 %v4794, 7
      %v4796 = vsub.s32 0, %v4795
      %v4797 = vrot.slane %v4774, %v4796
      %v4798 = vadd.f32 %v4793, %v4797
      %v4799 = vld [vmem:[%s2 + $0x348] sm:$0xf]
      %v4800 = vld [vmem:[%s2 + $0x34c] sm:$0xf]
      %v4801 = vld [vmem:[%s2 + $0x350] sm:$0xf]
      %v4802 = vld [vmem:[%s2 + $0x354] sm:$0xf]
      %v4803 = vpack.c.bf16 %v4798, %v4798
      %v4804 = vld [vmem:[%s3 + $0x88] sm:$0x1]
      %v4805 = vlaneseq
      %v4806 = vshrl.u32 %v4805, 7
      %v4807 = vsub.s32 0, %v4806
      %v4808 = vrot.slane %v4804, %v4807
      %v4813 = vunpack.c.l.b16 %v4799
      %v4814 = vunpack.c.l.b16 %v4800
      %v4815 = vunpack.c.l.b16 %v4801
      %v4816 = vunpack.c.l.b16 %v4802
      %v4817 = vpack.c.b16 %v4814, %v4813
      %v4818 = vpack.c.b16 %v4816, %v4815
      %v4822 = vsel %vm3987, %v4803, 0
      %4824 = vmatprep.subr.bf16.mxu0 0
      %4825 = vmatpush1.bf16.msra.mxu0 %v4817
      %4826 = vmatprep.subr.bf16.mxu0 0
      %4827 = vmatpush1.bf16.msra.mxu0 %v4818
      %4828 = vmatprep.subr.bf16.mxu0 0
      %4829 = vmatpush1.bf16.msra.mxu0 0
      %4830 = vmatprep.subr.bf16.mxu0 0
      %4831 = vmatpush1.bf16.msra.mxu0 0
      %4832 = vmatprep.subr.bf16.mxu0 0
      %4833 = vmatpush1.bf16.msra.mxu0 0
      %4834 = vmatprep.subr.bf16.mxu0 0
      %4835 = vmatpush1.bf16.msra.mxu0 0
      %4836 = vmatprep.subr.bf16.mxu0 0
      %4837 = vmatpush1.bf16.msra.mxu0 0
      %4838 = vmatprep.subr.bf16.mxu0 0
      %4839 = vmatpush1.bf16.msra.mxu0 0
      %4840 = vmatprep.subr.bf16.mxu0 0
      %4841 = vmatpush1.bf16.msra.mxu0 0
      %4842 = vmatprep.subr.bf16.mxu0 0
      %4843 = vmatpush1.bf16.msra.mxu0 0
      %4844 = vmatprep.subr.bf16.mxu0 0
      %4845 = vmatpush1.bf16.msra.mxu0 0
      %4846 = vmatprep.subr.bf16.mxu0 0
      %4847 = vmatpush1.bf16.msra.mxu0 0
      %4848 = vmatprep.subr.bf16.mxu0 0
      %4849 = vmatpush1.bf16.msra.mxu0 0
      %4850 = vmatprep.subr.bf16.mxu0 0
      %4851 = vmatpush1.bf16.msra.mxu0 0
      %4852 = vmatprep.subr.bf16.mxu0 0
      %4853 = vmatpush1.bf16.msra.mxu0 0
      %4854 = vmatprep.subr.bf16.mxu0 0
      %4855 = vmatpush1.bf16.msra.mxu0 0
      %4856 = vmatprep.mubr.bf16.mxu0 0
      %4857 = vmatmul.mubr.bf16.gmra.mrb[0].mxu0 %v4822
      %v4858 = vpop.f32.mrb[0].mxu0
      %v4859 = vadd.f32 %v4808, %v4858
      %v4860 = vpop.f32.mrb[0].mxu0
      %v4861 = vpop.f32.mrb[0].mxu0
      %v4862 = vpop.f32.mrb[0].mxu0
      %4863 = vdwg.mxu0
      %v4864 = vld [vmem:[%s2 + $0x358] sm:$0xf]
      %v4865 = vld [vmem:[%s2 + $0x35c] sm:$0xf]
      %v4866 = vld [vmem:[%s2 + $0x360] sm:$0xf]
      %v4867 = vld [vmem:[%s2 + $0x364] sm:$0xf]
      %v4868 = vpack.c.bf16 %v4410, %v4410
      %v4869 = vld [vmem:[%s3 + $0x90] sm:$0x1]
      %v4870 = vlaneseq
      %v4871 = vshrl.u32 %v4870, 7
      %v4872 = vsub.s32 0, %v4871
      %v4873 = vrot.slane %v4869, %v4872
      %v4878 = vunpack.c.l.b16 %v4864
      %v4879 = vunpack.c.l.b16 %v4865
      %v4880 = vunpack.c.l.b16 %v4866
      %v4881 = vunpack.c.l.b16 %v4867
      %v4882 = vpack.c.b16 %v4879, %v4878
      %v4883 = vpack.c.b16 %v4881, %v4880
      %v4887 = vsel %vm3987, %v4868, 0
      %4889 = vmatprep.subr.bf16.mxu0 0
      %4890 = vmatpush1.bf16.msra.mxu0 %v4882
      %4891 = vmatprep.subr.bf16.mxu0 0
      %4892 = vmatpush1.bf16.msra.mxu0 %v4883
      %4893 = vmatprep.subr.bf16.mxu0 0
      %4894 = vmatpush1.bf16.msra.mxu0 0
      %4895 = vmatprep.subr.bf16.mxu0 0
      %4896 = vmatpush1.bf16.msra.mxu0 0
      %4897 = vmatprep.subr.bf16.mxu0 0
      %4898 = vmatpush1.bf16.msra.mxu0 0
      %4899 = vmatprep.subr.bf16.mxu0 0
      %4900 = vmatpush1.bf16.msra.mxu0 0
      %4901 = vmatprep.subr.bf16.mxu0 0
      %4902 = vmatpush1.bf16.msra.mxu0 0
      %4903 = vmatprep.subr.bf16.mxu0 0
      %4904 = vmatpush1.bf16.msra.mxu0 0
      %4905 = vmatprep.subr.bf16.mxu0 0
      %4906 = vmatpush1.bf16.msra.mxu0 0
      %4907 = vmatprep.subr.bf16.mxu0 0
      %4908 = vmatpush1.bf16.msra.mxu0 0
      %4909 = vmatprep.subr.bf16.mxu0 0
      %4910 = vmatpush1.bf16.msra.mxu0 0
      %4911 = vmatprep.subr.bf16.mxu0 0
      %4912 = vmatpush1.bf16.msra.mxu0 0
      %4913 = vmatprep.subr.bf16.mxu0 0
      %4914 = vmatpush1.bf16.msra.mxu0 0
      %4915 = vmatprep.subr.bf16.mxu0 0
      %4916 = vmatpush1.bf16.msra.mxu0 0
      %4917 = vmatprep.subr.bf16.mxu0 0
      %4918 = vmatpush1.bf16.msra.mxu0 0
      %4919 = vmatprep.subr.bf16.mxu0 0
      %4920 = vmatpush1.bf16.msra.mxu0 0
      %4921 = vmatprep.mubr.bf16.mxu0 0
      %4922 = vmatmul.mubr.bf16.gmra.mrb[0].mxu0 %v4887
      %v4923 = vpop.f32.mrb[0].mxu0
      %v4924 = vadd.f32 %v4873, %v4923
      %v4925 = vpop.f32.mrb[0].mxu0
      %v4926 = vpop.f32.mrb[0].mxu0
      %v4927 = vpop.f32.mrb[0].mxu0
      %4928 = vdwg.mxu0
      %v4929 = vpack.c.bf16 %v4859, %v4859
      %v4930 = vpack.c.bf16 %v4924, %v4924
      %v4932 = vsel %vm3987, %v4929, 0
      %v4935 = vsel %vm3987, %v4930, 0
      %4937 = vmatprep.subr.bf16.mxu0 0
      %4938 = vmatpush1.bf16.xpose.msra.mxu0 %v4935
      %4939 = vmatprep.subr.bf16.mxu0 0
      %4940 = vmatpush1.bf16.xpose.msra.mxu0 0
      %4941 = vmatprep.subr.bf16.mxu0 0
      %4942 = vmatpush1.bf16.xpose.msra.mxu0 0
      %4943 = vmatprep.subr.bf16.mxu0 0
      %4944 = vmatpush1.bf16.xpose.msra.mxu0 0
      %4945 = vmatprep.subr.bf16.mxu0 0
      %4946 = vmatpush1.bf16.xpose.msra.mxu0 0
      %4947 = vmatprep.subr.bf16.mxu0 0
      %4948 = vmatpush1.bf16.xpose.msra.mxu0 0
      %4949 = vmatprep.subr.bf16.mxu0 0
      %4950 = vmatpush1.bf16.xpose.msra.mxu0 0
      %4951 = vmatprep.subr.bf16.mxu0 0
      %4952 = vmatpush1.bf16.xpose.msra.mxu0 0
      %4953 = vmatprep.subr.bf16.mxu0 0
      %4954 = vmatpush1.bf16.xpose.msra.mxu0 0
      %4955 = vmatprep.subr.bf16.mxu0 0
      %4956 = vmatpush1.bf16.xpose.msra.mxu0 0
      %4957 = vmatprep.subr.bf16.mxu0 0
      %4958 = vmatpush1.bf16.xpose.msra.mxu0 0
      %4959 = vmatprep.subr.bf16.mxu0 0
      %4960 = vmatpush1.bf16.xpose.msra.mxu0 0
      %4961 = vmatprep.subr.bf16.mxu0 0
      %4962 = vmatpush1.bf16.xpose.msra.mxu0 0
      %4963 = vmatprep.subr.bf16.mxu0 0
      %4964 = vmatpush1.bf16.xpose.msra.mxu0 0
      %4965 = vmatprep.subr.bf16.mxu0 0
      %4966 = vmatpush1.bf16.xpose.msra.mxu0 0
      %4967 = vmatprep.subr.bf16.mxu0 0
      %4968 = vmatpush1.bf16.xpose.msra.mxu0 0
      %4969 = vmatprep.mubr.bf16.mxu0 0
      %4970 = vmatmul.mubr.bf16.gmra.mrb[0].mxu0 %v4932
      %v4971 = vpop.f32.mrb[0].mxu0
      %v4972 = vadd.f32 0.0, %v4971
      %v4973 = vpop.f32.mrb[0].mxu0
      %v4974 = vpop.f32.mrb[0].mxu0
      %v4975 = vpop.f32.mrb[0].mxu0
      %4976 = vdwg.mxu0
      %v4977 = vmul.f32 %v4972, 0.17677669
      %vm4978 = vcmask 28672
      %v4979 = vsel %vm4978, %v4977, -inf
      %4980 = vmax.xlane.f32.xlu0 %v4979
      %v4981 = vpop.xlane.xlu0 %4980
      %v4982 = vsub.f32 %v4977, %v4981
      %v4983 = vmul.f32 %v4982, 1.442695
      %v4984 = vpow.pop %v4983
      %v4985 = vsel %vm4978, %v4984, 0.0
      %4986 = vadd.xlane.f32.xlu0 %v4985
      %v4987 = vpop.xlane.xlu0 %4986
      %v4988 = vrcp.pop %v4987
      %v4989 = vmul.f32 %v4984, %v4988
      %v4990 = vpack.c.bf16 %v4989, %v4989
      %4992 = vrot.lane.b32.xlu0 %v4930, 96
      %v4993 = vpop.permute.xlu0 %4992
      %v4995 = vsel %vm4097, %v4990, 0
      %v4998 = vsel %vm4101, %v4993, 0
      %5000 = vmatprep.subr.bf16.mxu0 0
      %5001 = vmatpush1.bf16.msra.mxu0 %v4998
      %5002 = vmatprep.subr.bf16.mxu0 0
      %5003 = vmatpush1.bf16.msra.mxu0 0
      %5004 = vmatprep.subr.bf16.mxu0 0
      %5005 = vmatpush1.bf16.msra.mxu0 0
      %5006 = vmatprep.subr.bf16.mxu0 0
      %5007 = vmatpush1.bf16.msra.mxu0 0
      %5008 = vmatprep.subr.bf16.mxu0 0
      %5009 = vmatpush1.bf16.msra.mxu0 0
      %5010 = vmatprep.subr.bf16.mxu0 0
      %5011 = vmatpush1.bf16.msra.mxu0 0
      %5012 = vmatprep.subr.bf16.mxu0 0
      %5013 = vmatpush1.bf16.msra.mxu0 0
      %5014 = vmatprep.subr.bf16.mxu0 0
      %5015 = vmatpush1.bf16.msra.mxu0 0
      %5016 = vmatprep.subr.bf16.mxu0 0
      %5017 = vmatpush1.bf16.msra.mxu0 0
      %5018 = vmatprep.subr.bf16.mxu0 0
      %5019 = vmatpush1.bf16.msra.mxu0 0
      %5020 = vmatprep.subr.bf16.mxu0 0
      %5021 = vmatpush1.bf16.msra.mxu0 0
      %5022 = vmatprep.subr.bf16.mxu0 0
      %5023 = vmatpush1.bf16.msra.mxu0 0
      %5024 = vmatprep.subr.bf16.mxu0 0
      %5025 = vmatpush1.bf16.msra.mxu0 0
      %5026 = vmatprep.subr.bf16.mxu0 0
      %5027 = vmatpush1.bf16.msra.mxu0 0
      %5028 = vmatprep.subr.bf16.mxu0 0
      %5029 = vmatpush1.bf16.msra.mxu0 0
      %5030 = vmatprep.subr.bf16.mxu0 0
      %5031 = vmatpush1.bf16.msra.mxu0 0
      %5032 = vmatprep.mubr.bf16.mxu0 0
      %5033 = vmatmul.mubr.bf16.gmra.mrb[0].mxu0 %v4995
      %v5034 = vpop.f32.mrb[0].mxu0
      %v5035 = vadd.f32 0.0, %v5034
      %v5036 = vpop.f32.mrb[0].mxu0
      %v5037 = vpop.f32.mrb[0].mxu0
      %v5038 = vpop.f32.mrb[0].mxu0
      %5039 = vdwg.mxu0
      %v5040 = vld [vmem:[%s2 + $0x368] sm:$0xf]
      %v5041 = vld [vmem:[%s2 + $0x36c] sm:$0xf]
      %v5042 = vld [vmem:[%s2 + $0x370] sm:$0xf]
      %v5043 = vld [vmem:[%s2 + $0x374] sm:$0xf]
      %v5044 = vpack.c.bf16 %v5035, %v5035
      %v5045 = vld [vmem:[%s3 + $0x98] sm:$0x1]
      %v5046 = vlaneseq
      %v5047 = vshrl.u32 %v5046, 7
      %v5048 = vsub.s32 0, %v5047
      %v5049 = vrot.slane %v5045, %v5048
      %v5054 = vunpack.c.l.b16 %v5040
      %v5055 = vunpack.c.l.b16 %v5041
      %v5056 = vunpack.c.l.b16 %v5042
      %v5057 = vunpack.c.l.b16 %v5043
      %v5058 = vpack.c.b16 %v5055, %v5054
      %v5059 = vpack.c.b16 %v5057, %v5056
      %v5063 = vsel %vm3987, %v5044, 0
      %5065 = vmatprep.subr.bf16.mxu0 0
      %5066 = vmatpush1.bf16.msra.mxu0 %v5058
      %5067 = vmatprep.subr.bf16.mxu0 0
      %5068 = vmatpush1.bf16.msra.mxu0 %v5059
      %5069 = vmatprep.subr.bf16.mxu0 0
      %5070 = vmatpush1.bf16.msra.mxu0 0
      %5071 = vmatprep.subr.bf16.mxu0 0
      %5072 = vmatpush1.bf16.msra.mxu0 0
      %5073 = vmatprep.subr.bf16.mxu0 0
      %5074 = vmatpush1.bf16.msra.mxu0 0
      %5075 = vmatprep.subr.bf16.mxu0 0
      %5076 = vmatpush1.bf16.msra.mxu0 0
      %5077 = vmatprep.subr.bf16.mxu0 0
      %5078 = vmatpush1.bf16.msra.mxu0 0
      %5079 = vmatprep.subr.bf16.mxu0 0
      %5080 = vmatpush1.bf16.msra.mxu0 0
      %5081 = vmatprep.subr.bf16.mxu0 0
      %5082 = vmatpush1.bf16.msra.mxu0 0
      %5083 = vmatprep.subr.bf16.mxu0 0
      %5084 = vmatpush1.bf16.msra.mxu0 0
      %5085 = vmatprep.subr.bf16.mxu0 0
      %5086 = vmatpush1.bf16.msra.mxu0 0
      %5087 = vmatprep.subr.bf16.mxu0 0
      %5088 = vmatpush1.bf16.msra.mxu0 0
      %5089 = vmatprep.subr.bf16.mxu0 0
      %5090 = vmatpush1.bf16.msra.mxu0 0
      %5091 = vmatprep.subr.bf16.mxu0 0
      %5092 = vmatpush1.bf16.msra.mxu0 0
      %5093 = vmatprep.subr.bf16.mxu0 0
      %5094 = vmatpush1.bf16.msra.mxu0 0
      %5095 = vmatprep.subr.bf16.mxu0 0
      %5096 = vmatpush1.bf16.msra.mxu0 0
      %5097 = vmatprep.mubr.bf16.mxu0 0
      %5098 = vmatmul.mubr.bf16.gmra.mrb[0].mxu0 %v5063
      %v5099 = vpop.f32.mrb[0].mxu0
      %v5100 = vadd.f32 %v5049, %v5099
      %v5101 = vpop.f32.mrb[0].mxu0
      %v5102 = vpop.f32.mrb[0].mxu0
      %v5103 = vpop.f32.mrb[0].mxu0
      %5104 = vdwg.mxu0
      %v5105 = vadd.f32 %v4798, %v5100
      %v5106 = vld [vmem:[%s3 + $0xa0] sm:$0x1]
      %v5107 = vld [vmem:[%s3 + $0xa8] sm:$0x1]
      %v5108 = vsel %vm4775, %v5105, 0.0
      %5109 = vadd.xlane.f32.xlu0 %v5108
      %v5110 = vpop.xlane.xlu0 %5109
      %v5111 = vmul.f32 %v5110, %v4217
      %v5112 = vsub.f32 %v5105, %v5111
      %v5113 = vmul.f32 %v5112, %v5112
      %v5114 = vsel %vm4775, %v5113, 0.0
      %5115 = vadd.xlane.f32.xlu0 %v5114
      %v5116 = vpop.xlane.xlu0 %5115
      %v5117 = vmul.f32 %v5116, %v4217
      %v5118 = vadd.f32 %v5117, 1e-05
      %v5119 = vrsqrt.pop %v5118
      %v5120 = vmul.f32 %v5112, %v5119
      %v5121 = vlaneseq
      %v5122 = vshrl.u32 %v5121, 7
      %v5123 = vsub.s32 0, %v5122
      %v5124 = vrot.slane %v5106, %v5123
      %v5125 = vmul.f32 %v5120, %v5124
      %v5126 = vlaneseq
      %v5127 = vshrl.u32 %v5126, 7
      %v5128 = vsub.s32 0, %v5127
      %v5129 = vrot.slane %v5107, %v5128
      %v5130 = vadd.f32 %v5125, %v5129
      %v5131 = vld [vmem:[%s2 + $0x378] sm:$0xf]
      %v5132 = vld [vmem:[%s2 + $0x37c] sm:$0xf]
      %v5133 = vld [vmem:[%s2 + $0x380] sm:$0xf]
      %v5134 = vld [vmem:[%s2 + $0x384] sm:$0xf]
      %v5135 = vpack.c.bf16 %v5130, %v5130
      %v5136 = vld [vmem:[%s3 + $0xb0] sm:$0x1]
      %v5137 = vlaneseq
      %v5138 = vshrl.u32 %v5137, 7
      %v5139 = vsub.s32 0, %v5138
      %v5140 = vrot.slane %v5136, %v5139
      %v5145 = vunpack.c.l.b16 %v5131
      %v5146 = vunpack.c.l.b16 %v5132
      %v5147 = vunpack.c.l.b16 %v5133
      %v5148 = vunpack.c.l.b16 %v5134
      %v5149 = vpack.c.b16 %v5146, %v5145
      %v5150 = vpack.c.b16 %v5148, %v5147
      %v5154 = vsel %vm3987, %v5135, 0
      %5156 = vmatprep.subr.bf16.mxu0 0
      %5157 = vmatpush1.bf16.msra.mxu0 %v5149
      %5158 = vmatprep.subr.bf16.mxu0 0
      %5159 = vmatpush1.bf16.msra.mxu0 %v5150
      %5160 = vmatprep.subr.bf16.mxu0 0
      %5161 = vmatpush1.bf16.msra.mxu0 0
      %5162 = vmatprep.subr.bf16.mxu0 0
      %5163 = vmatpush1.bf16.msra.mxu0 0
      %5164 = vmatprep.subr.bf16.mxu0 0
      %5165 = vmatpush1.bf16.msra.mxu0 0
      %5166 = vmatprep.subr.bf16.mxu0 0
      %5167 = vmatpush1.bf16.msra.mxu0 0
      %5168 = vmatprep.subr.bf16.mxu0 0
      %5169 = vmatpush1.bf16.msra.mxu0 0
      %5170 = vmatprep.subr.bf16.mxu0 0
      %5171 = vmatpush1.bf16.msra.mxu0 0
      %5172 = vmatprep.subr.bf16.mxu0 0
      %5173 = vmatpush1.bf16.msra.mxu0 0
      %5174 = vmatprep.subr.bf16.mxu0 0
      %5175 = vmatpush1.bf16.msra.mxu0 0
      %5176 = vmatprep.subr.bf16.mxu0 0
      %5177 = vmatpush1.bf16.msra.mxu0 0
      %5178 = vmatprep.subr.bf16.mxu0 0
      %5179 = vmatpush1.bf16.msra.mxu0 0
      %5180 = vmatprep.subr.bf16.mxu0 0
      %5181 = vmatpush1.bf16.msra.mxu0 0
      %5182 = vmatprep.subr.bf16.mxu0 0
      %5183 = vmatpush1.bf16.msra.mxu0 0
      %5184 = vmatprep.subr.bf16.mxu0 0
      %5185 = vmatpush1.bf16.msra.mxu0 0
      %5186 = vmatprep.subr.bf16.mxu0 0
      %5187 = vmatpush1.bf16.msra.mxu0 0
      %5188 = vmatprep.mubr.bf16.mxu0 0
      %5189 = vmatmul.mubr.bf16.gmra.mrb[0].mxu0 %v5154
      %v5190 = vpop.f32.mrb[0].mxu0
      %v5191 = vadd.f32 %v5140, %v5190
      %v5192 = vpop.f32.mrb[0].mxu0
      %v5193 = vpop.f32.mrb[0].mxu0
      %v5194 = vpop.f32.mrb[0].mxu0
      %5195 = vdwg.mxu0
      %v5196 = vmax.f32 %v5191, 0.0
      %v5197 = vld [vmem:[%s2 + $0x388] sm:$0xf]
      %v5198 = vld [vmem:[%s2 + $0x38c] sm:$0xf]
      %v5199 = vld [vmem:[%s2 + $0x390] sm:$0xf]
      %v5200 = vld [vmem:[%s2 + $0x394] sm:$0xf]
      %v5201 = vld [vmem:[%s2 + $0x398] sm:$0xf]
      %v5202 = vld [vmem:[%s2 + $0x39c] sm:$0xf]
      %v5203 = vld [vmem:[%s2 + $0x3a0] sm:$0xf]
      %v5204 = vld [vmem:[%s2 + $0x3a4] sm:$0xf]
      %v5205 = vpack.c.bf16 %v5196, %v5196
      %v5206 = vld [vmem:[%s3 + $0xb8] sm:$0x1]
      %v5207 = vlaneseq
      %v5208 = vshrl.u32 %v5207, 7
      %v5209 = vsub.s32 0, %v5208
      %v5210 = vrot.slane %v5206, %v5209
      %v5219 = vunpack.c.l.b16 %v5197
      %v5220 = vunpack.c.l.b16 %v5198
      %v5221 = vunpack.c.l.b16 %v5199
      %v5222 = vunpack.c.l.b16 %v5200
      %v5223 = vunpack.c.l.b16 %v5201
      %v5224 = vunpack.c.l.b16 %v5202
      %v5225 = vunpack.c.l.b16 %v5203
      %v5226 = vunpack.c.l.b16 %v5204
      %v5227 = vpack.c.b16 %v5220, %v5219
      %v5228 = vpack.c.b16 %v5222, %v5221
      %v5229 = vpack.c.b16 %v5224, %v5223
      %v5230 = vpack.c.b16 %v5226, %v5225
      %v5236 = vsel %vm3787, %v5205, 0
      %5238 = vmatprep.subr.bf16.mxu0 0
      %5239 = vmatpush1.bf16.msra.mxu0 %v5227
      %5240 = vmatprep.subr.bf16.mxu0 0
      %5241 = vmatpush1.bf16.msra.mxu0 %v5228
      %5242 = vmatprep.subr.bf16.mxu0 0
      %5243 = vmatpush1.bf16.msra.mxu0 %v5229
      %5244 = vmatprep.subr.bf16.mxu0 0
      %5245 = vmatpush1.bf16.msra.mxu0 %v5230
      %5246 = vmatprep.subr.bf16.mxu0 0
      %5247 = vmatpush1.bf16.msra.mxu0 0
      %5248 = vmatprep.subr.bf16.mxu0 0
      %5249 = vmatpush1.bf16.msra.mxu0 0
      %5250 = vmatprep.subr.bf16.mxu0 0
      %5251 = vmatpush1.bf16.msra.mxu0 0
      %5252 = vmatprep.subr.bf16.mxu0 0
      %5253 = vmatpush1.bf16.msra.mxu0 0
      %5254 = vmatprep.subr.bf16.mxu0 0
      %5255 = vmatpush1.bf16.msra.mxu0 0
      %5256 = vmatprep.subr.bf16.mxu0 0
      %5257 = vmatpush1.bf16.msra.mxu0 0
      %5258 = vmatprep.subr.bf16.mxu0 0
      %5259 = vmatpush1.bf16.msra.mxu0 0
      %5260 = vmatprep.subr.bf16.mxu0 0
      %5261 = vmatpush1.bf16.msra.mxu0 0
      %5262 = vmatprep.subr.bf16.mxu0 0
      %5263 = vmatpush1.bf16.msra.mxu0 0
      %5264 = vmatprep.subr.bf16.mxu0 0
      %5265 = vmatpush1.bf16.msra.mxu0 0
      %5266 = vmatprep.subr.bf16.mxu0 0
      %5267 = vmatpush1.bf16.msra.mxu0 0
      %5268 = vmatprep.subr.bf16.mxu0 0
      %5269 = vmatpush1.bf16.msra.mxu0 0
      %5270 = vmatprep.mubr.bf16.mxu0 0
      %5271 = vmatmul.mubr.bf16.gmra.mrb[0].mxu0 %v5236
      %v5272 = vpop.f32.mrb[0].mxu0
      %v5273 = vadd.f32 %v5210, %v5272
      %v5274 = vpop.f32.mrb[0].mxu0
      %v5275 = vpop.f32.mrb[0].mxu0
      %v5276 = vpop.f32.mrb[0].mxu0
      %5277 = vdwg.mxu0
      %v5278 = vadd.f32 %v5130, %v5273
      %v5279 = vld [vmem:[%s3 + $0xc0] sm:$0x1]
      %v5280 = vld [vmem:[%s3 + $0xc8] sm:$0x1]
      %v5281 = vsel %vm4775, %v5278, 0.0
      %5282 = vadd.xlane.f32.xlu0 %v5281
      %v5283 = vpop.xlane.xlu0 %5282
      %v5284 = vmul.f32 %v5283, %v4217
      %v5285 = vsub.f32 %v5278, %v5284
      %v5286 = vmul.f32 %v5285, %v5285
      %v5287 = vsel %vm4775, %v5286, 0.0
      %5288 = vadd.xlane.f32.xlu0 %v5287
      %v5289 = vpop.xlane.xlu0 %5288
      %v5290 = vmul.f32 %v5289, %v4217
      %v5291 = vadd.f32 %v5290, 1e-05
      %v5292 = vrsqrt.pop %v5291
      %v5293 = vmul.f32 %v5285, %v5292
      %v5294 = vlaneseq
      %v5295 = vshrl.u32 %v5294, 7
      %v5296 = vsub.s32 0, %v5295
      %v5297 = vrot.slane %v5279, %v5296
      %v5298 = vmul.f32 %v5293, %v5297
      %v5299 = vlaneseq
      %v5300 = vshrl.u32 %v5299, 7
      %v5301 = vsub.s32 0, %v5300
      %v5302 = vrot.slane %v5280, %v5301
      %v5303 = vadd.f32 %v5298, %v5302
      %v5304 = vld [vmem:[%s2 + $0x3a8] sm:$0xf]
      %v5305 = vld [vmem:[%s2 + $0x3ac] sm:$0xf]
      %v5306 = vld [vmem:[%s2 + $0x3b0] sm:$0xf]
      %v5307 = vld [vmem:[%s2 + $0x3b4] sm:$0xf]
      %v5308 = vpack.c.bf16 %v5303, %v5303
      %v5309 = vld [vmem:[%s3 + $0xd0] sm:$0x1]
      %v5310 = vlaneseq
      %v5311 = vshrl.u32 %v5310, 7
      %v5312 = vsub.s32 0, %v5311
      %v5313 = vrot.slane %v5309, %v5312
      %v5318 = vunpack.c.l.b16 %v5304
      %v5319 = vunpack.c.l.b16 %v5305
      %v5320 = vunpack.c.l.b16 %v5306
      %v5321 = vunpack.c.l.b16 %v5307
      %v5322 = vpack.c.b16 %v5319, %v5318
      %v5323 = vpack.c.b16 %v5321, %v5320
      %v5327 = vsel %vm3987, %v5308, 0
      %5329 = vmatprep.subr.bf16.mxu0 0
      %5330 = vmatpush1.bf16.msra.mxu0 %v5322
      %5331 = vmatprep.subr.bf16.mxu0 0
      %5332 = vmatpush1.bf16.msra.mxu0 %v5323
      %5333 = vmatprep.subr.bf16.mxu0 0
      %5334 = vmatpush1.bf16.msra.mxu0 0
      %5335 = vmatprep.subr.bf16.mxu0 0
      %5336 = vmatpush1.bf16.msra.mxu0 0
      %5337 = vmatprep.subr.bf16.mxu0 0
      %5338 = vmatpush1.bf16.msra.mxu0 0
      %5339 = vmatprep.subr.bf16.mxu0 0
      %5340 = vmatpush1.bf16.msra.mxu0 0
      %5341 = vmatprep.subr.bf16.mxu0 0
      %5342 = vmatpush1.bf16.msra.mxu0 0
      %5343 = vmatprep.subr.bf16.mxu0 0
      %5344 = vmatpush1.bf16.msra.mxu0 0
      %5345 = vmatprep.subr.bf16.mxu0 0
      %5346 = vmatpush1.bf16.msra.mxu0 0
      %5347 = vmatprep.subr.bf16.mxu0 0
      %5348 = vmatpush1.bf16.msra.mxu0 0
      %5349 = vmatprep.subr.bf16.mxu0 0
      %5350 = vmatpush1.bf16.msra.mxu0 0
      %5351 = vmatprep.subr.bf16.mxu0 0
      %5352 = vmatpush1.bf16.msra.mxu0 0
      %5353 = vmatprep.subr.bf16.mxu0 0
      %5354 = vmatpush1.bf16.msra.mxu0 0
      %5355 = vmatprep.subr.bf16.mxu0 0
      %5356 = vmatpush1.bf16.msra.mxu0 0
      %5357 = vmatprep.subr.bf16.mxu0 0
      %5358 = vmatpush1.bf16.msra.mxu0 0
      %5359 = vmatprep.subr.bf16.mxu0 0
      %5360 = vmatpush1.bf16.msra.mxu0 0
      %5361 = vmatprep.mubr.bf16.mxu0 0
      %5362 = vmatmul.mubr.bf16.gmra.mrb[0].mxu0 %v5327
      %v5363 = vpop.f32.mrb[0].mxu0
      %v5364 = vadd.f32 %v5313, %v5363
      %v5365 = vpop.f32.mrb[0].mxu0
      %v5366 = vpop.f32.mrb[0].mxu0
      %v5367 = vpop.f32.mrb[0].mxu0
      %5368 = vdwg.mxu0
      %vm5369 = vcmask 86016
      %5370 = vst.msk [vmem:[%s209] sm:$0x1f] %vm5369, %v5364
      %5371 = vst.msk [vmem:[%s213] sm:$0x1f] %vm4978, %v4989
      %p5372 = scmp.lt.s32.totalorder %s23, 1
      %s5373 = scalar_select %p5372, %s23, 1
      %s5374 = smul.addr %s5373, 8
      %s5375 = scalar_lea.vmem %s4, %s5374
      %p5376 = scmp.lt.s32.totalorder %s23, 1
      %s5377 = scalar_select %p5376, %s23, 1
      %s5378 = smul.addr %s5377, 8
      %s5379 = scalar_lea.vmem %s5, %s5378
      // Predicated region
      $region33: #{seq2seq_forward.1} parent=31 // pred_check
        %p5380 = pneg %p109
      $region34: #{seq2seq_forward.1} parent=31 // pred_check_branch
        %5382 = sbr.rel (%p5380) target = $region36
      $region35: #{seq2seq_forward.1} parent=31 // pred_region
        _
      $region36: #{seq2seq_forward.1} parent=31 // pred_fallthru
        _
      // Predicated region
      $region37: #{seq2seq_forward.1} parent=31 // pred_check
        %p5383 = pneg %p135
      $region38: #{seq2seq_forward.1} parent=31 // pred_check_branch
        %5385 = sbr.rel (%p5383) target = $region40
      $region39: #{seq2seq_forward.1} parent=31 // pred_region
        _
      $region40: #{seq2seq_forward.1} parent=31 // pred_fallthru
        _
    $region32: #{seq2seq_forward.1} parent=5 // pred_fallthru
      _
    %p5386 = scmp.le.s32.totalorder 2, %s18
    // Predicated region
    $region41: #{seq2seq_forward.1} parent=5 // pred_check
      %p5387 = pneg %p5386
    $region42: #{seq2seq_forward.1} parent=5 // pred_check_branch
      %5389 = sbr.rel (%p5387) target = $region44
    $region43: #{seq2seq_forward.1} parent=5 // pred_region
      %s5390 = ssub.s32 %s18, 2
      // Predicated region
      $region45: #{seq2seq_forward.1} parent=43 // pred_check
        %p5391 = pneg %p115
      $region46: #{seq2seq_forward.1} parent=43 // pred_check_branch
        %5393 = sbr.rel (%p5391) target = $region48
      $region47: #{seq2seq_forward.1} parent=43 // pred_region
        %p5394 = scmp.lt.s32.totalorder %s24, 1
        %s5395 = scalar_select %p5394, %s24, 1
        %s5396 = smul.addr %s5395, 8
        %s5397 = scalar_lea.vmem %s4, %s5396
      $region48: #{seq2seq_forward.1} parent=43 // pred_fallthru
        _
      // Predicated region
      $region49: #{seq2seq_forward.1} parent=43 // pred_check
        %p5398 = pneg %p141
      $region50: #{seq2seq_forward.1} parent=43 // pred_check_branch
        %5400 = sbr.rel (%p5398) target = $region52
      $region51: #{seq2seq_forward.1} parent=43 // pred_region
        %p5401 = scmp.lt.s32.totalorder %s24, 1
        %s5402 = scalar_select %p5401, %s24, 1
        %s5403 = smul.addr %s5402, 8
        %s5404 = scalar_lea.vmem %s5, %s5403
      $region52: #{seq2seq_forward.1} parent=43 // pred_fallthru
        _
    $region44: #{seq2seq_forward.1} parent=5 // pred_fallthru
      _
  $region6: #{seq2seq_forward.1} parent=0 // loop_footer
    %s22 = sadd.s32 1, %s18
  $region7: #{seq2seq_forward.1} parent=0 // loop_footer_branch
    %17 = sbr.rel target = $region3
  $region8: #{seq2seq_forward.1} parent=0 // loop_exit
    _

</llo_original>
